<compile_context>
chip_gen: v5e
topology: v5e:2x2
jax: 0.10.0
libtpu: 0.0.40
codegen_flags: <defaults>
</compile_context>

<pallas_src>
import math
import jax
import jax.numpy as jnp
from jax.experimental import pallas as pl
from jax.experimental.pallas import tpu as pltpu

D = 1024  # hardcoded in the PyTorch module (nn.Linear(1024, 1024, bias=False))


def _mlp_kernel(x_ref, w1_ref, w2_ref, o_ref):
    # fc1: (tm, D) @ (D, D) -> (tm, D) on the MXU, f32 accumulate
    h = jnp.dot(x_ref[...], w1_ref[...], preferred_element_type=jnp.float32)
    # exact GELU (nn.GELU() default): 0.5 * x * (1 + erf(x / sqrt(2)))
    inv_sqrt2 = jnp.float32(1.0 / math.sqrt(2.0))
    g = 0.5 * h * (1.0 + jax.lax.erf(h * inv_sqrt2))
    # fc2: (tm, D) @ (D, D) -> (tm, D)
    o_ref[...] = jnp.dot(
        g, w2_ref[...], preferred_element_type=jnp.float32
    ).astype(o_ref.dtype)


def _pick_tm(B):
    """Batch tile: large enough to feed the MXU, >=2 grid steps when possible
    (so the parallel batch axis can be sharded across cores), multiple of 8."""
    if B >= 1024:
        return 512
    if B >= 512:
        return 256
    if B >= 256:
        return 128
    # small batches: a single padded tile (multiple of 8 for the sublane rule)
    return max(8, ((B + 7) // 8) * 8)


def mlp_forward(x, w1_t, w2_t, *, tm=None):
    """x: (B, 1024) f32; w1_t, w2_t: (1024, 1024) f32, pre-transposed to (in, out)."""
    B, d = x.shape
    assert d == D and w1_t.shape == (D, D) and w2_t.shape == (D, D)

    if tm is None:
        tm = _pick_tm(B)
    assert tm % 8 == 0

    # Pad the batch to a multiple of tm (zero rows are harmless through both
    # matmuls and GELU) and slice the result back afterwards.
    Bp = pl.cdiv(B, tm) * tm
    if Bp != B:
        x = jnp.pad(x, ((0, Bp - B), (0, 0)))
    grid = (Bp // tm,)

    itemsize = jnp.dtype(x.dtype).itemsize
    cost = pl.CostEstimate(
        flops=4 * Bp * D * D,                                   # two (Bp,D)x(D,D) matmuls
        transcendentals=Bp * D,                                 # erf per element
        bytes_accessed=(2 * Bp * D + 2 * D * D) * itemsize,
    )

    out = pl.pallas_call(
        _mlp_kernel,
        out_shape=jax.ShapeDtypeStruct((Bp, D), x.dtype),
        grid_spec=pltpu.PrefetchScalarGridSpec(
            num_scalar_prefetch=0,
            grid=grid,
            in_specs=[
                # x tile: streams over the batch axis
                pl.BlockSpec((tm, D), lambda i: (i, 0)),
                # full weights; constant block index -> DMA'd once, resident
                # in VMEM for the whole grid.
                pl.BlockSpec((D, D), lambda i: (0, 0)),
                pl.BlockSpec((D, D), lambda i: (0, 0)),
            ],
            out_specs=pl.BlockSpec((tm, D), lambda i: (i, 0)),
        ),
        compiler_params=pltpu.CompilerParams(
            dimension_semantics=("parallel",),   # batch axis -> megacore sharding
            vmem_limit_bytes=48 << 20,           # headroom on v7x's 64 MiB VMEM
        ),
        cost_estimate=cost,
    )(x, w1_t, w2_t)

    if Bp != B:
        out = out[:B]
    return out


def reference_forward(x, value):
    w1 = jnp.full((D, D), value, dtype=jnp.float32)          # fc1.weight (out, in)
    w2 = jnp.full((D, D), value * 2.0, dtype=jnp.float32)    # fc2.weight (out, in)
    h = x @ w1.T
    g = 0.5 * h * (1.0 + jax.lax.erf(h / jnp.float32(math.sqrt(2.0))))
    return g @ w2.T


if __name__ == "__main__":
    # deterministic parameter init, matching fc1.weight.data.fill_(value) etc.
    value = 0.001
    w1 = jnp.full((D, D), value, dtype=jnp.float32)           # fc1.weight (out, in)
    w2 = jnp.full((D, D), value * 2.0, dtype=jnp.float32)     # fc2.weight (out, in)
    # pre-transpose once for the kernel's x @ W layout
    w1_t = w1.T
    w2_t = w2.T

    key = jax.random.PRNGKey(0)

    # small batch (single-tile path)
    B = 8
    x = jax.random.normal(key, (B, D), dtype=jnp.float32)
    out = jax.block_until_ready(mlp_forward(x, w1_t, w2_t))
    ref = reference_forward(x, value)
    assert out.shape == (B, D) and out.dtype == jnp.float32
    assert jnp.allclose(out, ref, rtol=1e-5, atol=1e-5), "mismatch vs reference (B=8)"

    # non-divisible batch (padding path)
    B2 = 12
    x2 = jax.random.normal(jax.random.PRNGKey(1), (B2, D), dtype=jnp.float32)
    out2 = jax.block_until_ready(mlp_forward(x2, w1_t, w2_t))
    ref2 = reference_forward(x2, value)
    assert out2.shape == (B2, D)
    assert jnp.allclose(out2, ref2, rtol=1e-5, atol=1e-5), "mismatch vs reference (B=12)"

    # TODO(synk): torch.save(...) side effect (checkpointing the activation to
    # disk) has no Pallas equivalent and is intentionally omitted.
    print("KERNEL_OK")
</pallas_src>

<mosaic_0001>
module attributes {stable_mosaic.version = 11 : i64} {
  func.func @_mlp_kernel(%arg0: i32, %arg1: memref<8x1024xf32, #tpu.memory_space<vmem>>, %arg2: memref<1024x1024xf32, #tpu.memory_space<vmem>>, %arg3: memref<1024x1024xf32, #tpu.memory_space<vmem>>, %arg4: memref<8x1024xf32, #tpu.memory_space<vmem>>) attributes {dimension_semantics = [#tpu.dimension_semantics<parallel>], iteration_bounds = array<i64: 1>, scalar_prefetch = 0 : i64, scratch_operands = 0 : i64, tpu.core_type = #tpu.core_type<tc>, window_params = [{transform_indices = @transform_0, window_bounds = array<i64: 8, 1024>}, {pipeline_mode = #tpu.pipeline_mode<synchronous>, transform_indices = @transform_1, window_bounds = array<i64: 1024, 1024>}, {pipeline_mode = #tpu.pipeline_mode<synchronous>, transform_indices = @transform_2, window_bounds = array<i64: 1024, 1024>}, {transform_indices = @transform_3, window_bounds = array<i64: 8, 1024>}]} {
    %c0 = arith.constant 0 : index
    %c0_0 = arith.constant 0 : index
    %0 = vector.load %arg1[%c0, %c0_0] : memref<8x1024xf32, #tpu.memory_space<vmem>>, vector<8x1024xf32>
    %c0_1 = arith.constant 0 : index
    %c0_2 = arith.constant 0 : index
    %1 = vector.load %arg2[%c0_1, %c0_2] : memref<1024x1024xf32, #tpu.memory_space<vmem>>, vector<1024x1024xf32>
    %cst = arith.constant dense<0.000000e+00> : vector<8x1024xf32>
    %2 = tpu.matmul %0, %1, %cst {dimension_numbers = #tpu.dot_dimension_numbers<[1], [0], [0], [1], [0, 0, 1, 1], [], []>} : vector<8x1024xf32>, vector<1024x1024xf32>, vector<8x1024xf32> -> vector<8x1024xf32>
    %cst_3 = arith.constant 5.000000e-01 : f32
    %3 = vector.broadcast %cst_3 : f32 to vector<8x1024xf32>
    %4 = arith.mulf %3, %2 : vector<8x1024xf32>
    %cst_4 = arith.constant 0.707106769 : f32
    %5 = vector.broadcast %cst_4 : f32 to vector<8x1024xf32>
    %6 = arith.mulf %2, %5 : vector<8x1024xf32>
    %7 = math.erf %6 : vector<8x1024xf32>
    %cst_5 = arith.constant 1.000000e+00 : f32
    %8 = vector.broadcast %cst_5 : f32 to vector<8x1024xf32>
    %9 = arith.addf %8, %7 : vector<8x1024xf32>
    %10 = arith.mulf %4, %9 : vector<8x1024xf32>
    %c0_6 = arith.constant 0 : index
    %c0_7 = arith.constant 0 : index
    %11 = vector.load %arg3[%c0_6, %c0_7] : memref<1024x1024xf32, #tpu.memory_space<vmem>>, vector<1024x1024xf32>
    %cst_8 = arith.constant dense<0.000000e+00> : vector<8x1024xf32>
    %12 = tpu.matmul %10, %11, %cst_8 {dimension_numbers = #tpu.dot_dimension_numbers<[1], [0], [0], [1], [0, 0, 1, 1], [], []>} : vector<8x1024xf32>, vector<1024x1024xf32>, vector<8x1024xf32> -> vector<8x1024xf32>
    %c0_9 = arith.constant 0 : index
    %c0_10 = arith.constant 0 : index
    %13 = vector.load %arg4[%c0_9, %c0_10] : memref<8x1024xf32, #tpu.memory_space<vmem>>, vector<8x1024xf32>
    tpu.vector_store %arg4[%c0_9, %c0_10], %12 {strides = array<i32>} : memref<8x1024xf32, #tpu.memory_space<vmem>>, vector<8x1024xf32>,
    return
  }
  func.func @transform_0(%arg0: i32) -> (i32, i32) {
    %c0_i32 = arith.constant 0 : i32
    %c0_i32_0 = arith.constant 0 : i32
    return %arg0, %c0_i32 : i32, i32
  }
  func.func @transform_1(%arg0: i32) -> (i32, i32) {
    %c0_i32 = arith.constant 0 : i32
    %c0_i32_0 = arith.constant 0 : i32
    %c0_i32_1 = arith.constant 0 : i32
    return %c0_i32, %c0_i32_0 : i32, i32
  }
  func.func @transform_2(%arg0: i32) -> (i32, i32) {
    %c0_i32 = arith.constant 0 : i32
    %c0_i32_0 = arith.constant 0 : i32
    %c0_i32_1 = arith.constant 0 : i32
    return %c0_i32, %c0_i32_0 : i32, i32
  }
  func.func @transform_3(%arg0: i32) -> (i32, i32) {
    %c0_i32 = arith.constant 0 : i32
    %c0_i32_0 = arith.constant 0 : i32
    return %arg0, %c0_i32 : i32, i32
  }
}

</mosaic_0001>

<llo_original>
// kernel: tpu_custom_call.1
$region0: #{tpu_custom_call.1}
  #allocation0 [shape = 'u32[]', space=smem, size = 0x4, offset = 0x4, fixed_abs, tag = 'smem constant byte address 0x4 - core index']
  #allocation1 [shape = 'u32[72,128]{1,0:T(1,128)}', space=vmem, size = 0x9000, scoped, tag = 'internal scratch']
  %s0 = inlined_call_operand.hbm [shape: f32[8,1024], index: 0, kind: input, shape index: {}]
  %s1 = inlined_call_operand.hbm [shape: f32[1024,1024], index: 1, kind: input, shape index: {}]
  %s2 = inlined_call_operand.hbm [shape: f32[1024,1024], index: 2, kind: input, shape index: {}]
  %s3 = inlined_call_operand.hbm [shape: f32[8,1024], index: 3, kind: output, shape index: {}]
  %s4 = sld [smem:[#allocation0]]
  $region34: #{tpu_custom_call.1} parent=0
    _
  %s6 = ssub.s32 1, %s4
  %s7 = scalar_select 0, %s6, %s4
  $region1: #{tpu_custom_call.1} parent=0
    #allocation2 [shape = 'u8[32768]{0}', space=vmem, size = 0x8000, scoped, tag = 'input window, operand 0, single buffered']
    #allocation3 [shape = 's32[1]{0}', space=sflag, size = 0x4, scoped, tag = 'scoped memory for tpu_custom_call.1']
    #allocation4 [shape = 's32[1]{0}', space=sflag, size = 0x4, scoped, tag = 'scoped memory for tpu_custom_call.1']
    #allocation5 [shape = 'u8[4194304]{0}', space=vmem, size = 0x400000, scoped, tag = 'input window, operand 1, single buffered']
    #allocation6 [shape = 's32[1]{0}', space=sflag, size = 0x4, scoped, tag = 'scoped memory for tpu_custom_call.1']
    #allocation7 [shape = 'u8[4194304]{0}', space=vmem, size = 0x400000, scoped, tag = 'input window, operand 2, single buffered']
    #allocation8 [shape = 'u8[32768]{0}', space=vmem, size = 0x8000, scoped, tag = 'output window, operand 0, single buffered']
    %8 = vsyncpa [#allocation3], 0
    %9 = vsyncpa [#allocation6], 0
    %10 = vsyncpa [#allocation4], 0
    // Predicated region
    $region2: #{tpu_custom_call.1} parent=1 // pred_check
      _
    $region3: #{tpu_custom_call.1} parent=1 // pred_check_branch
      %12 = sbr.rel (0) target = $region5
    $region4: #{tpu_custom_call.1} parent=1 // pred_region
      %14 = vsyncadd [#allocation3], 0
      %s16 = sshll.u32 %s0, 4
      %s17 = int_to_ptr.hbm [resolvable:$true] %s16
      %s18 = sshll.u32 [#allocation2], 4
      %s19 = int_to_ptr.vmem [resolvable:$true] %s18
      %21 = dma.hbm_to_vmem [thread:$0]  %s17, 1024, %s19, [#allocation3]
    $region5: #{tpu_custom_call.1} parent=1 // pred_fallthru
      _
    // Predicated region
    $region6: #{tpu_custom_call.1} parent=1 // pred_check
      _
    $region7: #{tpu_custom_call.1} parent=1 // pred_check_branch
      %23 = sbr.rel (0) target = $region9
    $region8: #{tpu_custom_call.1} parent=1 // pred_region
      %25 = vsyncadd [#allocation6], 0
      %s26 = sshll.u32 %s1, 4
      %s27 = int_to_ptr.hbm [resolvable:$true] %s26
      %s28 = sshll.u32 [#allocation5], 4
      %s29 = int_to_ptr.vmem [resolvable:$true] %s28
      %34 = dma.hbm_to_vmem [thread:$0]  %s27, 131072, %s29, [#allocation6], 1024, 1024, 64
    $region9: #{tpu_custom_call.1} parent=1 // pred_fallthru
      _
    // Predicated region
    $region10: #{tpu_custom_call.1} parent=1 // pred_check
      _
    $region11: #{tpu_custom_call.1} parent=1 // pred_check_branch
      %36 = sbr.rel (0) target = $region13
    $region12: #{tpu_custom_call.1} parent=1 // pred_region
      %38 = vsyncadd [#allocation6], 0
      %s39 = sshll.u32 %s2, 4
      %s40 = int_to_ptr.hbm [resolvable:$true] %s39
      %s41 = sshll.u32 [#allocation7], 4
      %s42 = int_to_ptr.vmem [resolvable:$true] %s41
      %47 = dma.hbm_to_vmem [thread:$0]  %s40, 131072, %s42, [#allocation6], 1024, 1024, 64
    $region13: #{tpu_custom_call.1} parent=1 // pred_fallthru
      _
    // Predicated region
    $region14: #{tpu_custom_call.1} parent=1 // pred_check
      _
    $region15: #{tpu_custom_call.1} parent=1 // pred_check_branch
      %49 = sbr.rel (0) target = $region17
    $region16: #{tpu_custom_call.1} parent=1 // pred_region
      %51 = dma.done [#allocation3], 1024
    $region17: #{tpu_custom_call.1} parent=1 // pred_fallthru
      _
    // Predicated region
    $region18: #{tpu_custom_call.1} parent=1 // pred_check
      _
    $region19: #{tpu_custom_call.1} parent=1 // pred_check_branch
      %53 = sbr.rel (0) target = $region21
    $region20: #{tpu_custom_call.1} parent=1 // pred_region
      %55 = dma.done [#allocation6], 131072
    $region21: #{tpu_custom_call.1} parent=1 // pred_fallthru
      _
    // Predicated region
    $region22: #{tpu_custom_call.1} parent=1 // pred_check
      _
    $region23: #{tpu_custom_call.1} parent=1 // pred_check_branch
      %57 = sbr.rel (0) target = $region25
    $region24: #{tpu_custom_call.1} parent=1 // pred_region
      %59 = dma.done [#allocation6], 131072
    $region25: #{tpu_custom_call.1} parent=1 // pred_fallthru
      _
    %v60 = vld [vmem:[#allocation2] sm:$0xff]
    %v61 = vld [vmem:[#allocation2 + $0x8] sm:$0xff]
    %v62 = vld [vmem:[#allocation2 + $0x10] sm:$0xff]
    %v63 = vld [vmem:[#allocation2 + $0x18] sm:$0xff]
    %v64 = vld [vmem:[#allocation2 + $0x20] sm:$0xff]
    %v65 = vld [vmem:[#allocation2 + $0x28] sm:$0xff]
    %v66 = vld [vmem:[#allocation2 + $0x30] sm:$0xff]
    %v67 = vld [vmem:[#allocation2 + $0x38] sm:$0xff]
    %v68 = vld [vmem:[#allocation5] sm:$0xff]
    %v69 = vld [vmem:[#allocation5 + $0x8] sm:$0xff]
    %v70 = vld [vmem:[#allocation5 + $0x10] sm:$0xff]
    %v71 = vld [vmem:[#allocation5 + $0x18] sm:$0xff]
    %v72 = vld [vmem:[#allocation5 + $0x20] sm:$0xff]
    %v73 = vld [vmem:[#allocation5 + $0x28] sm:$0xff]
    %v74 = vld [vmem:[#allocation5 + $0x30] sm:$0xff]
    %v75 = vld [vmem:[#allocation5 + $0x38] sm:$0xff]
    %v76 = vld [vmem:[#allocation5 + $0x40] sm:$0xff]
    %v77 = vld [vmem:[#allocation5 + $0x48] sm:$0xff]
    %v78 = vld [vmem:[#allocation5 + $0x50] sm:$0xff]
    %v79 = vld [vmem:[#allocation5 + $0x58] sm:$0xff]
    %v80 = vld [vmem:[#allocation5 + $0x60] sm:$0xff]
    %v81 = vld [vmem:[#allocation5 + $0x68] sm:$0xff]
    %v82 = vld [vmem:[#allocation5 + $0x70] sm:$0xff]
    %v83 = vld [vmem:[#allocation5 + $0x78] sm:$0xff]
    %v84 = vld [vmem:[#allocation5 + $0x80] sm:$0xff]
    %v85 = vld [vmem:[#allocation5 + $0x88] sm:$0xff]
    %v86 = vld [vmem:[#allocation5 + $0x90] sm:$0xff]
    %v87 = vld [vmem:[#allocation5 + $0x98] sm:$0xff]
    %v88 = vld [vmem:[#allocation5 + $0xa0] sm:$0xff]
    %v89 = vld [vmem:[#allocation5 + $0xa8] sm:$0xff]
    %v90 = vld [vmem:[#allocation5 + $0xb0] sm:$0xff]
    %v91 = vld [vmem:[#allocation5 + $0xb8] sm:$0xff]
    %v92 = vld [vmem:[#allocation5 + $0xc0] sm:$0xff]
    %v93 = vld [vmem:[#allocation5 + $0xc8] sm:$0xff]
    %v94 = vld [vmem:[#allocation5 + $0xd0] sm:$0xff]
    %v95 = vld [vmem:[#allocation5 + $0xd8] sm:$0xff]
    %v96 = vld [vmem:[#allocation5 + $0xe0] sm:$0xff]
    %v97 = vld [vmem:[#allocation5 + $0xe8] sm:$0xff]
    %v98 = vld [vmem:[#allocation5 + $0xf0] sm:$0xff]
    %v99 = vld [vmem:[#allocation5 + $0xf8] sm:$0xff]
    %v100 = vld [vmem:[#allocation5 + $0x100] sm:$0xff]
    %v101 = vld [vmem:[#allocation5 + $0x108] sm:$0xff]
    %v102 = vld [vmem:[#allocation5 + $0x110] sm:$0xff]
    %v103 = vld [vmem:[#allocation5 + $0x118] sm:$0xff]
    %v104 = vld [vmem:[#allocation5 + $0x120] sm:$0xff]
    %v105 = vld [vmem:[#allocation5 + $0x128] sm:$0xff]
    %v106 = vld [vmem:[#allocation5 + $0x130] sm:$0xff]
    %v107 = vld [vmem:[#allocation5 + $0x138] sm:$0xff]
    %v108 = vld [vmem:[#allocation5 + $0x140] sm:$0xff]
    %v109 = vld [vmem:[#allocation5 + $0x148] sm:$0xff]
    %v110 = vld [vmem:[#allocation5 + $0x150] sm:$0xff]
    %v111 = vld [vmem:[#allocation5 + $0x158] sm:$0xff]
    %v112 = vld [vmem:[#allocation5 + $0x160] sm:$0xff]
    %v113 = vld [vmem:[#allocation5 + $0x168] sm:$0xff]
    %v114 = vld [vmem:[#allocation5 + $0x170] sm:$0xff]
    %v115 = vld [vmem:[#allocation5 + $0x178] sm:$0xff]
    %v116 = vld [vmem:[#allocation5 + $0x180] sm:$0xff]
    %v117 = vld [vmem:[#allocation5 + $0x188] sm:$0xff]
    %v118 = vld [vmem:[#allocation5 + $0x190] sm:$0xff]
    %v119 = vld [vmem:[#allocation5 + $0x198] sm:$0xff]
    %v120 = vld [vmem:[#allocation5 + $0x1a0] sm:$0xff]
    %v121 = vld [vmem:[#allocation5 + $0x1a8] sm:$0xff]
    %v122 = vld [vmem:[#allocation5 + $0x1b0] sm:$0xff]
    %v123 = vld [vmem:[#allocation5 + $0x1b8] sm:$0xff]
    %v124 = vld [vmem:[#allocation5 + $0x1c0] sm:$0xff]
    %v125 = vld [vmem:[#allocation5 + $0x1c8] sm:$0xff]
    %v126 = vld [vmem:[#allocation5 + $0x1d0] sm:$0xff]
    %v127 = vld [vmem:[#allocation5 + $0x1d8] sm:$0xff]
    %v128 = vld [vmem:[#allocation5 + $0x1e0] sm:$0xff]
    %v129 = vld [vmem:[#allocation5 + $0x1e8] sm:$0xff]
    %v130 = vld [vmem:[#allocation5 + $0x1f0] sm:$0xff]
    %v131 = vld [vmem:[#allocation5 + $0x1f8] sm:$0xff]
    %v132 = vld [vmem:[#allocation5 + $0x200] sm:$0xff]
    %v133 = vld [vmem:[#allocation5 + $0x208] sm:$0xff]
    %v134 = vld [vmem:[#allocation5 + $0x210] sm:$0xff]
    %v135 = vld [vmem:[#allocation5 + $0x218] sm:$0xff]
    %v136 = vld [vmem:[#allocation5 + $0x220] sm:$0xff]
    %v137 = vld [vmem:[#allocation5 + $0x228] sm:$0xff]
    %v138 = vld [vmem:[#allocation5 + $0x230] sm:$0xff]
    %v139 = vld [vmem:[#allocation5 + $0x238] sm:$0xff]
    %v140 = vld [vmem:[#allocation5 + $0x240] sm:$0xff]
    %v141 = vld [vmem:[#allocation5 + $0x248] sm:$0xff]
    %v142 = vld [vmem:[#allocation5 + $0x250] sm:$0xff]
    %v143 = vld [vmem:[#allocation5 + $0x258] sm:$0xff]
    %v144 = vld [vmem:[#allocation5 + $0x260] sm:$0xff]
    %v145 = vld [vmem:[#allocation5 + $0x268] sm:$0xff]
    %v146 = vld [vmem:[#allocation5 + $0x270] sm:$0xff]
    %v147 = vld [vmem:[#allocation5 + $0x278] sm:$0xff]
    %v148 = vld [vmem:[#allocation5 + $0x280] sm:$0xff]
    %v149 = vld [vmem:[#allocation5 + $0x288] sm:$0xff]
    %v150 = vld [vmem:[#allocation5 + $0x290] sm:$0xff]
    %v151 = vld [vmem:[#allocation5 + $0x298] sm:$0xff]
    %v152 = vld [vmem:[#allocation5 + $0x2a0] sm:$0xff]
    %v153 = vld [vmem:[#allocation5 + $0x2a8] sm:$0xff]
    %v154 = vld [vmem:[#allocation5 + $0x2b0] sm:$0xff]
    %v155 = vld [vmem:[#allocation5 + $0x2b8] sm:$0xff]
    %v156 = vld [vmem:[#allocation5 + $0x2c0] sm:$0xff]
    %v157 = vld [vmem:[#allocation5 + $0x2c8] sm:$0xff]
    %v158 = vld [vmem:[#allocation5 + $0x2d0] sm:$0xff]
    %v159 = vld [vmem:[#allocation5 + $0x2d8] sm:$0xff]
    %v160 = vld [vmem:[#allocation5 + $0x2e0] sm:$0xff]
    %v161 = vld [vmem:[#allocation5 + $0x2e8] sm:$0xff]
    %v162 = vld [vmem:[#allocation5 + $0x2f0] sm:$0xff]
    %v163 = vld [vmem:[#allocation5 + $0x2f8] sm:$0xff]
    %v164 = vld [vmem:[#allocation5 + $0x300] sm:$0xff]
    %v165 = vld [vmem:[#allocation5 + $0x308] sm:$0xff]
    %v166 = vld [vmem:[#allocation5 + $0x310] sm:$0xff]
    %v167 = vld [vmem:[#allocation5 + $0x318] sm:$0xff]
    %v168 = vld [vmem:[#allocation5 + $0x320] sm:$0xff]
    %v169 = vld [vmem:[#allocation5 + $0x328] sm:$0xff]
    %v170 = vld [vmem:[#allocation5 + $0x330] sm:$0xff]
    %v171 = vld [vmem:[#allocation5 + $0x338] sm:$0xff]
    %v172 = vld [vmem:[#allocation5 + $0x340] sm:$0xff]
    %v173 = vld [vmem:[#allocation5 + $0x348] sm:$0xff]
    %v174 = vld [vmem:[#allocation5 + $0x350] sm:$0xff]
    %v175 = vld [vmem:[#allocation5 + $0x358] sm:$0xff]
    %v176 = vld [vmem:[#allocation5 + $0x360] sm:$0xff]
    %v177 = vld [vmem:[#allocation5 + $0x368] sm:$0xff]
    %v178 = vld [vmem:[#allocation5 + $0x370] sm:$0xff]
    %v179 = vld [vmem:[#allocation5 + $0x378] sm:$0xff]
    %v180 = vld [vmem:[#allocation5 + $0x380] sm:$0xff]
    %v181 = vld [vmem:[#allocation5 + $0x388] sm:$0xff]
    %v182 = vld [vmem:[#allocation5 + $0x390] sm:$0xff]
    %v183 = vld [vmem:[#allocation5 + $0x398] sm:$0xff]
    %v184 = vld [vmem:[#allocation5 + $0x3a0] sm:$0xff]
    %v185 = vld [vmem:[#allocation5 + $0x3a8] sm:$0xff]
    %v186 = vld [vmem:[#allocation5 + $0x3b0] sm:$0xff]
    %v187 = vld [vmem:[#allocation5 + $0x3b8] sm:$0xff]
    %v188 = vld [vmem:[#allocation5 + $0x3c0] sm:$0xff]
    %v189 = vld [vmem:[#allocation5 + $0x3c8] sm:$0xff]
    %v190 = vld [vmem:[#allocation5 + $0x3d0] sm:$0xff]
    %v191 = vld [vmem:[#allocation5 + $0x3d8] sm:$0xff]
    %v192 = vld [vmem:[#allocation5 + $0x3e0] sm:$0xff]
    %v193 = vld [vmem:[#allocation5 + $0x3e8] sm:$0xff]
    %v194 = vld [vmem:[#allocation5 + $0x3f0] sm:$0xff]
    %v195 = vld [vmem:[#allocation5 + $0x3f8] sm:$0xff]
    %v196 = vld [vmem:[#allocation5 + $0x400] sm:$0xff]
    %v197 = vld [vmem:[#allocation5 + $0x408] sm:$0xff]
    %v198 = vld [vmem:[#allocation5 + $0x410] sm:$0xff]
    %v199 = vld [vmem:[#allocation5 + $0x418] sm:$0xff]
    %v200 = vld [vmem:[#allocation5 + $0x420] sm:$0xff]
    %v201 = vld [vmem:[#allocation5 + $0x428] sm:$0xff]
    %v202 = vld [vmem:[#allocation5 + $0x430] sm:$0xff]
    %v203 = vld [vmem:[#allocation5 + $0x438] sm:$0xff]
    %v204 = vld [vmem:[#allocation5 + $0x440] sm:$0xff]
    %v205 = vld [vmem:[#allocation5 + $0x448] sm:$0xff]
    %v206 = vld [vmem:[#allocation5 + $0x450] sm:$0xff]
    %v207 = vld [vmem:[#allocation5 + $0x458] sm:$0xff]
    %v208 = vld [vmem:[#allocation5 + $0x460] sm:$0xff]
    %v209 = vld [vmem:[#allocation5 + $0x468] sm:$0xff]
    %v210 = vld [vmem:[#allocation5 + $0x470] sm:$0xff]
    %v211 = vld [vmem:[#allocation5 + $0x478] sm:$0xff]
    %v212 = vld [vmem:[#allocation5 + $0x480] sm:$0xff]
    %v213 = vld [vmem:[#allocation5 + $0x488] sm:$0xff]
    %v214 = vld [vmem:[#allocation5 + $0x490] sm:$0xff]
    %v215 = vld [vmem:[#allocation5 + $0x498] sm:$0xff]
    %v216 = vld [vmem:[#allocation5 + $0x4a0] sm:$0xff]
    %v217 = vld [vmem:[#allocation5 + $0x4a8] sm:$0xff]
    %v218 = vld [vmem:[#allocation5 + $0x4b0] sm:$0xff]
    %v219 = vld [vmem:[#allocation5 + $0x4b8] sm:$0xff]
    %v220 = vld [vmem:[#allocation5 + $0x4c0] sm:$0xff]
    %v221 = vld [vmem:[#allocation5 + $0x4c8] sm:$0xff]
    %v222 = vld [vmem:[#allocation5 + $0x4d0] sm:$0xff]
    %v223 = vld [vmem:[#allocation5 + $0x4d8] sm:$0xff]
    %v224 = vld [vmem:[#allocation5 + $0x4e0] sm:$0xff]
    %v225 = vld [vmem:[#allocation5 + $0x4e8] sm:$0xff]
    %v226 = vld [vmem:[#allocation5 + $0x4f0] sm:$0xff]
    %v227 = vld [vmem:[#allocation5 + $0x4f8] sm:$0xff]
    %v228 = vld [vmem:[#allocation5 + $0x500] sm:$0xff]
    %v229 = vld [vmem:[#allocation5 + $0x508] sm:$0xff]
    %v230 = vld [vmem:[#allocation5 + $0x510] sm:$0xff]
    %v231 = vld [vmem:[#allocation5 + $0x518] sm:$0xff]
    %v232 = vld [vmem:[#allocation5 + $0x520] sm:$0xff]
    %v233 = vld [vmem:[#allocation5 + $0x528] sm:$0xff]
    %v234 = vld [vmem:[#allocation5 + $0x530] sm:$0xff]
    %v235 = vld [vmem:[#allocation5 + $0x538] sm:$0xff]
    %v236 = vld [vmem:[#allocation5 + $0x540] sm:$0xff]
    %v237 = vld [vmem:[#allocation5 + $0x548] sm:$0xff]
    %v238 = vld [vmem:[#allocation5 + $0x550] sm:$0xff]
    %v239 = vld [vmem:[#allocation5 + $0x558] sm:$0xff]
    %v240 = vld [vmem:[#allocation5 + $0x560] sm:$0xff]
    %v241 = vld [vmem:[#allocation5 + $0x568] sm:$0xff]
    %v242 = vld [vmem:[#allocation5 + $0x570] sm:$0xff]
    %v243 = vld [vmem:[#allocation5 + $0x578] sm:$0xff]
    %v244 = vld [vmem:[#allocation5 + $0x580] sm:$0xff]
    %v245 = vld [vmem:[#allocation5 + $0x588] sm:$0xff]
    %v246 = vld [vmem:[#allocation5 + $0x590] sm:$0xff]
    %v247 = vld [vmem:[#allocation5 + $0x598] sm:$0xff]
    %v248 = vld [vmem:[#allocation5 + $0x5a0] sm:$0xff]
    %v249 = vld [vmem:[#allocation5 + $0x5a8] sm:$0xff]
    %v250 = vld [vmem:[#allocation5 + $0x5b0] sm:$0xff]
    %v251 = vld [vmem:[#allocation5 + $0x5b8] sm:$0xff]
    %v252 = vld [vmem:[#allocation5 + $0x5c0] sm:$0xff]
    %v253 = vld [vmem:[#allocation5 + $0x5c8] sm:$0xff]
    %v254 = vld [vmem:[#allocation5 + $0x5d0] sm:$0xff]
    %v255 = vld [vmem:[#allocation5 + $0x5d8] sm:$0xff]
    %v256 = vld [vmem:[#allocation5 + $0x5e0] sm:$0xff]
    %v257 = vld [vmem:[#allocation5 + $0x5e8] sm:$0xff]
    %v258 = vld [vmem:[#allocation5 + $0x5f0] sm:$0xff]
    %v259 = vld [vmem:[#allocation5 + $0x5f8] sm:$0xff]
    %v260 = vld [vmem:[#allocation5 + $0x600] sm:$0xff]
    %v261 = vld [vmem:[#allocation5 + $0x608] sm:$0xff]
    %v262 = vld [vmem:[#allocation5 + $0x610] sm:$0xff]
    %v263 = vld [vmem:[#allocation5 + $0x618] sm:$0xff]
    %v264 = vld [vmem:[#allocation5 + $0x620] sm:$0xff]
    %v265 = vld [vmem:[#allocation5 + $0x628] sm:$0xff]
    %v266 = vld [vmem:[#allocation5 + $0x630] sm:$0xff]
    %v267 = vld [vmem:[#allocation5 + $0x638] sm:$0xff]
    %v268 = vld [vmem:[#allocation5 + $0x640] sm:$0xff]
    %v269 = vld [vmem:[#allocation5 + $0x648] sm:$0xff]
    %v270 = vld [vmem:[#allocation5 + $0x650] sm:$0xff]
    %v271 = vld [vmem:[#allocation5 + $0x658] sm:$0xff]
    %v272 = vld [vmem:[#allocation5 + $0x660] sm:$0xff]
    %v273 = vld [vmem:[#allocation5 + $0x668] sm:$0xff]
    %v274 = vld [vmem:[#allocation5 + $0x670] sm:$0xff]
    %v275 = vld [vmem:[#allocation5 + $0x678] sm:$0xff]
    %v276 = vld [vmem:[#allocation5 + $0x680] sm:$0xff]
    %v277 = vld [vmem:[#allocation5 + $0x688] sm:$0xff]
    %v278 = vld [vmem:[#allocation5 + $0x690] sm:$0xff]
    %v279 = vld [vmem:[#allocation5 + $0x698] sm:$0xff]
    %v280 = vld [vmem:[#allocation5 + $0x6a0] sm:$0xff]
    %v281 = vld [vmem:[#allocation5 + $0x6a8] sm:$0xff]
    %v282 = vld [vmem:[#allocation5 + $0x6b0] sm:$0xff]
    %v283 = vld [vmem:[#allocation5 + $0x6b8] sm:$0xff]
    %v284 = vld [vmem:[#allocation5 + $0x6c0] sm:$0xff]
    %v285 = vld [vmem:[#allocation5 + $0x6c8] sm:$0xff]
    %v286 = vld [vmem:[#allocation5 + $0x6d0] sm:$0xff]
    %v287 = vld [vmem:[#allocation5 + $0x6d8] sm:$0xff]
    %v288 = vld [vmem:[#allocation5 + $0x6e0] sm:$0xff]
    %v289 = vld [vmem:[#allocation5 + $0x6e8] sm:$0xff]
    %v290 = vld [vmem:[#allocation5 + $0x6f0] sm:$0xff]
    %v291 = vld [vmem:[#allocation5 + $0x6f8] sm:$0xff]
    %v292 = vld [vmem:[#allocation5 + $0x700] sm:$0xff]
    %v293 = vld [vmem:[#allocation5 + $0x708] sm:$0xff]
    %v294 = vld [vmem:[#allocation5 + $0x710] sm:$0xff]
    %v295 = vld [vmem:[#allocation5 + $0x718] sm:$0xff]
    %v296 = vld [vmem:[#allocation5 + $0x720] sm:$0xff]
    %v297 = vld [vmem:[#allocation5 + $0x728] sm:$0xff]
    %v298 = vld [vmem:[#allocation5 + $0x730] sm:$0xff]
    %v299 = vld [vmem:[#allocation5 + $0x738] sm:$0xff]
    %v300 = vld [vmem:[#allocation5 + $0x740] sm:$0xff]
    %v301 = vld [vmem:[#allocation5 + $0x748] sm:$0xff]
    %v302 = vld [vmem:[#allocation5 + $0x750] sm:$0xff]
    %v303 = vld [vmem:[#allocation5 + $0x758] sm:$0xff]
    %v304 = vld [vmem:[#allocation5 + $0x760] sm:$0xff]
    %v305 = vld [vmem:[#allocation5 + $0x768] sm:$0xff]
    %v306 = vld [vmem:[#allocation5 + $0x770] sm:$0xff]
    %v307 = vld [vmem:[#allocation5 + $0x778] sm:$0xff]
    %v308 = vld [vmem:[#allocation5 + $0x780] sm:$0xff]
    %v309 = vld [vmem:[#allocation5 + $0x788] sm:$0xff]
    %v310 = vld [vmem:[#allocation5 + $0x790] sm:$0xff]
    %v311 = vld [vmem:[#allocation5 + $0x798] sm:$0xff]
    %v312 = vld [vmem:[#allocation5 + $0x7a0] sm:$0xff]
    %v313 = vld [vmem:[#allocation5 + $0x7a8] sm:$0xff]
    %v314 = vld [vmem:[#allocation5 + $0x7b0] sm:$0xff]
    %v315 = vld [vmem:[#allocation5 + $0x7b8] sm:$0xff]
    %v316 = vld [vmem:[#allocation5 + $0x7c0] sm:$0xff]
    %v317 = vld [vmem:[#allocation5 + $0x7c8] sm:$0xff]
    %v318 = vld [vmem:[#allocation5 + $0x7d0] sm:$0xff]
    %v319 = vld [vmem:[#allocation5 + $0x7d8] sm:$0xff]
    %v320 = vld [vmem:[#allocation5 + $0x7e0] sm:$0xff]
    %v321 = vld [vmem:[#allocation5 + $0x7e8] sm:$0xff]
    %v322 = vld [vmem:[#allocation5 + $0x7f0] sm:$0xff]
    %v323 = vld [vmem:[#allocation5 + $0x7f8] sm:$0xff]
    %v324 = vld [vmem:[#allocation5 + $0x800] sm:$0xff]
    %v325 = vld [vmem:[#allocation5 + $0x808] sm:$0xff]
    %v326 = vld [vmem:[#allocation5 + $0x810] sm:$0xff]
    %v327 = vld [vmem:[#allocation5 + $0x818] sm:$0xff]
    %v328 = vld [vmem:[#allocation5 + $0x820] sm:$0xff]
    %v329 = vld [vmem:[#allocation5 + $0x828] sm:$0xff]
    %v330 = vld [vmem:[#allocation5 + $0x830] sm:$0xff]
    %v331 = vld [vmem:[#allocation5 + $0x838] sm:$0xff]
    %v332 = vld [vmem:[#allocation5 + $0x840] sm:$0xff]
    %v333 = vld [vmem:[#allocation5 + $0x848] sm:$0xff]
    %v334 = vld [vmem:[#allocation5 + $0x850] sm:$0xff]
    %v335 = vld [vmem:[#allocation5 + $0x858] sm:$0xff]
    %v336 = vld [vmem:[#allocation5 + $0x860] sm:$0xff]
    %v337 = vld [vmem:[#allocation5 + $0x868] sm:$0xff]
    %v338 = vld [vmem:[#allocation5 + $0x870] sm:$0xff]
    %v339 = vld [vmem:[#allocation5 + $0x878] sm:$0xff]
    %v340 = vld [vmem:[#allocation5 + $0x880] sm:$0xff]
    %v341 = vld [vmem:[#allocation5 + $0x888] sm:$0xff]
    %v342 = vld [vmem:[#allocation5 + $0x890] sm:$0xff]
    %v343 = vld [vmem:[#allocation5 + $0x898] sm:$0xff]
    %v344 = vld [vmem:[#allocation5 + $0x8a0] sm:$0xff]
    %v345 = vld [vmem:[#allocation5 + $0x8a8] sm:$0xff]
    %v346 = vld [vmem:[#allocation5 + $0x8b0] sm:$0xff]
    %v347 = vld [vmem:[#allocation5 + $0x8b8] sm:$0xff]
    %v348 = vld [vmem:[#allocation5 + $0x8c0] sm:$0xff]
    %v349 = vld [vmem:[#allocation5 + $0x8c8] sm:$0xff]
    %v350 = vld [vmem:[#allocation5 + $0x8d0] sm:$0xff]
    %v351 = vld [vmem:[#allocation5 + $0x8d8] sm:$0xff]
    %v352 = vld [vmem:[#allocation5 + $0x8e0] sm:$0xff]
    %v353 = vld [vmem:[#allocation5 + $0x8e8] sm:$0xff]
    %v354 = vld [vmem:[#allocation5 + $0x8f0] sm:$0xff]
    %v355 = vld [vmem:[#allocation5 + $0x8f8] sm:$0xff]
    %v356 = vld [vmem:[#allocation5 + $0x900] sm:$0xff]
    %v357 = vld [vmem:[#allocation5 + $0x908] sm:$0xff]
    %v358 = vld [vmem:[#allocation5 + $0x910] sm:$0xff]
    %v359 = vld [vmem:[#allocation5 + $0x918] sm:$0xff]
    %v360 = vld [vmem:[#allocation5 + $0x920] sm:$0xff]
    %v361 = vld [vmem:[#allocation5 + $0x928] sm:$0xff]
    %v362 = vld [vmem:[#allocation5 + $0x930] sm:$0xff]
    %v363 = vld [vmem:[#allocation5 + $0x938] sm:$0xff]
    %v364 = vld [vmem:[#allocation5 + $0x940] sm:$0xff]
    %v365 = vld [vmem:[#allocation5 + $0x948] sm:$0xff]
    %v366 = vld [vmem:[#allocation5 + $0x950] sm:$0xff]
    %v367 = vld [vmem:[#allocation5 + $0x958] sm:$0xff]
    %v368 = vld [vmem:[#allocation5 + $0x960] sm:$0xff]
    %v369 = vld [vmem:[#allocation5 + $0x968] sm:$0xff]
    %v370 = vld [vmem:[#allocation5 + $0x970] sm:$0xff]
    %v371 = vld [vmem:[#allocation5 + $0x978] sm:$0xff]
    %v372 = vld [vmem:[#allocation5 + $0x980] sm:$0xff]
    %v373 = vld [vmem:[#allocation5 + $0x988] sm:$0xff]
    %v374 = vld [vmem:[#allocation5 + $0x990] sm:$0xff]
    %v375 = vld [vmem:[#allocation5 + $0x998] sm:$0xff]
    %v376 = vld [vmem:[#allocation5 + $0x9a0] sm:$0xff]
    %v377 = vld [vmem:[#allocation5 + $0x9a8] sm:$0xff]
    %v378 = vld [vmem:[#allocation5 + $0x9b0] sm:$0xff]
    %v379 = vld [vmem:[#allocation5 + $0x9b8] sm:$0xff]
    %v380 = vld [vmem:[#allocation5 + $0x9c0] sm:$0xff]
    %v381 = vld [vmem:[#allocation5 + $0x9c8] sm:$0xff]
    %v382 = vld [vmem:[#allocation5 + $0x9d0] sm:$0xff]
    %v383 = vld [vmem:[#allocation5 + $0x9d8] sm:$0xff]
    %v384 = vld [vmem:[#allocation5 + $0x9e0] sm:$0xff]
    %v385 = vld [vmem:[#allocation5 + $0x9e8] sm:$0xff]
    %v386 = vld [vmem:[#allocation5 + $0x9f0] sm:$0xff]
    %v387 = vld [vmem:[#allocation5 + $0x9f8] sm:$0xff]
    %v388 = vld [vmem:[#allocation5 + $0xa00] sm:$0xff]
    %v389 = vld [vmem:[#allocation5 + $0xa08] sm:$0xff]
    %v390 = vld [vmem:[#allocation5 + $0xa10] sm:$0xff]
    %v391 = vld [vmem:[#allocation5 + $0xa18] sm:$0xff]
    %v392 = vld [vmem:[#allocation5 + $0xa20] sm:$0xff]
    %v393 = vld [vmem:[#allocation5 + $0xa28] sm:$0xff]
    %v394 = vld [vmem:[#allocation5 + $0xa30] sm:$0xff]
    %v395 = vld [vmem:[#allocation5 + $0xa38] sm:$0xff]
    %v396 = vld [vmem:[#allocation5 + $0xa40] sm:$0xff]
    %v397 = vld [vmem:[#allocation5 + $0xa48] sm:$0xff]
    %v398 = vld [vmem:[#allocation5 + $0xa50] sm:$0xff]
    %v399 = vld [vmem:[#allocation5 + $0xa58] sm:$0xff]
    %v400 = vld [vmem:[#allocation5 + $0xa60] sm:$0xff]
    %v401 = vld [vmem:[#allocation5 + $0xa68] sm:$0xff]
    %v402 = vld [vmem:[#allocation5 + $0xa70] sm:$0xff]
    %v403 = vld [vmem:[#allocation5 + $0xa78] sm:$0xff]
    %v404 = vld [vmem:[#allocation5 + $0xa80] sm:$0xff]
    %v405 = vld [vmem:[#allocation5 + $0xa88] sm:$0xff]
    %v406 = vld [vmem:[#allocation5 + $0xa90] sm:$0xff]
    %v407 = vld [vmem:[#allocation5 + $0xa98] sm:$0xff]
    %v408 = vld [vmem:[#allocation5 + $0xaa0] sm:$0xff]
    %v409 = vld [vmem:[#allocation5 + $0xaa8] sm:$0xff]
    %v410 = vld [vmem:[#allocation5 + $0xab0] sm:$0xff]
    %v411 = vld [vmem:[#allocation5 + $0xab8] sm:$0xff]
    %v412 = vld [vmem:[#allocation5 + $0xac0] sm:$0xff]
    %v413 = vld [vmem:[#allocation5 + $0xac8] sm:$0xff]
    %v414 = vld [vmem:[#allocation5 + $0xad0] sm:$0xff]
    %v415 = vld [vmem:[#allocation5 + $0xad8] sm:$0xff]
    %v416 = vld [vmem:[#allocation5 + $0xae0] sm:$0xff]
    %v417 = vld [vmem:[#allocation5 + $0xae8] sm:$0xff]
    %v418 = vld [vmem:[#allocation5 + $0xaf0] sm:$0xff]
    %v419 = vld [vmem:[#allocation5 + $0xaf8] sm:$0xff]
    %v420 = vld [vmem:[#allocation5 + $0xb00] sm:$0xff]
    %v421 = vld [vmem:[#allocation5 + $0xb08] sm:$0xff]
    %v422 = vld [vmem:[#allocation5 + $0xb10] sm:$0xff]
    %v423 = vld [vmem:[#allocation5 + $0xb18] sm:$0xff]
    %v424 = vld [vmem:[#allocation5 + $0xb20] sm:$0xff]
    %v425 = vld [vmem:[#allocation5 + $0xb28] sm:$0xff]
    %v426 = vld [vmem:[#allocation5 + $0xb30] sm:$0xff]
    %v427 = vld [vmem:[#allocation5 + $0xb38] sm:$0xff]
    %v428 = vld [vmem:[#allocation5 + $0xb40] sm:$0xff]
    %v429 = vld [vmem:[#allocation5 + $0xb48] sm:$0xff]
    %v430 = vld [vmem:[#allocation5 + $0xb50] sm:$0xff]
    %v431 = vld [vmem:[#allocation5 + $0xb58] sm:$0xff]
    %v432 = vld [vmem:[#allocation5 + $0xb60] sm:$0xff]
    %v433 = vld [vmem:[#allocation5 + $0xb68] sm:$0xff]
    %v434 = vld [vmem:[#allocation5 + $0xb70] sm:$0xff]
    %v435 = vld [vmem:[#allocation5 + $0xb78] sm:$0xff]
    %v436 = vld [vmem:[#allocation5 + $0xb80] sm:$0xff]
    %v437 = vld [vmem:[#allocation5 + $0xb88] sm:$0xff]
    %v438 = vld [vmem:[#allocation5 + $0xb90] sm:$0xff]
    %v439 = vld [vmem:[#allocation5 + $0xb98] sm:$0xff]
    %v440 = vld [vmem:[#allocation5 + $0xba0] sm:$0xff]
    %v441 = vld [vmem:[#allocation5 + $0xba8] sm:$0xff]
    %v442 = vld [vmem:[#allocation5 + $0xbb0] sm:$0xff]
    %v443 = vld [vmem:[#allocation5 + $0xbb8] sm:$0xff]
    %v444 = vld [vmem:[#allocation5 + $0xbc0] sm:$0xff]
    %v445 = vld [vmem:[#allocation5 + $0xbc8] sm:$0xff]
    %v446 = vld [vmem:[#allocation5 + $0xbd0] sm:$0xff]
    %v447 = vld [vmem:[#allocation5 + $0xbd8] sm:$0xff]
    %v448 = vld [vmem:[#allocation5 + $0xbe0] sm:$0xff]
    %v449 = vld [vmem:[#allocation5 + $0xbe8] sm:$0xff]
    %v450 = vld [vmem:[#allocation5 + $0xbf0] sm:$0xff]
    %v451 = vld [vmem:[#allocation5 + $0xbf8] sm:$0xff]
    %v452 = vld [vmem:[#allocation5 + $0xc00] sm:$0xff]
    %v453 = vld [vmem:[#allocation5 + $0xc08] sm:$0xff]
    %v454 = vld [vmem:[#allocation5 + $0xc10] sm:$0xff]
    %v455 = vld [vmem:[#allocation5 + $0xc18] sm:$0xff]
    %v456 = vld [vmem:[#allocation5 + $0xc20] sm:$0xff]
    %v457 = vld [vmem:[#allocation5 + $0xc28] sm:$0xff]
    %v458 = vld [vmem:[#allocation5 + $0xc30] sm:$0xff]
    %v459 = vld [vmem:[#allocation5 + $0xc38] sm:$0xff]
    %v460 = vld [vmem:[#allocation5 + $0xc40] sm:$0xff]
    %v461 = vld [vmem:[#allocation5 + $0xc48] sm:$0xff]
    %v462 = vld [vmem:[#allocation5 + $0xc50] sm:$0xff]
    %v463 = vld [vmem:[#allocation5 + $0xc58] sm:$0xff]
    %v464 = vld [vmem:[#allocation5 + $0xc60] sm:$0xff]
    %v465 = vld [vmem:[#allocation5 + $0xc68] sm:$0xff]
    %v466 = vld [vmem:[#allocation5 + $0xc70] sm:$0xff]
    %v467 = vld [vmem:[#allocation5 + $0xc78] sm:$0xff]
    %v468 = vld [vmem:[#allocation5 + $0xc80] sm:$0xff]
    %v469 = vld [vmem:[#allocation5 + $0xc88] sm:$0xff]
    %v470 = vld [vmem:[#allocation5 + $0xc90] sm:$0xff]
    %v471 = vld [vmem:[#allocation5 + $0xc98] sm:$0xff]
    %v472 = vld [vmem:[#allocation5 + $0xca0] sm:$0xff]
    %v473 = vld [vmem:[#allocation5 + $0xca8] sm:$0xff]
    %v474 = vld [vmem:[#allocation5 + $0xcb0] sm:$0xff]
    %v475 = vld [vmem:[#allocation5 + $0xcb8] sm:$0xff]
    %v476 = vld [vmem:[#allocation5 + $0xcc0] sm:$0xff]
    %v477 = vld [vmem:[#allocation5 + $0xcc8] sm:$0xff]
    %v478 = vld [vmem:[#allocation5 + $0xcd0] sm:$0xff]
    %v479 = vld [vmem:[#allocation5 + $0xcd8] sm:$0xff]
    %v480 = vld [vmem:[#allocation5 + $0xce0] sm:$0xff]
    %v481 = vld [vmem:[#allocation5 + $0xce8] sm:$0xff]
    %v482 = vld [vmem:[#allocation5 + $0xcf0] sm:$0xff]
    %v483 = vld [vmem:[#allocation5 + $0xcf8] sm:$0xff]
    %v484 = vld [vmem:[#allocation5 + $0xd00] sm:$0xff]
    %v485 = vld [vmem:[#allocation5 + $0xd08] sm:$0xff]
    %v486 = vld [vmem:[#allocation5 + $0xd10] sm:$0xff]
    %v487 = vld [vmem:[#allocation5 + $0xd18] sm:$0xff]
    %v488 = vld [vmem:[#allocation5 + $0xd20] sm:$0xff]
    %v489 = vld [vmem:[#allocation5 + $0xd28] sm:$0xff]
    %v490 = vld [vmem:[#allocation5 + $0xd30] sm:$0xff]
    %v491 = vld [vmem:[#allocation5 + $0xd38] sm:$0xff]
    %v492 = vld [vmem:[#allocation5 + $0xd40] sm:$0xff]
    %v493 = vld [vmem:[#allocation5 + $0xd48] sm:$0xff]
    %v494 = vld [vmem:[#allocation5 + $0xd50] sm:$0xff]
    %v495 = vld [vmem:[#allocation5 + $0xd58] sm:$0xff]
    %v496 = vld [vmem:[#allocation5 + $0xd60] sm:$0xff]
    %v497 = vld [vmem:[#allocation5 + $0xd68] sm:$0xff]
    %v498 = vld [vmem:[#allocation5 + $0xd70] sm:$0xff]
    %v499 = vld [vmem:[#allocation5 + $0xd78] sm:$0xff]
    %v500 = vld [vmem:[#allocation5 + $0xd80] sm:$0xff]
    %v501 = vld [vmem:[#allocation5 + $0xd88] sm:$0xff]
    %v502 = vld [vmem:[#allocation5 + $0xd90] sm:$0xff]
    %v503 = vld [vmem:[#allocation5 + $0xd98] sm:$0xff]
    %v504 = vld [vmem:[#allocation5 + $0xda0] sm:$0xff]
    %v505 = vld [vmem:[#allocation5 + $0xda8] sm:$0xff]
    %v506 = vld [vmem:[#allocation5 + $0xdb0] sm:$0xff]
    %v507 = vld [vmem:[#allocation5 + $0xdb8] sm:$0xff]
    %v508 = vld [vmem:[#allocation5 + $0xdc0] sm:$0xff]
    %v509 = vld [vmem:[#allocation5 + $0xdc8] sm:$0xff]
    %v510 = vld [vmem:[#allocation5 + $0xdd0] sm:$0xff]
    %v511 = vld [vmem:[#allocation5 + $0xdd8] sm:$0xff]
    %v512 = vld [vmem:[#allocation5 + $0xde0] sm:$0xff]
    %v513 = vld [vmem:[#allocation5 + $0xde8] sm:$0xff]
    %v514 = vld [vmem:[#allocation5 + $0xdf0] sm:$0xff]
    %v515 = vld [vmem:[#allocation5 + $0xdf8] sm:$0xff]
    %v516 = vld [vmem:[#allocation5 + $0xe00] sm:$0xff]
    %v517 = vld [vmem:[#allocation5 + $0xe08] sm:$0xff]
    %v518 = vld [vmem:[#allocation5 + $0xe10] sm:$0xff]
    %v519 = vld [vmem:[#allocation5 + $0xe18] sm:$0xff]
    %v520 = vld [vmem:[#allocation5 + $0xe20] sm:$0xff]
    %v521 = vld [vmem:[#allocation5 + $0xe28] sm:$0xff]
    %v522 = vld [vmem:[#allocation5 + $0xe30] sm:$0xff]
    %v523 = vld [vmem:[#allocation5 + $0xe38] sm:$0xff]
    %v524 = vld [vmem:[#allocation5 + $0xe40] sm:$0xff]
    %v525 = vld [vmem:[#allocation5 + $0xe48] sm:$0xff]
    %v526 = vld [vmem:[#allocation5 + $0xe50] sm:$0xff]
    %v527 = vld [vmem:[#allocation5 + $0xe58] sm:$0xff]
    %v528 = vld [vmem:[#allocation5 + $0xe60] sm:$0xff]
    %v529 = vld [vmem:[#allocation5 + $0xe68] sm:$0xff]
    %v530 = vld [vmem:[#allocation5 + $0xe70] sm:$0xff]
    %v531 = vld [vmem:[#allocation5 + $0xe78] sm:$0xff]
    %v532 = vld [vmem:[#allocation5 + $0xe80] sm:$0xff]
    %v533 = vld [vmem:[#allocation5 + $0xe88] sm:$0xff]
    %v534 = vld [vmem:[#allocation5 + $0xe90] sm:$0xff]
    %v535 = vld [vmem:[#allocation5 + $0xe98] sm:$0xff]
    %v536 = vld [vmem:[#allocation5 + $0xea0] sm:$0xff]
    %v537 = vld [vmem:[#allocation5 + $0xea8] sm:$0xff]
    %v538 = vld [vmem:[#allocation5 + $0xeb0] sm:$0xff]
    %v539 = vld [vmem:[#allocation5 + $0xeb8] sm:$0xff]
    %v540 = vld [vmem:[#allocation5 + $0xec0] sm:$0xff]
    %v541 = vld [vmem:[#allocation5 + $0xec8] sm:$0xff]
    %v542 = vld [vmem:[#allocation5 + $0xed0] sm:$0xff]
    %v543 = vld [vmem:[#allocation5 + $0xed8] sm:$0xff]
    %v544 = vld [vmem:[#allocation5 + $0xee0] sm:$0xff]
    %v545 = vld [vmem:[#allocation5 + $0xee8] sm:$0xff]
    %v546 = vld [vmem:[#allocation5 + $0xef0] sm:$0xff]
    %v547 = vld [vmem:[#allocation5 + $0xef8] sm:$0xff]
    %v548 = vld [vmem:[#allocation5 + $0xf00] sm:$0xff]
    %v549 = vld [vmem:[#allocation5 + $0xf08] sm:$0xff]
    %v550 = vld [vmem:[#allocation5 + $0xf10] sm:$0xff]
    %v551 = vld [vmem:[#allocation5 + $0xf18] sm:$0xff]
    %v552 = vld [vmem:[#allocation5 + $0xf20] sm:$0xff]
    %v553 = vld [vmem:[#allocation5 + $0xf28] sm:$0xff]
    %v554 = vld [vmem:[#allocation5 + $0xf30] sm:$0xff]
    %v555 = vld [vmem:[#allocation5 + $0xf38] sm:$0xff]
    %v556 = vld [vmem:[#allocation5 + $0xf40] sm:$0xff]
    %v557 = vld [vmem:[#allocation5 + $0xf48] sm:$0xff]
    %v558 = vld [vmem:[#allocation5 + $0xf50] sm:$0xff]
    %v559 = vld [vmem:[#allocation5 + $0xf58] sm:$0xff]
    %v560 = vld [vmem:[#allocation5 + $0xf60] sm:$0xff]
    %v561 = vld [vmem:[#allocation5 + $0xf68] sm:$0xff]
    %v562 = vld [vmem:[#allocation5 + $0xf70] sm:$0xff]
    %v563 = vld [vmem:[#allocation5 + $0xf78] sm:$0xff]
    %v564 = vld [vmem:[#allocation5 + $0xf80] sm:$0xff]
    %v565 = vld [vmem:[#allocation5 + $0xf88] sm:$0xff]
    %v566 = vld [vmem:[#allocation5 + $0xf90] sm:$0xff]
    %v567 = vld [vmem:[#allocation5 + $0xf98] sm:$0xff]
    %v568 = vld [vmem:[#allocation5 + $0xfa0] sm:$0xff]
    %v569 = vld [vmem:[#allocation5 + $0xfa8] sm:$0xff]
    %v570 = vld [vmem:[#allocation5 + $0xfb0] sm:$0xff]
    %v571 = vld [vmem:[#allocation5 + $0xfb8] sm:$0xff]
    %v572 = vld [vmem:[#allocation5 + $0xfc0] sm:$0xff]
    %v573 = vld [vmem:[#allocation5 + $0xfc8] sm:$0xff]
    %v574 = vld [vmem:[#allocation5 + $0xfd0] sm:$0xff]
    %v575 = vld [vmem:[#allocation5 + $0xfd8] sm:$0xff]
    %v576 = vld [vmem:[#allocation5 + $0xfe0] sm:$0xff]
    %v577 = vld [vmem:[#allocation5 + $0xfe8] sm:$0xff]
    %v578 = vld [vmem:[#allocation5 + $0xff0] sm:$0xff]
    %v579 = vld [vmem:[#allocation5 + $0xff8] sm:$0xff]
    %v580 = vld [vmem:[#allocation5 + $0x1000] sm:$0xff]
    %v581 = vld [vmem:[#allocation5 + $0x1008] sm:$0xff]
    %v582 = vld [vmem:[#allocation5 + $0x1010] sm:$0xff]
    %v583 = vld [vmem:[#allocation5 + $0x1018] sm:$0xff]
    %v584 = vld [vmem:[#allocation5 + $0x1020] sm:$0xff]
    %v585 = vld [vmem:[#allocation5 + $0x1028] sm:$0xff]
    %v586 = vld [vmem:[#allocation5 + $0x1030] sm:$0xff]
    %v587 = vld [vmem:[#allocation5 + $0x1038] sm:$0xff]
    %v588 = vld [vmem:[#allocation5 + $0x1040] sm:$0xff]
    %v589 = vld [vmem:[#allocation5 + $0x1048] sm:$0xff]
    %v590 = vld [vmem:[#allocation5 + $0x1050] sm:$0xff]
    %v591 = vld [vmem:[#allocation5 + $0x1058] sm:$0xff]
    %v592 = vld [vmem:[#allocation5 + $0x1060] sm:$0xff]
    %v593 = vld [vmem:[#allocation5 + $0x1068] sm:$0xff]
    %v594 = vld [vmem:[#allocation5 + $0x1070] sm:$0xff]
    %v595 = vld [vmem:[#allocation5 + $0x1078] sm:$0xff]
    %v596 = vld [vmem:[#allocation5 + $0x1080] sm:$0xff]
    %v597 = vld [vmem:[#allocation5 + $0x1088] sm:$0xff]
    %v598 = vld [vmem:[#allocation5 + $0x1090] sm:$0xff]
    %v599 = vld [vmem:[#allocation5 + $0x1098] sm:$0xff]
    %v600 = vld [vmem:[#allocation5 + $0x10a0] sm:$0xff]
    %v601 = vld [vmem:[#allocation5 + $0x10a8] sm:$0xff]
    %v602 = vld [vmem:[#allocation5 + $0x10b0] sm:$0xff]
    %v603 = vld [vmem:[#allocation5 + $0x10b8] sm:$0xff]
    %v604 = vld [vmem:[#allocation5 + $0x10c0] sm:$0xff]
    %v605 = vld [vmem:[#allocation5 + $0x10c8] sm:$0xff]
    %v606 = vld [vmem:[#allocation5 + $0x10d0] sm:$0xff]
    %v607 = vld [vmem:[#allocation5 + $0x10d8] sm:$0xff]
    %v608 = vld [vmem:[#allocation5 + $0x10e0] sm:$0xff]
    %v609 = vld [vmem:[#allocation5 + $0x10e8] sm:$0xff]
    %v610 = vld [vmem:[#allocation5 + $0x10f0] sm:$0xff]
    %v611 = vld [vmem:[#allocation5 + $0x10f8] sm:$0xff]
    %v612 = vld [vmem:[#allocation5 + $0x1100] sm:$0xff]
    %v613 = vld [vmem:[#allocation5 + $0x1108] sm:$0xff]
    %v614 = vld [vmem:[#allocation5 + $0x1110] sm:$0xff]
    %v615 = vld [vmem:[#allocation5 + $0x1118] sm:$0xff]
    %v616 = vld [vmem:[#allocation5 + $0x1120] sm:$0xff]
    %v617 = vld [vmem:[#allocation5 + $0x1128] sm:$0xff]
    %v618 = vld [vmem:[#allocation5 + $0x1130] sm:$0xff]
    %v619 = vld [vmem:[#allocation5 + $0x1138] sm:$0xff]
    %v620 = vld [vmem:[#allocation5 + $0x1140] sm:$0xff]
    %v621 = vld [vmem:[#allocation5 + $0x1148] sm:$0xff]
    %v622 = vld [vmem:[#allocation5 + $0x1150] sm:$0xff]
    %v623 = vld [vmem:[#allocation5 + $0x1158] sm:$0xff]
    %v624 = vld [vmem:[#allocation5 + $0x1160] sm:$0xff]
    %v625 = vld [vmem:[#allocation5 + $0x1168] sm:$0xff]
    %v626 = vld [vmem:[#allocation5 + $0x1170] sm:$0xff]
    %v627 = vld [vmem:[#allocation5 + $0x1178] sm:$0xff]
    %v628 = vld [vmem:[#allocation5 + $0x1180] sm:$0xff]
    %v629 = vld [vmem:[#allocation5 + $0x1188] sm:$0xff]
    %v630 = vld [vmem:[#allocation5 + $0x1190] sm:$0xff]
    %v631 = vld [vmem:[#allocation5 + $0x1198] sm:$0xff]
    %v632 = vld [vmem:[#allocation5 + $0x11a0] sm:$0xff]
    %v633 = vld [vmem:[#allocation5 + $0x11a8] sm:$0xff]
    %v634 = vld [vmem:[#allocation5 + $0x11b0] sm:$0xff]
    %v635 = vld [vmem:[#allocation5 + $0x11b8] sm:$0xff]
    %v636 = vld [vmem:[#allocation5 + $0x11c0] sm:$0xff]
    %v637 = vld [vmem:[#allocation5 + $0x11c8] sm:$0xff]
    %v638 = vld [vmem:[#allocation5 + $0x11d0] sm:$0xff]
    %v639 = vld [vmem:[#allocation5 + $0x11d8] sm:$0xff]
    %v640 = vld [vmem:[#allocation5 + $0x11e0] sm:$0xff]
    %v641 = vld [vmem:[#allocation5 + $0x11e8] sm:$0xff]
    %v642 = vld [vmem:[#allocation5 + $0x11f0] sm:$0xff]
    %v643 = vld [vmem:[#allocation5 + $0x11f8] sm:$0xff]
    %v644 = vld [vmem:[#allocation5 + $0x1200] sm:$0xff]
    %v645 = vld [vmem:[#allocation5 + $0x1208] sm:$0xff]
    %v646 = vld [vmem:[#allocation5 + $0x1210] sm:$0xff]
    %v647 = vld [vmem:[#allocation5 + $0x1218] sm:$0xff]
    %v648 = vld [vmem:[#allocation5 + $0x1220] sm:$0xff]
    %v649 = vld [vmem:[#allocation5 + $0x1228] sm:$0xff]
    %v650 = vld [vmem:[#allocation5 + $0x1230] sm:$0xff]
    %v651 = vld [vmem:[#allocation5 + $0x1238] sm:$0xff]
    %v652 = vld [vmem:[#allocation5 + $0x1240] sm:$0xff]
    %v653 = vld [vmem:[#allocation5 + $0x1248] sm:$0xff]
    %v654 = vld [vmem:[#allocation5 + $0x1250] sm:$0xff]
    %v655 = vld [vmem:[#allocation5 + $0x1258] sm:$0xff]
    %v656 = vld [vmem:[#allocation5 + $0x1260] sm:$0xff]
    %v657 = vld [vmem:[#allocation5 + $0x1268] sm:$0xff]
    %v658 = vld [vmem:[#allocation5 + $0x1270] sm:$0xff]
    %v659 = vld [vmem:[#allocation5 + $0x1278] sm:$0xff]
    %v660 = vld [vmem:[#allocation5 + $0x1280] sm:$0xff]
    %v661 = vld [vmem:[#allocation5 + $0x1288] sm:$0xff]
    %v662 = vld [vmem:[#allocation5 + $0x1290] sm:$0xff]
    %v663 = vld [vmem:[#allocation5 + $0x1298] sm:$0xff]
    %v664 = vld [vmem:[#allocation5 + $0x12a0] sm:$0xff]
    %v665 = vld [vmem:[#allocation5 + $0x12a8] sm:$0xff]
    %v666 = vld [vmem:[#allocation5 + $0x12b0] sm:$0xff]
    %v667 = vld [vmem:[#allocation5 + $0x12b8] sm:$0xff]
    %v668 = vld [vmem:[#allocation5 + $0x12c0] sm:$0xff]
    %v669 = vld [vmem:[#allocation5 + $0x12c8] sm:$0xff]
    %v670 = vld [vmem:[#allocation5 + $0x12d0] sm:$0xff]
    %v671 = vld [vmem:[#allocation5 + $0x12d8] sm:$0xff]
    %v672 = vld [vmem:[#allocation5 + $0x12e0] sm:$0xff]
    %v673 = vld [vmem:[#allocation5 + $0x12e8] sm:$0xff]
    %v674 = vld [vmem:[#allocation5 + $0x12f0] sm:$0xff]
    %v675 = vld [vmem:[#allocation5 + $0x12f8] sm:$0xff]
    %v676 = vld [vmem:[#allocation5 + $0x1300] sm:$0xff]
    %v677 = vld [vmem:[#allocation5 + $0x1308] sm:$0xff]
    %v678 = vld [vmem:[#allocation5 + $0x1310] sm:$0xff]
    %v679 = vld [vmem:[#allocation5 + $0x1318] sm:$0xff]
    %v680 = vld [vmem:[#allocation5 + $0x1320] sm:$0xff]
    %v681 = vld [vmem:[#allocation5 + $0x1328] sm:$0xff]
    %v682 = vld [vmem:[#allocation5 + $0x1330] sm:$0xff]
    %v683 = vld [vmem:[#allocation5 + $0x1338] sm:$0xff]
    %v684 = vld [vmem:[#allocation5 + $0x1340] sm:$0xff]
    %v685 = vld [vmem:[#allocation5 + $0x1348] sm:$0xff]
    %v686 = vld [vmem:[#allocation5 + $0x1350] sm:$0xff]
    %v687 = vld [vmem:[#allocation5 + $0x1358] sm:$0xff]
    %v688 = vld [vmem:[#allocation5 + $0x1360] sm:$0xff]
    %v689 = vld [vmem:[#allocation5 + $0x1368] sm:$0xff]
    %v690 = vld [vmem:[#allocation5 + $0x1370] sm:$0xff]
    %v691 = vld [vmem:[#allocation5 + $0x1378] sm:$0xff]
    %v692 = vld [vmem:[#allocation5 + $0x1380] sm:$0xff]
    %v693 = vld [vmem:[#allocation5 + $0x1388] sm:$0xff]
    %v694 = vld [vmem:[#allocation5 + $0x1390] sm:$0xff]
    %v695 = vld [vmem:[#allocation5 + $0x1398] sm:$0xff]
    %v696 = vld [vmem:[#allocation5 + $0x13a0] sm:$0xff]
    %v697 = vld [vmem:[#allocation5 + $0x13a8] sm:$0xff]
    %v698 = vld [vmem:[#allocation5 + $0x13b0] sm:$0xff]
    %v699 = vld [vmem:[#allocation5 + $0x13b8] sm:$0xff]
    %v700 = vld [vmem:[#allocation5 + $0x13c0] sm:$0xff]
    %v701 = vld [vmem:[#allocation5 + $0x13c8] sm:$0xff]
    %v702 = vld [vmem:[#allocation5 + $0x13d0] sm:$0xff]
    %v703 = vld [vmem:[#allocation5 + $0x13d8] sm:$0xff]
    %v704 = vld [vmem:[#allocation5 + $0x13e0] sm:$0xff]
    %v705 = vld [vmem:[#allocation5 + $0x13e8] sm:$0xff]
    %v706 = vld [vmem:[#allocation5 + $0x13f0] sm:$0xff]
    %v707 = vld [vmem:[#allocation5 + $0x13f8] sm:$0xff]
    %v708 = vld [vmem:[#allocation5 + $0x1400] sm:$0xff]
    %v709 = vld [vmem:[#allocation5 + $0x1408] sm:$0xff]
    %v710 = vld [vmem:[#allocation5 + $0x1410] sm:$0xff]
    %v711 = vld [vmem:[#allocation5 + $0x1418] sm:$0xff]
    %v712 = vld [vmem:[#allocation5 + $0x1420] sm:$0xff]
    %v713 = vld [vmem:[#allocation5 + $0x1428] sm:$0xff]
    %v714 = vld [vmem:[#allocation5 + $0x1430] sm:$0xff]
    %v715 = vld [vmem:[#allocation5 + $0x1438] sm:$0xff]
    %v716 = vld [vmem:[#allocation5 + $0x1440] sm:$0xff]
    %v717 = vld [vmem:[#allocation5 + $0x1448] sm:$0xff]
    %v718 = vld [vmem:[#allocation5 + $0x1450] sm:$0xff]
    %v719 = vld [vmem:[#allocation5 + $0x1458] sm:$0xff]
    %v720 = vld [vmem:[#allocation5 + $0x1460] sm:$0xff]
    %v721 = vld [vmem:[#allocation5 + $0x1468] sm:$0xff]
    %v722 = vld [vmem:[#allocation5 + $0x1470] sm:$0xff]
    %v723 = vld [vmem:[#allocation5 + $0x1478] sm:$0xff]
    %v724 = vld [vmem:[#allocation5 + $0x1480] sm:$0xff]
    %v725 = vld [vmem:[#allocation5 + $0x1488] sm:$0xff]
    %v726 = vld [vmem:[#allocation5 + $0x1490] sm:$0xff]
    %v727 = vld [vmem:[#allocation5 + $0x1498] sm:$0xff]
    %v728 = vld [vmem:[#allocation5 + $0x14a0] sm:$0xff]
    %v729 = vld [vmem:[#allocation5 + $0x14a8] sm:$0xff]
    %v730 = vld [vmem:[#allocation5 + $0x14b0] sm:$0xff]
    %v731 = vld [vmem:[#allocation5 + $0x14b8] sm:$0xff]
    %v732 = vld [vmem:[#allocation5 + $0x14c0] sm:$0xff]
    %v733 = vld [vmem:[#allocation5 + $0x14c8] sm:$0xff]
    %v734 = vld [vmem:[#allocation5 + $0x14d0] sm:$0xff]
    %v735 = vld [vmem:[#allocation5 + $0x14d8] sm:$0xff]
    %v736 = vld [vmem:[#allocation5 + $0x14e0] sm:$0xff]
    %v737 = vld [vmem:[#allocation5 + $0x14e8] sm:$0xff]
    %v738 = vld [vmem:[#allocation5 + $0x14f0] sm:$0xff]
    %v739 = vld [vmem:[#allocation5 + $0x14f8] sm:$0xff]
    %v740 = vld [vmem:[#allocation5 + $0x1500] sm:$0xff]
    %v741 = vld [vmem:[#allocation5 + $0x1508] sm:$0xff]
    %v742 = vld [vmem:[#allocation5 + $0x1510] sm:$0xff]
    %v743 = vld [vmem:[#allocation5 + $0x1518] sm:$0xff]
    %v744 = vld [vmem:[#allocation5 + $0x1520] sm:$0xff]
    %v745 = vld [vmem:[#allocation5 + $0x1528] sm:$0xff]
    %v746 = vld [vmem:[#allocation5 + $0x1530] sm:$0xff]
    %v747 = vld [vmem:[#allocation5 + $0x1538] sm:$0xff]
    %v748 = vld [vmem:[#allocation5 + $0x1540] sm:$0xff]
    %v749 = vld [vmem:[#allocation5 + $0x1548] sm:$0xff]
    %v750 = vld [vmem:[#allocation5 + $0x1550] sm:$0xff]
    %v751 = vld [vmem:[#allocation5 + $0x1558] sm:$0xff]
    %v752 = vld [vmem:[#allocation5 + $0x1560] sm:$0xff]
    %v753 = vld [vmem:[#allocation5 + $0x1568] sm:$0xff]
    %v754 = vld [vmem:[#allocation5 + $0x1570] sm:$0xff]
    %v755 = vld [vmem:[#allocation5 + $0x1578] sm:$0xff]
    %v756 = vld [vmem:[#allocation5 + $0x1580] sm:$0xff]
    %v757 = vld [vmem:[#allocation5 + $0x1588] sm:$0xff]
    %v758 = vld [vmem:[#allocation5 + $0x1590] sm:$0xff]
    %v759 = vld [vmem:[#allocation5 + $0x1598] sm:$0xff]
    %v760 = vld [vmem:[#allocation5 + $0x15a0] sm:$0xff]
    %v761 = vld [vmem:[#allocation5 + $0x15a8] sm:$0xff]
    %v762 = vld [vmem:[#allocation5 + $0x15b0] sm:$0xff]
    %v763 = vld [vmem:[#allocation5 + $0x15b8] sm:$0xff]
    %v764 = vld [vmem:[#allocation5 + $0x15c0] sm:$0xff]
    %v765 = vld [vmem:[#allocation5 + $0x15c8] sm:$0xff]
    %v766 = vld [vmem:[#allocation5 + $0x15d0] sm:$0xff]
    %v767 = vld [vmem:[#allocation5 + $0x15d8] sm:$0xff]
    %v768 = vld [vmem:[#allocation5 + $0x15e0] sm:$0xff]
    %v769 = vld [vmem:[#allocation5 + $0x15e8] sm:$0xff]
    %v770 = vld [vmem:[#allocation5 + $0x15f0] sm:$0xff]
    %v771 = vld [vmem:[#allocation5 + $0x15f8] sm:$0xff]
    %v772 = vld [vmem:[#allocation5 + $0x1600] sm:$0xff]
    %v773 = vld [vmem:[#allocation5 + $0x1608] sm:$0xff]
    %v774 = vld [vmem:[#allocation5 + $0x1610] sm:$0xff]
    %v775 = vld [vmem:[#allocation5 + $0x1618] sm:$0xff]
    %v776 = vld [vmem:[#allocation5 + $0x1620] sm:$0xff]
    %v777 = vld [vmem:[#allocation5 + $0x1628] sm:$0xff]
    %v778 = vld [vmem:[#allocation5 + $0x1630] sm:$0xff]
    %v779 = vld [vmem:[#allocation5 + $0x1638] sm:$0xff]
    %v780 = vld [vmem:[#allocation5 + $0x1640] sm:$0xff]
    %v781 = vld [vmem:[#allocation5 + $0x1648] sm:$0xff]
    %v782 = vld [vmem:[#allocation5 + $0x1650] sm:$0xff]
    %v783 = vld [vmem:[#allocation5 + $0x1658] sm:$0xff]
    %v784 = vld [vmem:[#allocation5 + $0x1660] sm:$0xff]
    %v785 = vld [vmem:[#allocation5 + $0x1668] sm:$0xff]
    %v786 = vld [vmem:[#allocation5 + $0x1670] sm:$0xff]
    %v787 = vld [vmem:[#allocation5 + $0x1678] sm:$0xff]
    %v788 = vld [vmem:[#allocation5 + $0x1680] sm:$0xff]
    %v789 = vld [vmem:[#allocation5 + $0x1688] sm:$0xff]
    %v790 = vld [vmem:[#allocation5 + $0x1690] sm:$0xff]
    %v791 = vld [vmem:[#allocation5 + $0x1698] sm:$0xff]
    %v792 = vld [vmem:[#allocation5 + $0x16a0] sm:$0xff]
    %v793 = vld [vmem:[#allocation5 + $0x16a8] sm:$0xff]
    %v794 = vld [vmem:[#allocation5 + $0x16b0] sm:$0xff]
    %v795 = vld [vmem:[#allocation5 + $0x16b8] sm:$0xff]
    %v796 = vld [vmem:[#allocation5 + $0x16c0] sm:$0xff]
    %v797 = vld [vmem:[#allocation5 + $0x16c8] sm:$0xff]
    %v798 = vld [vmem:[#allocation5 + $0x16d0] sm:$0xff]
    %v799 = vld [vmem:[#allocation5 + $0x16d8] sm:$0xff]
    %v800 = vld [vmem:[#allocation5 + $0x16e0] sm:$0xff]
    %v801 = vld [vmem:[#allocation5 + $0x16e8] sm:$0xff]
    %v802 = vld [vmem:[#allocation5 + $0x16f0] sm:$0xff]
    %v803 = vld [vmem:[#allocation5 + $0x16f8] sm:$0xff]
    %v804 = vld [vmem:[#allocation5 + $0x1700] sm:$0xff]
    %v805 = vld [vmem:[#allocation5 + $0x1708] sm:$0xff]
    %v806 = vld [vmem:[#allocation5 + $0x1710] sm:$0xff]
    %v807 = vld [vmem:[#allocation5 + $0x1718] sm:$0xff]
    %v808 = vld [vmem:[#allocation5 + $0x1720] sm:$0xff]
    %v809 = vld [vmem:[#allocation5 + $0x1728] sm:$0xff]
    %v810 = vld [vmem:[#allocation5 + $0x1730] sm:$0xff]
    %v811 = vld [vmem:[#allocation5 + $0x1738] sm:$0xff]
    %v812 = vld [vmem:[#allocation5 + $0x1740] sm:$0xff]
    %v813 = vld [vmem:[#allocation5 + $0x1748] sm:$0xff]
    %v814 = vld [vmem:[#allocation5 + $0x1750] sm:$0xff]
    %v815 = vld [vmem:[#allocation5 + $0x1758] sm:$0xff]
    %v816 = vld [vmem:[#allocation5 + $0x1760] sm:$0xff]
    %v817 = vld [vmem:[#allocation5 + $0x1768] sm:$0xff]
    %v818 = vld [vmem:[#allocation5 + $0x1770] sm:$0xff]
    %v819 = vld [vmem:[#allocation5 + $0x1778] sm:$0xff]
    %v820 = vld [vmem:[#allocation5 + $0x1780] sm:$0xff]
    %v821 = vld [vmem:[#allocation5 + $0x1788] sm:$0xff]
    %v822 = vld [vmem:[#allocation5 + $0x1790] sm:$0xff]
    %v823 = vld [vmem:[#allocation5 + $0x1798] sm:$0xff]
    %v824 = vld [vmem:[#allocation5 + $0x17a0] sm:$0xff]
    %v825 = vld [vmem:[#allocation5 + $0x17a8] sm:$0xff]
    %v826 = vld [vmem:[#allocation5 + $0x17b0] sm:$0xff]
    %v827 = vld [vmem:[#allocation5 + $0x17b8] sm:$0xff]
    %v828 = vld [vmem:[#allocation5 + $0x17c0] sm:$0xff]
    %v829 = vld [vmem:[#allocation5 + $0x17c8] sm:$0xff]
    %v830 = vld [vmem:[#allocation5 + $0x17d0] sm:$0xff]
    %v831 = vld [vmem:[#allocation5 + $0x17d8] sm:$0xff]
    %v832 = vld [vmem:[#allocation5 + $0x17e0] sm:$0xff]
    %v833 = vld [vmem:[#allocation5 + $0x17e8] sm:$0xff]
    %v834 = vld [vmem:[#allocation5 + $0x17f0] sm:$0xff]
    %v835 = vld [vmem:[#allocation5 + $0x17f8] sm:$0xff]
    %v836 = vld [vmem:[#allocation5 + $0x1800] sm:$0xff]
    %v837 = vld [vmem:[#allocation5 + $0x1808] sm:$0xff]
    %v838 = vld [vmem:[#allocation5 + $0x1810] sm:$0xff]
    %v839 = vld [vmem:[#allocation5 + $0x1818] sm:$0xff]
    %v840 = vld [vmem:[#allocation5 + $0x1820] sm:$0xff]
    %v841 = vld [vmem:[#allocation5 + $0x1828] sm:$0xff]
    %v842 = vld [vmem:[#allocation5 + $0x1830] sm:$0xff]
    %v843 = vld [vmem:[#allocation5 + $0x1838] sm:$0xff]
    %v844 = vld [vmem:[#allocation5 + $0x1840] sm:$0xff]
    %v845 = vld [vmem:[#allocation5 + $0x1848] sm:$0xff]
    %v846 = vld [vmem:[#allocation5 + $0x1850] sm:$0xff]
    %v847 = vld [vmem:[#allocation5 + $0x1858] sm:$0xff]
    %v848 = vld [vmem:[#allocation5 + $0x1860] sm:$0xff]
    %v849 = vld [vmem:[#allocation5 + $0x1868] sm:$0xff]
    %v850 = vld [vmem:[#allocation5 + $0x1870] sm:$0xff]
    %v851 = vld [vmem:[#allocation5 + $0x1878] sm:$0xff]
    %v852 = vld [vmem:[#allocation5 + $0x1880] sm:$0xff]
    %v853 = vld [vmem:[#allocation5 + $0x1888] sm:$0xff]
    %v854 = vld [vmem:[#allocation5 + $0x1890] sm:$0xff]
    %v855 = vld [vmem:[#allocation5 + $0x1898] sm:$0xff]
    %v856 = vld [vmem:[#allocation5 + $0x18a0] sm:$0xff]
    %v857 = vld [vmem:[#allocation5 + $0x18a8] sm:$0xff]
    %v858 = vld [vmem:[#allocation5 + $0x18b0] sm:$0xff]
    %v859 = vld [vmem:[#allocation5 + $0x18b8] sm:$0xff]
    %v860 = vld [vmem:[#allocation5 + $0x18c0] sm:$0xff]
    %v861 = vld [vmem:[#allocation5 + $0x18c8] sm:$0xff]
    %v862 = vld [vmem:[#allocation5 + $0x18d0] sm:$0xff]
    %v863 = vld [vmem:[#allocation5 + $0x18d8] sm:$0xff]
    %v864 = vld [vmem:[#allocation5 + $0x18e0] sm:$0xff]
    %v865 = vld [vmem:[#allocation5 + $0x18e8] sm:$0xff]
    %v866 = vld [vmem:[#allocation5 + $0x18f0] sm:$0xff]
    %v867 = vld [vmem:[#allocation5 + $0x18f8] sm:$0xff]
    %v868 = vld [vmem:[#allocation5 + $0x1900] sm:$0xff]
    %v869 = vld [vmem:[#allocation5 + $0x1908] sm:$0xff]
    %v870 = vld [vmem:[#allocation5 + $0x1910] sm:$0xff]
    %v871 = vld [vmem:[#allocation5 + $0x1918] sm:$0xff]
    %v872 = vld [vmem:[#allocation5 + $0x1920] sm:$0xff]
    %v873 = vld [vmem:[#allocation5 + $0x1928] sm:$0xff]
    %v874 = vld [vmem:[#allocation5 + $0x1930] sm:$0xff]
    %v875 = vld [vmem:[#allocation5 + $0x1938] sm:$0xff]
    %v876 = vld [vmem:[#allocation5 + $0x1940] sm:$0xff]
    %v877 = vld [vmem:[#allocation5 + $0x1948] sm:$0xff]
    %v878 = vld [vmem:[#allocation5 + $0x1950] sm:$0xff]
    %v879 = vld [vmem:[#allocation5 + $0x1958] sm:$0xff]
    %v880 = vld [vmem:[#allocation5 + $0x1960] sm:$0xff]
    %v881 = vld [vmem:[#allocation5 + $0x1968] sm:$0xff]
    %v882 = vld [vmem:[#allocation5 + $0x1970] sm:$0xff]
    %v883 = vld [vmem:[#allocation5 + $0x1978] sm:$0xff]
    %v884 = vld [vmem:[#allocation5 + $0x1980] sm:$0xff]
    %v885 = vld [vmem:[#allocation5 + $0x1988] sm:$0xff]
    %v886 = vld [vmem:[#allocation5 + $0x1990] sm:$0xff]
    %v887 = vld [vmem:[#allocation5 + $0x1998] sm:$0xff]
    %v888 = vld [vmem:[#allocation5 + $0x19a0] sm:$0xff]
    %v889 = vld [vmem:[#allocation5 + $0x19a8] sm:$0xff]
    %v890 = vld [vmem:[#allocation5 + $0x19b0] sm:$0xff]
    %v891 = vld [vmem:[#allocation5 + $0x19b8] sm:$0xff]
    %v892 = vld [vmem:[#allocation5 + $0x19c0] sm:$0xff]
    %v893 = vld [vmem:[#allocation5 + $0x19c8] sm:$0xff]
    %v894 = vld [vmem:[#allocation5 + $0x19d0] sm:$0xff]
    %v895 = vld [vmem:[#allocation5 + $0x19d8] sm:$0xff]
    %v896 = vld [vmem:[#allocation5 + $0x19e0] sm:$0xff]
    %v897 = vld [vmem:[#allocation5 + $0x19e8] sm:$0xff]
    %v898 = vld [vmem:[#allocation5 + $0x19f0] sm:$0xff]
    %v899 = vld [vmem:[#allocation5 + $0x19f8] sm:$0xff]
    %v900 = vld [vmem:[#allocation5 + $0x1a00] sm:$0xff]
    %v901 = vld [vmem:[#allocation5 + $0x1a08] sm:$0xff]
    %v902 = vld [vmem:[#allocation5 + $0x1a10] sm:$0xff]
    %v903 = vld [vmem:[#allocation5 + $0x1a18] sm:$0xff]
    %v904 = vld [vmem:[#allocation5 + $0x1a20] sm:$0xff]
    %v905 = vld [vmem:[#allocation5 + $0x1a28] sm:$0xff]
    %v906 = vld [vmem:[#allocation5 + $0x1a30] sm:$0xff]
    %v907 = vld [vmem:[#allocation5 + $0x1a38] sm:$0xff]
    %v908 = vld [vmem:[#allocation5 + $0x1a40] sm:$0xff]
    %v909 = vld [vmem:[#allocation5 + $0x1a48] sm:$0xff]
    %v910 = vld [vmem:[#allocation5 + $0x1a50] sm:$0xff]
    %v911 = vld [vmem:[#allocation5 + $0x1a58] sm:$0xff]
    %v912 = vld [vmem:[#allocation5 + $0x1a60] sm:$0xff]
    %v913 = vld [vmem:[#allocation5 + $0x1a68] sm:$0xff]
    %v914 = vld [vmem:[#allocation5 + $0x1a70] sm:$0xff]
    %v915 = vld [vmem:[#allocation5 + $0x1a78] sm:$0xff]
    %v916 = vld [vmem:[#allocation5 + $0x1a80] sm:$0xff]
    %v917 = vld [vmem:[#allocation5 + $0x1a88] sm:$0xff]
    %v918 = vld [vmem:[#allocation5 + $0x1a90] sm:$0xff]
    %v919 = vld [vmem:[#allocation5 + $0x1a98] sm:$0xff]
    %v920 = vld [vmem:[#allocation5 + $0x1aa0] sm:$0xff]
    %v921 = vld [vmem:[#allocation5 + $0x1aa8] sm:$0xff]
    %v922 = vld [vmem:[#allocation5 + $0x1ab0] sm:$0xff]
    %v923 = vld [vmem:[#allocation5 + $0x1ab8] sm:$0xff]
    %v924 = vld [vmem:[#allocation5 + $0x1ac0] sm:$0xff]
    %v925 = vld [vmem:[#allocation5 + $0x1ac8] sm:$0xff]
    %v926 = vld [vmem:[#allocation5 + $0x1ad0] sm:$0xff]
    %v927 = vld [vmem:[#allocation5 + $0x1ad8] sm:$0xff]
    %v928 = vld [vmem:[#allocation5 + $0x1ae0] sm:$0xff]
    %v929 = vld [vmem:[#allocation5 + $0x1ae8] sm:$0xff]
    %v930 = vld [vmem:[#allocation5 + $0x1af0] sm:$0xff]
    %v931 = vld [vmem:[#allocation5 + $0x1af8] sm:$0xff]
    %v932 = vld [vmem:[#allocation5 + $0x1b00] sm:$0xff]
    %v933 = vld [vmem:[#allocation5 + $0x1b08] sm:$0xff]
    %v934 = vld [vmem:[#allocation5 + $0x1b10] sm:$0xff]
    %v935 = vld [vmem:[#allocation5 + $0x1b18] sm:$0xff]
    %v936 = vld [vmem:[#allocation5 + $0x1b20] sm:$0xff]
    %v937 = vld [vmem:[#allocation5 + $0x1b28] sm:$0xff]
    %v938 = vld [vmem:[#allocation5 + $0x1b30] sm:$0xff]
    %v939 = vld [vmem:[#allocation5 + $0x1b38] sm:$0xff]
    %v940 = vld [vmem:[#allocation5 + $0x1b40] sm:$0xff]
    %v941 = vld [vmem:[#allocation5 + $0x1b48] sm:$0xff]
    %v942 = vld [vmem:[#allocation5 + $0x1b50] sm:$0xff]
    %v943 = vld [vmem:[#allocation5 + $0x1b58] sm:$0xff]
    %v944 = vld [vmem:[#allocation5 + $0x1b60] sm:$0xff]
    %v945 = vld [vmem:[#allocation5 + $0x1b68] sm:$0xff]
    %v946 = vld [vmem:[#allocation5 + $0x1b70] sm:$0xff]
    %v947 = vld [vmem:[#allocation5 + $0x1b78] sm:$0xff]
    %v948 = vld [vmem:[#allocation5 + $0x1b80] sm:$0xff]
    %v949 = vld [vmem:[#allocation5 + $0x1b88] sm:$0xff]
    %v950 = vld [vmem:[#allocation5 + $0x1b90] sm:$0xff]
    %v951 = vld [vmem:[#allocation5 + $0x1b98] sm:$0xff]
    %v952 = vld [vmem:[#allocation5 + $0x1ba0] sm:$0xff]
    %v953 = vld [vmem:[#allocation5 + $0x1ba8] sm:$0xff]
    %v954 = vld [vmem:[#allocation5 + $0x1bb0] sm:$0xff]
    %v955 = vld [vmem:[#allocation5 + $0x1bb8] sm:$0xff]
    %v956 = vld [vmem:[#allocation5 + $0x1bc0] sm:$0xff]
    %v957 = vld [vmem:[#allocation5 + $0x1bc8] sm:$0xff]
    %v958 = vld [vmem:[#allocation5 + $0x1bd0] sm:$0xff]
    %v959 = vld [vmem:[#allocation5 + $0x1bd8] sm:$0xff]
    %v960 = vld [vmem:[#allocation5 + $0x1be0] sm:$0xff]
    %v961 = vld [vmem:[#allocation5 + $0x1be8] sm:$0xff]
    %v962 = vld [vmem:[#allocation5 + $0x1bf0] sm:$0xff]
    %v963 = vld [vmem:[#allocation5 + $0x1bf8] sm:$0xff]
    %v964 = vld [vmem:[#allocation5 + $0x1c00] sm:$0xff]
    %v965 = vld [vmem:[#allocation5 + $0x1c08] sm:$0xff]
    %v966 = vld [vmem:[#allocation5 + $0x1c10] sm:$0xff]
    %v967 = vld [vmem:[#allocation5 + $0x1c18] sm:$0xff]
    %v968 = vld [vmem:[#allocation5 + $0x1c20] sm:$0xff]
    %v969 = vld [vmem:[#allocation5 + $0x1c28] sm:$0xff]
    %v970 = vld [vmem:[#allocation5 + $0x1c30] sm:$0xff]
    %v971 = vld [vmem:[#allocation5 + $0x1c38] sm:$0xff]
    %v972 = vld [vmem:[#allocation5 + $0x1c40] sm:$0xff]
    %v973 = vld [vmem:[#allocation5 + $0x1c48] sm:$0xff]
    %v974 = vld [vmem:[#allocation5 + $0x1c50] sm:$0xff]
    %v975 = vld [vmem:[#allocation5 + $0x1c58] sm:$0xff]
    %v976 = vld [vmem:[#allocation5 + $0x1c60] sm:$0xff]
    %v977 = vld [vmem:[#allocation5 + $0x1c68] sm:$0xff]
    %v978 = vld [vmem:[#allocation5 + $0x1c70] sm:$0xff]
    %v979 = vld [vmem:[#allocation5 + $0x1c78] sm:$0xff]
    %v980 = vld [vmem:[#allocation5 + $0x1c80] sm:$0xff]
    %v981 = vld [vmem:[#allocation5 + $0x1c88] sm:$0xff]
    %v982 = vld [vmem:[#allocation5 + $0x1c90] sm:$0xff]
    %v983 = vld [vmem:[#allocation5 + $0x1c98] sm:$0xff]
    %v984 = vld [vmem:[#allocation5 + $0x1ca0] sm:$0xff]
    %v985 = vld [vmem:[#allocation5 + $0x1ca8] sm:$0xff]
    %v986 = vld [vmem:[#allocation5 + $0x1cb0] sm:$0xff]
    %v987 = vld [vmem:[#allocation5 + $0x1cb8] sm:$0xff]
    %v988 = vld [vmem:[#allocation5 + $0x1cc0] sm:$0xff]
    %v989 = vld [vmem:[#allocation5 + $0x1cc8] sm:$0xff]
    %v990 = vld [vmem:[#allocation5 + $0x1cd0] sm:$0xff]
    %v991 = vld [vmem:[#allocation5 + $0x1cd8] sm:$0xff]
    %v992 = vld [vmem:[#allocation5 + $0x1ce0] sm:$0xff]
    %v993 = vld [vmem:[#allocation5 + $0x1ce8] sm:$0xff]
    %v994 = vld [vmem:[#allocation5 + $0x1cf0] sm:$0xff]
    %v995 = vld [vmem:[#allocation5 + $0x1cf8] sm:$0xff]
    %v996 = vld [vmem:[#allocation5 + $0x1d00] sm:$0xff]
    %v997 = vld [vmem:[#allocation5 + $0x1d08] sm:$0xff]
    %v998 = vld [vmem:[#allocation5 + $0x1d10] sm:$0xff]
    %v999 = vld [vmem:[#allocation5 + $0x1d18] sm:$0xff]
    %v1000 = vld [vmem:[#allocation5 + $0x1d20] sm:$0xff]
    %v1001 = vld [vmem:[#allocation5 + $0x1d28] sm:$0xff]
    %v1002 = vld [vmem:[#allocation5 + $0x1d30] sm:$0xff]
    %v1003 = vld [vmem:[#allocation5 + $0x1d38] sm:$0xff]
    %v1004 = vld [vmem:[#allocation5 + $0x1d40] sm:$0xff]
    %v1005 = vld [vmem:[#allocation5 + $0x1d48] sm:$0xff]
    %v1006 = vld [vmem:[#allocation5 + $0x1d50] sm:$0xff]
    %v1007 = vld [vmem:[#allocation5 + $0x1d58] sm:$0xff]
    %v1008 = vld [vmem:[#allocation5 + $0x1d60] sm:$0xff]
    %v1009 = vld [vmem:[#allocation5 + $0x1d68] sm:$0xff]
    %v1010 = vld [vmem:[#allocation5 + $0x1d70] sm:$0xff]
    %v1011 = vld [vmem:[#allocation5 + $0x1d78] sm:$0xff]
    %v1012 = vld [vmem:[#allocation5 + $0x1d80] sm:$0xff]
    %v1013 = vld [vmem:[#allocation5 + $0x1d88] sm:$0xff]
    %v1014 = vld [vmem:[#allocation5 + $0x1d90] sm:$0xff]
    %v1015 = vld [vmem:[#allocation5 + $0x1d98] sm:$0xff]
    %v1016 = vld [vmem:[#allocation5 + $0x1da0] sm:$0xff]
    %v1017 = vld [vmem:[#allocation5 + $0x1da8] sm:$0xff]
    %v1018 = vld [vmem:[#allocation5 + $0x1db0] sm:$0xff]
    %v1019 = vld [vmem:[#allocation5 + $0x1db8] sm:$0xff]
    %v1020 = vld [vmem:[#allocation5 + $0x1dc0] sm:$0xff]
    %v1021 = vld [vmem:[#allocation5 + $0x1dc8] sm:$0xff]
    %v1022 = vld [vmem:[#allocation5 + $0x1dd0] sm:$0xff]
    %v1023 = vld [vmem:[#allocation5 + $0x1dd8] sm:$0xff]
    %v1024 = vld [vmem:[#allocation5 + $0x1de0] sm:$0xff]
    %v1025 = vld [vmem:[#allocation5 + $0x1de8] sm:$0xff]
    %v1026 = vld [vmem:[#allocation5 + $0x1df0] sm:$0xff]
    %v1027 = vld [vmem:[#allocation5 + $0x1df8] sm:$0xff]
    %v1028 = vld [vmem:[#allocation5 + $0x1e00] sm:$0xff]
    %v1029 = vld [vmem:[#allocation5 + $0x1e08] sm:$0xff]
    %v1030 = vld [vmem:[#allocation5 + $0x1e10] sm:$0xff]
    %v1031 = vld [vmem:[#allocation5 + $0x1e18] sm:$0xff]
    %v1032 = vld [vmem:[#allocation5 + $0x1e20] sm:$0xff]
    %v1033 = vld [vmem:[#allocation5 + $0x1e28] sm:$0xff]
    %v1034 = vld [vmem:[#allocation5 + $0x1e30] sm:$0xff]
    %v1035 = vld [vmem:[#allocation5 + $0x1e38] sm:$0xff]
    %v1036 = vld [vmem:[#allocation5 + $0x1e40] sm:$0xff]
    %v1037 = vld [vmem:[#allocation5 + $0x1e48] sm:$0xff]
    %v1038 = vld [vmem:[#allocation5 + $0x1e50] sm:$0xff]
    %v1039 = vld [vmem:[#allocation5 + $0x1e58] sm:$0xff]
    %v1040 = vld [vmem:[#allocation5 + $0x1e60] sm:$0xff]
    %v1041 = vld [vmem:[#allocation5 + $0x1e68] sm:$0xff]
    %v1042 = vld [vmem:[#allocation5 + $0x1e70] sm:$0xff]
    %v1043 = vld [vmem:[#allocation5 + $0x1e78] sm:$0xff]
    %v1044 = vld [vmem:[#allocation5 + $0x1e80] sm:$0xff]
    %v1045 = vld [vmem:[#allocation5 + $0x1e88] sm:$0xff]
    %v1046 = vld [vmem:[#allocation5 + $0x1e90] sm:$0xff]
    %v1047 = vld [vmem:[#allocation5 + $0x1e98] sm:$0xff]
    %v1048 = vld [vmem:[#allocation5 + $0x1ea0] sm:$0xff]
    %v1049 = vld [vmem:[#allocation5 + $0x1ea8] sm:$0xff]
    %v1050 = vld [vmem:[#allocation5 + $0x1eb0] sm:$0xff]
    %v1051 = vld [vmem:[#allocation5 + $0x1eb8] sm:$0xff]
    %v1052 = vld [vmem:[#allocation5 + $0x1ec0] sm:$0xff]
    %v1053 = vld [vmem:[#allocation5 + $0x1ec8] sm:$0xff]
    %v1054 = vld [vmem:[#allocation5 + $0x1ed0] sm:$0xff]
    %v1055 = vld [vmem:[#allocation5 + $0x1ed8] sm:$0xff]
    %v1056 = vld [vmem:[#allocation5 + $0x1ee0] sm:$0xff]
    %v1057 = vld [vmem:[#allocation5 + $0x1ee8] sm:$0xff]
    %v1058 = vld [vmem:[#allocation5 + $0x1ef0] sm:$0xff]
    %v1059 = vld [vmem:[#allocation5 + $0x1ef8] sm:$0xff]
    %v1060 = vld [vmem:[#allocation5 + $0x1f00] sm:$0xff]
    %v1061 = vld [vmem:[#allocation5 + $0x1f08] sm:$0xff]
    %v1062 = vld [vmem:[#allocation5 + $0x1f10] sm:$0xff]
    %v1063 = vld [vmem:[#allocation5 + $0x1f18] sm:$0xff]
    %v1064 = vld [vmem:[#allocation5 + $0x1f20] sm:$0xff]
    %v1065 = vld [vmem:[#allocation5 + $0x1f28] sm:$0xff]
    %v1066 = vld [vmem:[#allocation5 + $0x1f30] sm:$0xff]
    %v1067 = vld [vmem:[#allocation5 + $0x1f38] sm:$0xff]
    %v1068 = vld [vmem:[#allocation5 + $0x1f40] sm:$0xff]
    %v1069 = vld [vmem:[#allocation5 + $0x1f48] sm:$0xff]
    %v1070 = vld [vmem:[#allocation5 + $0x1f50] sm:$0xff]
    %v1071 = vld [vmem:[#allocation5 + $0x1f58] sm:$0xff]
    %v1072 = vld [vmem:[#allocation5 + $0x1f60] sm:$0xff]
    %v1073 = vld [vmem:[#allocation5 + $0x1f68] sm:$0xff]
    %v1074 = vld [vmem:[#allocation5 + $0x1f70] sm:$0xff]
    %v1075 = vld [vmem:[#allocation5 + $0x1f78] sm:$0xff]
    %v1076 = vld [vmem:[#allocation5 + $0x1f80] sm:$0xff]
    %v1077 = vld [vmem:[#allocation5 + $0x1f88] sm:$0xff]
    %v1078 = vld [vmem:[#allocation5 + $0x1f90] sm:$0xff]
    %v1079 = vld [vmem:[#allocation5 + $0x1f98] sm:$0xff]
    %v1080 = vld [vmem:[#allocation5 + $0x1fa0] sm:$0xff]
    %v1081 = vld [vmem:[#allocation5 + $0x1fa8] sm:$0xff]
    %v1082 = vld [vmem:[#allocation5 + $0x1fb0] sm:$0xff]
    %v1083 = vld [vmem:[#allocation5 + $0x1fb8] sm:$0xff]
    %v1084 = vld [vmem:[#allocation5 + $0x1fc0] sm:$0xff]
    %v1085 = vld [vmem:[#allocation5 + $0x1fc8] sm:$0xff]
    %v1086 = vld [vmem:[#allocation5 + $0x1fd0] sm:$0xff]
    %v1087 = vld [vmem:[#allocation5 + $0x1fd8] sm:$0xff]
    %v1088 = vld [vmem:[#allocation5 + $0x1fe0] sm:$0xff]
    %v1089 = vld [vmem:[#allocation5 + $0x1fe8] sm:$0xff]
    %v1090 = vld [vmem:[#allocation5 + $0x1ff0] sm:$0xff]
    %v1091 = vld [vmem:[#allocation5 + $0x1ff8] sm:$0xff]
    %1092 = vmatpush.msra.mxu0 %v188
    %1093 = vmatpush.msra.mxu0 %v180
    %1094 = vmatpush.msra.mxu0 %v172
    %1095 = vmatpush.msra.mxu0 %v164
    %1096 = vmatpush.msra.mxu0 %v156
    %1097 = vmatpush.msra.mxu0 %v148
    %1098 = vmatpush.msra.mxu0 %v140
    %1099 = vmatpush.msra.mxu0 %v132
    %1100 = vmatpush.msra.mxu0 %v124
    %1101 = vmatpush.msra.mxu0 %v116
    %1102 = vmatpush.msra.mxu0 %v108
    %1103 = vmatpush.msra.mxu0 %v100
    %1104 = vmatpush.msra.mxu0 %v92
    %1105 = vmatpush.msra.mxu0 %v84
    %1106 = vmatpush.msra.mxu0 %v76
    %1107 = vmatpush.msra.mxu0 %v68
    %1108 = vmatmul.f32.gmra.mxu0 %v60
    %v1109 = vpop.f32.mrf.mxu0
    %v1110 = vadd.f32 0.0, %v1109
    %1111 = vdwg.mxu0
    %1112 = vmatpush.msra.mxu0 %v316
    %1113 = vmatpush.msra.mxu0 %v308
    %1114 = vmatpush.msra.mxu0 %v300
    %1115 = vmatpush.msra.mxu0 %v292
    %1116 = vmatpush.msra.mxu0 %v284
    %1117 = vmatpush.msra.mxu0 %v276
    %1118 = vmatpush.msra.mxu0 %v268
    %1119 = vmatpush.msra.mxu0 %v260
    %1120 = vmatpush.msra.mxu0 %v252
    %1121 = vmatpush.msra.mxu0 %v244
    %1122 = vmatpush.msra.mxu0 %v236
    %1123 = vmatpush.msra.mxu0 %v228
    %1124 = vmatpush.msra.mxu0 %v220
    %1125 = vmatpush.msra.mxu0 %v212
    %1126 = vmatpush.msra.mxu0 %v204
    %1127 = vmatpush.msra.mxu0 %v196
    %1128 = vmatmul.f32.gmra.mxu0 %v61
    %v1129 = vpop.f32.mrf.mxu0
    %v1130 = vadd.f32 %v1110, %v1129
    %1131 = vdwg.mxu0
    %1132 = vmatpush.msra.mxu0 %v444
    %1133 = vmatpush.msra.mxu0 %v436
    %1134 = vmatpush.msra.mxu0 %v428
    %1135 = vmatpush.msra.mxu0 %v420
    %1136 = vmatpush.msra.mxu0 %v412
    %1137 = vmatpush.msra.mxu0 %v404
    %1138 = vmatpush.msra.mxu0 %v396
    %1139 = vmatpush.msra.mxu0 %v388
    %1140 = vmatpush.msra.mxu0 %v380
    %1141 = vmatpush.msra.mxu0 %v372
    %1142 = vmatpush.msra.mxu0 %v364
    %1143 = vmatpush.msra.mxu0 %v356
    %1144 = vmatpush.msra.mxu0 %v348
    %1145 = vmatpush.msra.mxu0 %v340
    %1146 = vmatpush.msra.mxu0 %v332
    %1147 = vmatpush.msra.mxu0 %v324
    %1148 = vmatmul.f32.gmra.mxu0 %v62
    %v1149 = vpop.f32.mrf.mxu0
    %v1150 = vadd.f32 %v1130, %v1149
    %1151 = vdwg.mxu0
    %1152 = vmatpush.msra.mxu0 %v572
    %1153 = vmatpush.msra.mxu0 %v564
    %1154 = vmatpush.msra.mxu0 %v556
    %1155 = vmatpush.msra.mxu0 %v548
    %1156 = vmatpush.msra.mxu0 %v540
    %1157 = vmatpush.msra.mxu0 %v532
    %1158 = vmatpush.msra.mxu0 %v524
    %1159 = vmatpush.msra.mxu0 %v516
    %1160 = vmatpush.msra.mxu0 %v508
    %1161 = vmatpush.msra.mxu0 %v500
    %1162 = vmatpush.msra.mxu0 %v492
    %1163 = vmatpush.msra.mxu0 %v484
    %1164 = vmatpush.msra.mxu0 %v476
    %1165 = vmatpush.msra.mxu0 %v468
    %1166 = vmatpush.msra.mxu0 %v460
    %1167 = vmatpush.msra.mxu0 %v452
    %1168 = vmatmul.f32.gmra.mxu0 %v63
    %v1169 = vpop.f32.mrf.mxu0
    %v1170 = vadd.f32 %v1150, %v1169
    %1171 = vdwg.mxu0
    %1172 = vmatpush.msra.mxu0 %v700
    %1173 = vmatpush.msra.mxu0 %v692
    %1174 = vmatpush.msra.mxu0 %v684
    %1175 = vmatpush.msra.mxu0 %v676
    %1176 = vmatpush.msra.mxu0 %v668
    %1177 = vmatpush.msra.mxu0 %v660
    %1178 = vmatpush.msra.mxu0 %v652
    %1179 = vmatpush.msra.mxu0 %v644
    %1180 = vmatpush.msra.mxu0 %v636
    %1181 = vmatpush.msra.mxu0 %v628
    %1182 = vmatpush.msra.mxu0 %v620
    %1183 = vmatpush.msra.mxu0 %v612
    %1184 = vmatpush.msra.mxu0 %v604
    %1185 = vmatpush.msra.mxu0 %v596
    %1186 = vmatpush.msra.mxu0 %v588
    %1187 = vmatpush.msra.mxu0 %v580
    %1188 = vmatmul.f32.gmra.mxu0 %v64
    %v1189 = vpop.f32.mrf.mxu0
    %v1190 = vadd.f32 %v1170, %v1189
    %1191 = vdwg.mxu0
    %1192 = vmatpush.msra.mxu0 %v828
    %1193 = vmatpush.msra.mxu0 %v820
    %1194 = vmatpush.msra.mxu0 %v812
    %1195 = vmatpush.msra.mxu0 %v804
    %1196 = vmatpush.msra.mxu0 %v796
    %1197 = vmatpush.msra.mxu0 %v788
    %1198 = vmatpush.msra.mxu0 %v780
    %1199 = vmatpush.msra.mxu0 %v772
    %1200 = vmatpush.msra.mxu0 %v764
    %1201 = vmatpush.msra.mxu0 %v756
    %1202 = vmatpush.msra.mxu0 %v748
    %1203 = vmatpush.msra.mxu0 %v740
    %1204 = vmatpush.msra.mxu0 %v732
    %1205 = vmatpush.msra.mxu0 %v724
    %1206 = vmatpush.msra.mxu0 %v716
    %1207 = vmatpush.msra.mxu0 %v708
    %1208 = vmatmul.f32.gmra.mxu0 %v65
    %v1209 = vpop.f32.mrf.mxu0
    %v1210 = vadd.f32 %v1190, %v1209
    %1211 = vdwg.mxu0
    %1212 = vmatpush.msra.mxu0 %v956
    %1213 = vmatpush.msra.mxu0 %v948
    %1214 = vmatpush.msra.mxu0 %v940
    %1215 = vmatpush.msra.mxu0 %v932
    %1216 = vmatpush.msra.mxu0 %v924
    %1217 = vmatpush.msra.mxu0 %v916
    %1218 = vmatpush.msra.mxu0 %v908
    %1219 = vmatpush.msra.mxu0 %v900
    %1220 = vmatpush.msra.mxu0 %v892
    %1221 = vmatpush.msra.mxu0 %v884
    %1222 = vmatpush.msra.mxu0 %v876
    %1223 = vmatpush.msra.mxu0 %v868
    %1224 = vmatpush.msra.mxu0 %v860
    %1225 = vmatpush.msra.mxu0 %v852
    %1226 = vmatpush.msra.mxu0 %v844
    %1227 = vmatpush.msra.mxu0 %v836
    %1228 = vmatmul.f32.gmra.mxu0 %v66
    %v1229 = vpop.f32.mrf.mxu0
    %v1230 = vadd.f32 %v1210, %v1229
    %1231 = vdwg.mxu0
    %1232 = vmatpush.msra.mxu0 %v1084
    %1233 = vmatpush.msra.mxu0 %v1076
    %1234 = vmatpush.msra.mxu0 %v1068
    %1235 = vmatpush.msra.mxu0 %v1060
    %1236 = vmatpush.msra.mxu0 %v1052
    %1237 = vmatpush.msra.mxu0 %v1044
    %1238 = vmatpush.msra.mxu0 %v1036
    %1239 = vmatpush.msra.mxu0 %v1028
    %1240 = vmatpush.msra.mxu0 %v1020
    %1241 = vmatpush.msra.mxu0 %v1012
    %1242 = vmatpush.msra.mxu0 %v1004
    %1243 = vmatpush.msra.mxu0 %v996
    %1244 = vmatpush.msra.mxu0 %v988
    %1245 = vmatpush.msra.mxu0 %v980
    %1246 = vmatpush.msra.mxu0 %v972
    %1247 = vmatpush.msra.mxu0 %v964
    %1248 = vmatmul.f32.gmra.mxu0 %v67
    %v1249 = vpop.f32.mrf.mxu0
    %v1250 = vadd.f32 %v1230, %v1249
    %1251 = vdwg.mxu0
    %1252 = vmatpush.msra.mxu0 %v189
    %1253 = vmatpush.msra.mxu0 %v181
    %1254 = vmatpush.msra.mxu0 %v173
    %1255 = vmatpush.msra.mxu0 %v165
    %1256 = vmatpush.msra.mxu0 %v157
    %1257 = vmatpush.msra.mxu0 %v149
    %1258 = vmatpush.msra.mxu0 %v141
    %1259 = vmatpush.msra.mxu0 %v133
    %1260 = vmatpush.msra.mxu0 %v125
    %1261 = vmatpush.msra.mxu0 %v117
    %1262 = vmatpush.msra.mxu0 %v109
    %1263 = vmatpush.msra.mxu0 %v101
    %1264 = vmatpush.msra.mxu0 %v93
    %1265 = vmatpush.msra.mxu0 %v85
    %1266 = vmatpush.msra.mxu0 %v77
    %1267 = vmatpush.msra.mxu0 %v69
    %1268 = vmatmul.f32.gmra.mxu0 %v60
    %v1269 = vpop.f32.mrf.mxu0
    %v1270 = vadd.f32 0.0, %v1269
    %1271 = vdwg.mxu0
    %1272 = vmatpush.msra.mxu0 %v317
    %1273 = vmatpush.msra.mxu0 %v309
    %1274 = vmatpush.msra.mxu0 %v301
    %1275 = vmatpush.msra.mxu0 %v293
    %1276 = vmatpush.msra.mxu0 %v285
    %1277 = vmatpush.msra.mxu0 %v277
    %1278 = vmatpush.msra.mxu0 %v269
    %1279 = vmatpush.msra.mxu0 %v261
    %1280 = vmatpush.msra.mxu0 %v253
    %1281 = vmatpush.msra.mxu0 %v245
    %1282 = vmatpush.msra.mxu0 %v237
    %1283 = vmatpush.msra.mxu0 %v229
    %1284 = vmatpush.msra.mxu0 %v221
    %1285 = vmatpush.msra.mxu0 %v213
    %1286 = vmatpush.msra.mxu0 %v205
    %1287 = vmatpush.msra.mxu0 %v197
    %1288 = vmatmul.f32.gmra.mxu0 %v61
    %v1289 = vpop.f32.mrf.mxu0
    %v1290 = vadd.f32 %v1270, %v1289
    %1291 = vdwg.mxu0
    %1292 = vmatpush.msra.mxu0 %v445
    %1293 = vmatpush.msra.mxu0 %v437
    %1294 = vmatpush.msra.mxu0 %v429
    %1295 = vmatpush.msra.mxu0 %v421
    %1296 = vmatpush.msra.mxu0 %v413
    %1297 = vmatpush.msra.mxu0 %v405
    %1298 = vmatpush.msra.mxu0 %v397
    %1299 = vmatpush.msra.mxu0 %v389
    %1300 = vmatpush.msra.mxu0 %v381
    %1301 = vmatpush.msra.mxu0 %v373
    %1302 = vmatpush.msra.mxu0 %v365
    %1303 = vmatpush.msra.mxu0 %v357
    %1304 = vmatpush.msra.mxu0 %v349
    %1305 = vmatpush.msra.mxu0 %v341
    %1306 = vmatpush.msra.mxu0 %v333
    %1307 = vmatpush.msra.mxu0 %v325
    %1308 = vmatmul.f32.gmra.mxu0 %v62
    %v1309 = vpop.f32.mrf.mxu0
    %v1310 = vadd.f32 %v1290, %v1309
    %1311 = vdwg.mxu0
    %1312 = vmatpush.msra.mxu0 %v573
    %1313 = vmatpush.msra.mxu0 %v565
    %1314 = vmatpush.msra.mxu0 %v557
    %1315 = vmatpush.msra.mxu0 %v549
    %1316 = vmatpush.msra.mxu0 %v541
    %1317 = vmatpush.msra.mxu0 %v533
    %1318 = vmatpush.msra.mxu0 %v525
    %1319 = vmatpush.msra.mxu0 %v517
    %1320 = vmatpush.msra.mxu0 %v509
    %1321 = vmatpush.msra.mxu0 %v501
    %1322 = vmatpush.msra.mxu0 %v493
    %1323 = vmatpush.msra.mxu0 %v485
    %1324 = vmatpush.msra.mxu0 %v477
    %1325 = vmatpush.msra.mxu0 %v469
    %1326 = vmatpush.msra.mxu0 %v461
    %1327 = vmatpush.msra.mxu0 %v453
    %1328 = vmatmul.f32.gmra.mxu0 %v63
    %v1329 = vpop.f32.mrf.mxu0
    %v1330 = vadd.f32 %v1310, %v1329
    %1331 = vdwg.mxu0
    %1332 = vmatpush.msra.mxu0 %v701
    %1333 = vmatpush.msra.mxu0 %v693
    %1334 = vmatpush.msra.mxu0 %v685
    %1335 = vmatpush.msra.mxu0 %v677
    %1336 = vmatpush.msra.mxu0 %v669
    %1337 = vmatpush.msra.mxu0 %v661
    %1338 = vmatpush.msra.mxu0 %v653
    %1339 = vmatpush.msra.mxu0 %v645
    %1340 = vmatpush.msra.mxu0 %v637
    %1341 = vmatpush.msra.mxu0 %v629
    %1342 = vmatpush.msra.mxu0 %v621
    %1343 = vmatpush.msra.mxu0 %v613
    %1344 = vmatpush.msra.mxu0 %v605
    %1345 = vmatpush.msra.mxu0 %v597
    %1346 = vmatpush.msra.mxu0 %v589
    %1347 = vmatpush.msra.mxu0 %v581
    %1348 = vmatmul.f32.gmra.mxu0 %v64
    %v1349 = vpop.f32.mrf.mxu0
    %v1350 = vadd.f32 %v1330, %v1349
    %1351 = vdwg.mxu0
    %1352 = vmatpush.msra.mxu0 %v829
    %1353 = vmatpush.msra.mxu0 %v821
    %1354 = vmatpush.msra.mxu0 %v813
    %1355 = vmatpush.msra.mxu0 %v805
    %1356 = vmatpush.msra.mxu0 %v797
    %1357 = vmatpush.msra.mxu0 %v789
    %1358 = vmatpush.msra.mxu0 %v781
    %1359 = vmatpush.msra.mxu0 %v773
    %1360 = vmatpush.msra.mxu0 %v765
    %1361 = vmatpush.msra.mxu0 %v757
    %1362 = vmatpush.msra.mxu0 %v749
    %1363 = vmatpush.msra.mxu0 %v741
    %1364 = vmatpush.msra.mxu0 %v733
    %1365 = vmatpush.msra.mxu0 %v725
    %1366 = vmatpush.msra.mxu0 %v717
    %1367 = vmatpush.msra.mxu0 %v709
    %1368 = vmatmul.f32.gmra.mxu0 %v65
    %v1369 = vpop.f32.mrf.mxu0
    %v1370 = vadd.f32 %v1350, %v1369
    %1371 = vdwg.mxu0
    %1372 = vmatpush.msra.mxu0 %v957
    %1373 = vmatpush.msra.mxu0 %v949
    %1374 = vmatpush.msra.mxu0 %v941
    %1375 = vmatpush.msra.mxu0 %v933
    %1376 = vmatpush.msra.mxu0 %v925
    %1377 = vmatpush.msra.mxu0 %v917
    %1378 = vmatpush.msra.mxu0 %v909
    %1379 = vmatpush.msra.mxu0 %v901
    %1380 = vmatpush.msra.mxu0 %v893
    %1381 = vmatpush.msra.mxu0 %v885
    %1382 = vmatpush.msra.mxu0 %v877
    %1383 = vmatpush.msra.mxu0 %v869
    %1384 = vmatpush.msra.mxu0 %v861
    %1385 = vmatpush.msra.mxu0 %v853
    %1386 = vmatpush.msra.mxu0 %v845
    %1387 = vmatpush.msra.mxu0 %v837
    %1388 = vmatmul.f32.gmra.mxu0 %v66
    %v1389 = vpop.f32.mrf.mxu0
    %v1390 = vadd.f32 %v1370, %v1389
    %1391 = vdwg.mxu0
    %1392 = vmatpush.msra.mxu0 %v1085
    %1393 = vmatpush.msra.mxu0 %v1077
    %1394 = vmatpush.msra.mxu0 %v1069
    %1395 = vmatpush.msra.mxu0 %v1061
    %1396 = vmatpush.msra.mxu0 %v1053
    %1397 = vmatpush.msra.mxu0 %v1045
    %1398 = vmatpush.msra.mxu0 %v1037
    %1399 = vmatpush.msra.mxu0 %v1029
    %1400 = vmatpush.msra.mxu0 %v1021
    %1401 = vmatpush.msra.mxu0 %v1013
    %1402 = vmatpush.msra.mxu0 %v1005
    %1403 = vmatpush.msra.mxu0 %v997
    %1404 = vmatpush.msra.mxu0 %v989
    %1405 = vmatpush.msra.mxu0 %v981
    %1406 = vmatpush.msra.mxu0 %v973
    %1407 = vmatpush.msra.mxu0 %v965
    %1408 = vmatmul.f32.gmra.mxu0 %v67
    %v1409 = vpop.f32.mrf.mxu0
    %v1410 = vadd.f32 %v1390, %v1409
    %1411 = vdwg.mxu0
    %1412 = vmatpush.msra.mxu0 %v190
    %1413 = vmatpush.msra.mxu0 %v182
    %1414 = vmatpush.msra.mxu0 %v174
    %1415 = vmatpush.msra.mxu0 %v166
    %1416 = vmatpush.msra.mxu0 %v158
    %1417 = vmatpush.msra.mxu0 %v150
    %1418 = vmatpush.msra.mxu0 %v142
    %1419 = vmatpush.msra.mxu0 %v134
    %1420 = vmatpush.msra.mxu0 %v126
    %1421 = vmatpush.msra.mxu0 %v118
    %1422 = vmatpush.msra.mxu0 %v110
    %1423 = vmatpush.msra.mxu0 %v102
    %1424 = vmatpush.msra.mxu0 %v94
    %1425 = vmatpush.msra.mxu0 %v86
    %1426 = vmatpush.msra.mxu0 %v78
    %1427 = vmatpush.msra.mxu0 %v70
    %1428 = vmatmul.f32.gmra.mxu0 %v60
    %v1429 = vpop.f32.mrf.mxu0
    %v1430 = vadd.f32 0.0, %v1429
    %1431 = vdwg.mxu0
    %1432 = vmatpush.msra.mxu0 %v318
    %1433 = vmatpush.msra.mxu0 %v310
    %1434 = vmatpush.msra.mxu0 %v302
    %1435 = vmatpush.msra.mxu0 %v294
    %1436 = vmatpush.msra.mxu0 %v286
    %1437 = vmatpush.msra.mxu0 %v278
    %1438 = vmatpush.msra.mxu0 %v270
    %1439 = vmatpush.msra.mxu0 %v262
    %1440 = vmatpush.msra.mxu0 %v254
    %1441 = vmatpush.msra.mxu0 %v246
    %1442 = vmatpush.msra.mxu0 %v238
    %1443 = vmatpush.msra.mxu0 %v230
    %1444 = vmatpush.msra.mxu0 %v222
    %1445 = vmatpush.msra.mxu0 %v214
    %1446 = vmatpush.msra.mxu0 %v206
    %1447 = vmatpush.msra.mxu0 %v198
    %1448 = vmatmul.f32.gmra.mxu0 %v61
    %v1449 = vpop.f32.mrf.mxu0
    %v1450 = vadd.f32 %v1430, %v1449
    %1451 = vdwg.mxu0
    %1452 = vmatpush.msra.mxu0 %v446
    %1453 = vmatpush.msra.mxu0 %v438
    %1454 = vmatpush.msra.mxu0 %v430
    %1455 = vmatpush.msra.mxu0 %v422
    %1456 = vmatpush.msra.mxu0 %v414
    %1457 = vmatpush.msra.mxu0 %v406
    %1458 = vmatpush.msra.mxu0 %v398
    %1459 = vmatpush.msra.mxu0 %v390
    %1460 = vmatpush.msra.mxu0 %v382
    %1461 = vmatpush.msra.mxu0 %v374
    %1462 = vmatpush.msra.mxu0 %v366
    %1463 = vmatpush.msra.mxu0 %v358
    %1464 = vmatpush.msra.mxu0 %v350
    %1465 = vmatpush.msra.mxu0 %v342
    %1466 = vmatpush.msra.mxu0 %v334
    %1467 = vmatpush.msra.mxu0 %v326
    %1468 = vmatmul.f32.gmra.mxu0 %v62
    %v1469 = vpop.f32.mrf.mxu0
    %v1470 = vadd.f32 %v1450, %v1469
    %1471 = vdwg.mxu0
    %1472 = vmatpush.msra.mxu0 %v574
    %1473 = vmatpush.msra.mxu0 %v566
    %1474 = vmatpush.msra.mxu0 %v558
    %1475 = vmatpush.msra.mxu0 %v550
    %1476 = vmatpush.msra.mxu0 %v542
    %1477 = vmatpush.msra.mxu0 %v534
    %1478 = vmatpush.msra.mxu0 %v526
    %1479 = vmatpush.msra.mxu0 %v518
    %1480 = vmatpush.msra.mxu0 %v510
    %1481 = vmatpush.msra.mxu0 %v502
    %1482 = vmatpush.msra.mxu0 %v494
    %1483 = vmatpush.msra.mxu0 %v486
    %1484 = vmatpush.msra.mxu0 %v478
    %1485 = vmatpush.msra.mxu0 %v470
    %1486 = vmatpush.msra.mxu0 %v462
    %1487 = vmatpush.msra.mxu0 %v454
    %1488 = vmatmul.f32.gmra.mxu0 %v63
    %v1489 = vpop.f32.mrf.mxu0
    %v1490 = vadd.f32 %v1470, %v1489
    %1491 = vdwg.mxu0
    %1492 = vmatpush.msra.mxu0 %v702
    %1493 = vmatpush.msra.mxu0 %v694
    %1494 = vmatpush.msra.mxu0 %v686
    %1495 = vmatpush.msra.mxu0 %v678
    %1496 = vmatpush.msra.mxu0 %v670
    %1497 = vmatpush.msra.mxu0 %v662
    %1498 = vmatpush.msra.mxu0 %v654
    %1499 = vmatpush.msra.mxu0 %v646
    %1500 = vmatpush.msra.mxu0 %v638
    %1501 = vmatpush.msra.mxu0 %v630
    %1502 = vmatpush.msra.mxu0 %v622
    %1503 = vmatpush.msra.mxu0 %v614
    %1504 = vmatpush.msra.mxu0 %v606
    %1505 = vmatpush.msra.mxu0 %v598
    %1506 = vmatpush.msra.mxu0 %v590
    %1507 = vmatpush.msra.mxu0 %v582
    %1508 = vmatmul.f32.gmra.mxu0 %v64
    %v1509 = vpop.f32.mrf.mxu0
    %v1510 = vadd.f32 %v1490, %v1509
    %1511 = vdwg.mxu0
    %1512 = vmatpush.msra.mxu0 %v830
    %1513 = vmatpush.msra.mxu0 %v822
    %1514 = vmatpush.msra.mxu0 %v814
    %1515 = vmatpush.msra.mxu0 %v806
    %1516 = vmatpush.msra.mxu0 %v798
    %1517 = vmatpush.msra.mxu0 %v790
    %1518 = vmatpush.msra.mxu0 %v782
    %1519 = vmatpush.msra.mxu0 %v774
    %1520 = vmatpush.msra.mxu0 %v766
    %1521 = vmatpush.msra.mxu0 %v758
    %1522 = vmatpush.msra.mxu0 %v750
    %1523 = vmatpush.msra.mxu0 %v742
    %1524 = vmatpush.msra.mxu0 %v734
    %1525 = vmatpush.msra.mxu0 %v726
    %1526 = vmatpush.msra.mxu0 %v718
    %1527 = vmatpush.msra.mxu0 %v710
    %1528 = vmatmul.f32.gmra.mxu0 %v65
    %v1529 = vpop.f32.mrf.mxu0
    %v1530 = vadd.f32 %v1510, %v1529
    %1531 = vdwg.mxu0
    %1532 = vmatpush.msra.mxu0 %v958
    %1533 = vmatpush.msra.mxu0 %v950
    %1534 = vmatpush.msra.mxu0 %v942
    %1535 = vmatpush.msra.mxu0 %v934
    %1536 = vmatpush.msra.mxu0 %v926
    %1537 = vmatpush.msra.mxu0 %v918
    %1538 = vmatpush.msra.mxu0 %v910
    %1539 = vmatpush.msra.mxu0 %v902
    %1540 = vmatpush.msra.mxu0 %v894
    %1541 = vmatpush.msra.mxu0 %v886
    %1542 = vmatpush.msra.mxu0 %v878
    %1543 = vmatpush.msra.mxu0 %v870
    %1544 = vmatpush.msra.mxu0 %v862
    %1545 = vmatpush.msra.mxu0 %v854
    %1546 = vmatpush.msra.mxu0 %v846
    %1547 = vmatpush.msra.mxu0 %v838
    %1548 = vmatmul.f32.gmra.mxu0 %v66
    %v1549 = vpop.f32.mrf.mxu0
    %v1550 = vadd.f32 %v1530, %v1549
    %1551 = vdwg.mxu0
    %1552 = vmatpush.msra.mxu0 %v1086
    %1553 = vmatpush.msra.mxu0 %v1078
    %1554 = vmatpush.msra.mxu0 %v1070
    %1555 = vmatpush.msra.mxu0 %v1062
    %1556 = vmatpush.msra.mxu0 %v1054
    %1557 = vmatpush.msra.mxu0 %v1046
    %1558 = vmatpush.msra.mxu0 %v1038
    %1559 = vmatpush.msra.mxu0 %v1030
    %1560 = vmatpush.msra.mxu0 %v1022
    %1561 = vmatpush.msra.mxu0 %v1014
    %1562 = vmatpush.msra.mxu0 %v1006
    %1563 = vmatpush.msra.mxu0 %v998
    %1564 = vmatpush.msra.mxu0 %v990
    %1565 = vmatpush.msra.mxu0 %v982
    %1566 = vmatpush.msra.mxu0 %v974
    %1567 = vmatpush.msra.mxu0 %v966
    %1568 = vmatmul.f32.gmra.mxu0 %v67
    %v1569 = vpop.f32.mrf.mxu0
    %v1570 = vadd.f32 %v1550, %v1569
    %1571 = vdwg.mxu0
    %1572 = vmatpush.msra.mxu0 %v191
    %1573 = vmatpush.msra.mxu0 %v183
    %1574 = vmatpush.msra.mxu0 %v175
    %1575 = vmatpush.msra.mxu0 %v167
    %1576 = vmatpush.msra.mxu0 %v159
    %1577 = vmatpush.msra.mxu0 %v151
    %1578 = vmatpush.msra.mxu0 %v143
    %1579 = vmatpush.msra.mxu0 %v135
    %1580 = vmatpush.msra.mxu0 %v127
    %1581 = vmatpush.msra.mxu0 %v119
    %1582 = vmatpush.msra.mxu0 %v111
    %1583 = vmatpush.msra.mxu0 %v103
    %1584 = vmatpush.msra.mxu0 %v95
    %1585 = vmatpush.msra.mxu0 %v87
    %1586 = vmatpush.msra.mxu0 %v79
    %1587 = vmatpush.msra.mxu0 %v71
    %1588 = vmatmul.f32.gmra.mxu0 %v60
    %v1589 = vpop.f32.mrf.mxu0
    %v1590 = vadd.f32 0.0, %v1589
    %1591 = vdwg.mxu0
    %1592 = vmatpush.msra.mxu0 %v319
    %1593 = vmatpush.msra.mxu0 %v311
    %1594 = vmatpush.msra.mxu0 %v303
    %1595 = vmatpush.msra.mxu0 %v295
    %1596 = vmatpush.msra.mxu0 %v287
    %1597 = vmatpush.msra.mxu0 %v279
    %1598 = vmatpush.msra.mxu0 %v271
    %1599 = vmatpush.msra.mxu0 %v263
    %1600 = vmatpush.msra.mxu0 %v255
    %1601 = vmatpush.msra.mxu0 %v247
    %1602 = vmatpush.msra.mxu0 %v239
    %1603 = vmatpush.msra.mxu0 %v231
    %1604 = vmatpush.msra.mxu0 %v223
    %1605 = vmatpush.msra.mxu0 %v215
    %1606 = vmatpush.msra.mxu0 %v207
    %1607 = vmatpush.msra.mxu0 %v199
    %1608 = vmatmul.f32.gmra.mxu0 %v61
    %v1609 = vpop.f32.mrf.mxu0
    %v1610 = vadd.f32 %v1590, %v1609
    %1611 = vdwg.mxu0
    %1612 = vmatpush.msra.mxu0 %v447
    %1613 = vmatpush.msra.mxu0 %v439
    %1614 = vmatpush.msra.mxu0 %v431
    %1615 = vmatpush.msra.mxu0 %v423
    %1616 = vmatpush.msra.mxu0 %v415
    %1617 = vmatpush.msra.mxu0 %v407
    %1618 = vmatpush.msra.mxu0 %v399
    %1619 = vmatpush.msra.mxu0 %v391
    %1620 = vmatpush.msra.mxu0 %v383
    %1621 = vmatpush.msra.mxu0 %v375
    %1622 = vmatpush.msra.mxu0 %v367
    %1623 = vmatpush.msra.mxu0 %v359
    %1624 = vmatpush.msra.mxu0 %v351
    %1625 = vmatpush.msra.mxu0 %v343
    %1626 = vmatpush.msra.mxu0 %v335
    %1627 = vmatpush.msra.mxu0 %v327
    %1628 = vmatmul.f32.gmra.mxu0 %v62
    %v1629 = vpop.f32.mrf.mxu0
    %v1630 = vadd.f32 %v1610, %v1629
    %1631 = vdwg.mxu0
    %1632 = vmatpush.msra.mxu0 %v575
    %1633 = vmatpush.msra.mxu0 %v567
    %1634 = vmatpush.msra.mxu0 %v559
    %1635 = vmatpush.msra.mxu0 %v551
    %1636 = vmatpush.msra.mxu0 %v543
    %1637 = vmatpush.msra.mxu0 %v535
    %1638 = vmatpush.msra.mxu0 %v527
    %1639 = vmatpush.msra.mxu0 %v519
    %1640 = vmatpush.msra.mxu0 %v511
    %1641 = vmatpush.msra.mxu0 %v503
    %1642 = vmatpush.msra.mxu0 %v495
    %1643 = vmatpush.msra.mxu0 %v487
    %1644 = vmatpush.msra.mxu0 %v479
    %1645 = vmatpush.msra.mxu0 %v471
    %1646 = vmatpush.msra.mxu0 %v463
    %1647 = vmatpush.msra.mxu0 %v455
    %1648 = vmatmul.f32.gmra.mxu0 %v63
    %v1649 = vpop.f32.mrf.mxu0
    %v1650 = vadd.f32 %v1630, %v1649
    %1651 = vdwg.mxu0
    %1652 = vmatpush.msra.mxu0 %v703
    %1653 = vmatpush.msra.mxu0 %v695
    %1654 = vmatpush.msra.mxu0 %v687
    %1655 = vmatpush.msra.mxu0 %v679
    %1656 = vmatpush.msra.mxu0 %v671
    %1657 = vmatpush.msra.mxu0 %v663
    %1658 = vmatpush.msra.mxu0 %v655
    %1659 = vmatpush.msra.mxu0 %v647
    %1660 = vmatpush.msra.mxu0 %v639
    %1661 = vmatpush.msra.mxu0 %v631
    %1662 = vmatpush.msra.mxu0 %v623
    %1663 = vmatpush.msra.mxu0 %v615
    %1664 = vmatpush.msra.mxu0 %v607
    %1665 = vmatpush.msra.mxu0 %v599
    %1666 = vmatpush.msra.mxu0 %v591
    %1667 = vmatpush.msra.mxu0 %v583
    %1668 = vmatmul.f32.gmra.mxu0 %v64
    %v1669 = vpop.f32.mrf.mxu0
    %v1670 = vadd.f32 %v1650, %v1669
    %1671 = vdwg.mxu0
    %1672 = vmatpush.msra.mxu0 %v831
    %1673 = vmatpush.msra.mxu0 %v823
    %1674 = vmatpush.msra.mxu0 %v815
    %1675 = vmatpush.msra.mxu0 %v807
    %1676 = vmatpush.msra.mxu0 %v799
    %1677 = vmatpush.msra.mxu0 %v791
    %1678 = vmatpush.msra.mxu0 %v783
    %1679 = vmatpush.msra.mxu0 %v775
    %1680 = vmatpush.msra.mxu0 %v767
    %1681 = vmatpush.msra.mxu0 %v759
    %1682 = vmatpush.msra.mxu0 %v751
    %1683 = vmatpush.msra.mxu0 %v743
    %1684 = vmatpush.msra.mxu0 %v735
    %1685 = vmatpush.msra.mxu0 %v727
    %1686 = vmatpush.msra.mxu0 %v719
    %1687 = vmatpush.msra.mxu0 %v711
    %1688 = vmatmul.f32.gmra.mxu0 %v65
    %v1689 = vpop.f32.mrf.mxu0
    %v1690 = vadd.f32 %v1670, %v1689
    %1691 = vdwg.mxu0
    %1692 = vmatpush.msra.mxu0 %v959
    %1693 = vmatpush.msra.mxu0 %v951
    %1694 = vmatpush.msra.mxu0 %v943
    %1695 = vmatpush.msra.mxu0 %v935
    %1696 = vmatpush.msra.mxu0 %v927
    %1697 = vmatpush.msra.mxu0 %v919
    %1698 = vmatpush.msra.mxu0 %v911
    %1699 = vmatpush.msra.mxu0 %v903
    %1700 = vmatpush.msra.mxu0 %v895
    %1701 = vmatpush.msra.mxu0 %v887
    %1702 = vmatpush.msra.mxu0 %v879
    %1703 = vmatpush.msra.mxu0 %v871
    %1704 = vmatpush.msra.mxu0 %v863
    %1705 = vmatpush.msra.mxu0 %v855
    %1706 = vmatpush.msra.mxu0 %v847
    %1707 = vmatpush.msra.mxu0 %v839
    %1708 = vmatmul.f32.gmra.mxu0 %v66
    %v1709 = vpop.f32.mrf.mxu0
    %v1710 = vadd.f32 %v1690, %v1709
    %1711 = vdwg.mxu0
    %1712 = vmatpush.msra.mxu0 %v1087
    %1713 = vmatpush.msra.mxu0 %v1079
    %1714 = vmatpush.msra.mxu0 %v1071
    %1715 = vmatpush.msra.mxu0 %v1063
    %1716 = vmatpush.msra.mxu0 %v1055
    %1717 = vmatpush.msra.mxu0 %v1047
    %1718 = vmatpush.msra.mxu0 %v1039
    %1719 = vmatpush.msra.mxu0 %v1031
    %1720 = vmatpush.msra.mxu0 %v1023
    %1721 = vmatpush.msra.mxu0 %v1015
    %1722 = vmatpush.msra.mxu0 %v1007
    %1723 = vmatpush.msra.mxu0 %v999
    %1724 = vmatpush.msra.mxu0 %v991
    %1725 = vmatpush.msra.mxu0 %v983
    %1726 = vmatpush.msra.mxu0 %v975
    %1727 = vmatpush.msra.mxu0 %v967
    %1728 = vmatmul.f32.gmra.mxu0 %v67
    %v1729 = vpop.f32.mrf.mxu0
    %v1730 = vadd.f32 %v1710, %v1729
    %1731 = vdwg.mxu0
    %1732 = vmatpush.msra.mxu0 %v192
    %1733 = vmatpush.msra.mxu0 %v184
    %1734 = vmatpush.msra.mxu0 %v176
    %1735 = vmatpush.msra.mxu0 %v168
    %1736 = vmatpush.msra.mxu0 %v160
    %1737 = vmatpush.msra.mxu0 %v152
    %1738 = vmatpush.msra.mxu0 %v144
    %1739 = vmatpush.msra.mxu0 %v136
    %1740 = vmatpush.msra.mxu0 %v128
    %1741 = vmatpush.msra.mxu0 %v120
    %1742 = vmatpush.msra.mxu0 %v112
    %1743 = vmatpush.msra.mxu0 %v104
    %1744 = vmatpush.msra.mxu0 %v96
    %1745 = vmatpush.msra.mxu0 %v88
    %1746 = vmatpush.msra.mxu0 %v80
    %1747 = vmatpush.msra.mxu0 %v72
    %1748 = vmatmul.f32.gmra.mxu0 %v60
    %v1749 = vpop.f32.mrf.mxu0
    %v1750 = vadd.f32 0.0, %v1749
    %1751 = vdwg.mxu0
    %1752 = vmatpush.msra.mxu0 %v320
    %1753 = vmatpush.msra.mxu0 %v312
    %1754 = vmatpush.msra.mxu0 %v304
    %1755 = vmatpush.msra.mxu0 %v296
    %1756 = vmatpush.msra.mxu0 %v288
    %1757 = vmatpush.msra.mxu0 %v280
    %1758 = vmatpush.msra.mxu0 %v272
    %1759 = vmatpush.msra.mxu0 %v264
    %1760 = vmatpush.msra.mxu0 %v256
    %1761 = vmatpush.msra.mxu0 %v248
    %1762 = vmatpush.msra.mxu0 %v240
    %1763 = vmatpush.msra.mxu0 %v232
    %1764 = vmatpush.msra.mxu0 %v224
    %1765 = vmatpush.msra.mxu0 %v216
    %1766 = vmatpush.msra.mxu0 %v208
    %1767 = vmatpush.msra.mxu0 %v200
    %1768 = vmatmul.f32.gmra.mxu0 %v61
    %v1769 = vpop.f32.mrf.mxu0
    %v1770 = vadd.f32 %v1750, %v1769
    %1771 = vdwg.mxu0
    %1772 = vmatpush.msra.mxu0 %v448
    %1773 = vmatpush.msra.mxu0 %v440
    %1774 = vmatpush.msra.mxu0 %v432
    %1775 = vmatpush.msra.mxu0 %v424
    %1776 = vmatpush.msra.mxu0 %v416
    %1777 = vmatpush.msra.mxu0 %v408
    %1778 = vmatpush.msra.mxu0 %v400
    %1779 = vmatpush.msra.mxu0 %v392
    %1780 = vmatpush.msra.mxu0 %v384
    %1781 = vmatpush.msra.mxu0 %v376
    %1782 = vmatpush.msra.mxu0 %v368
    %1783 = vmatpush.msra.mxu0 %v360
    %1784 = vmatpush.msra.mxu0 %v352
    %1785 = vmatpush.msra.mxu0 %v344
    %1786 = vmatpush.msra.mxu0 %v336
    %1787 = vmatpush.msra.mxu0 %v328
    %1788 = vmatmul.f32.gmra.mxu0 %v62
    %v1789 = vpop.f32.mrf.mxu0
    %v1790 = vadd.f32 %v1770, %v1789
    %1791 = vdwg.mxu0
    %1792 = vmatpush.msra.mxu0 %v576
    %1793 = vmatpush.msra.mxu0 %v568
    %1794 = vmatpush.msra.mxu0 %v560
    %1795 = vmatpush.msra.mxu0 %v552
    %1796 = vmatpush.msra.mxu0 %v544
    %1797 = vmatpush.msra.mxu0 %v536
    %1798 = vmatpush.msra.mxu0 %v528
    %1799 = vmatpush.msra.mxu0 %v520
    %1800 = vmatpush.msra.mxu0 %v512
    %1801 = vmatpush.msra.mxu0 %v504
    %1802 = vmatpush.msra.mxu0 %v496
    %1803 = vmatpush.msra.mxu0 %v488
    %1804 = vmatpush.msra.mxu0 %v480
    %1805 = vmatpush.msra.mxu0 %v472
    %1806 = vmatpush.msra.mxu0 %v464
    %1807 = vmatpush.msra.mxu0 %v456
    %1808 = vmatmul.f32.gmra.mxu0 %v63
    %v1809 = vpop.f32.mrf.mxu0
    %v1810 = vadd.f32 %v1790, %v1809
    %1811 = vdwg.mxu0
    %1812 = vmatpush.msra.mxu0 %v704
    %1813 = vmatpush.msra.mxu0 %v696
    %1814 = vmatpush.msra.mxu0 %v688
    %1815 = vmatpush.msra.mxu0 %v680
    %1816 = vmatpush.msra.mxu0 %v672
    %1817 = vmatpush.msra.mxu0 %v664
    %1818 = vmatpush.msra.mxu0 %v656
    %1819 = vmatpush.msra.mxu0 %v648
    %1820 = vmatpush.msra.mxu0 %v640
    %1821 = vmatpush.msra.mxu0 %v632
    %1822 = vmatpush.msra.mxu0 %v624
    %1823 = vmatpush.msra.mxu0 %v616
    %1824 = vmatpush.msra.mxu0 %v608
    %1825 = vmatpush.msra.mxu0 %v600
    %1826 = vmatpush.msra.mxu0 %v592
    %1827 = vmatpush.msra.mxu0 %v584
    %1828 = vmatmul.f32.gmra.mxu0 %v64
    %v1829 = vpop.f32.mrf.mxu0
    %v1830 = vadd.f32 %v1810, %v1829
    %1831 = vdwg.mxu0
    %1832 = vmatpush.msra.mxu0 %v832
    %1833 = vmatpush.msra.mxu0 %v824
    %1834 = vmatpush.msra.mxu0 %v816
    %1835 = vmatpush.msra.mxu0 %v808
    %1836 = vmatpush.msra.mxu0 %v800
    %1837 = vmatpush.msra.mxu0 %v792
    %1838 = vmatpush.msra.mxu0 %v784
    %1839 = vmatpush.msra.mxu0 %v776
    %1840 = vmatpush.msra.mxu0 %v768
    %1841 = vmatpush.msra.mxu0 %v760
    %1842 = vmatpush.msra.mxu0 %v752
    %1843 = vmatpush.msra.mxu0 %v744
    %1844 = vmatpush.msra.mxu0 %v736
    %1845 = vmatpush.msra.mxu0 %v728
    %1846 = vmatpush.msra.mxu0 %v720
    %1847 = vmatpush.msra.mxu0 %v712
    %1848 = vmatmul.f32.gmra.mxu0 %v65
    %v1849 = vpop.f32.mrf.mxu0
    %v1850 = vadd.f32 %v1830, %v1849
    %1851 = vdwg.mxu0
    %1852 = vmatpush.msra.mxu0 %v960
    %1853 = vmatpush.msra.mxu0 %v952
    %1854 = vmatpush.msra.mxu0 %v944
    %1855 = vmatpush.msra.mxu0 %v936
    %1856 = vmatpush.msra.mxu0 %v928
    %1857 = vmatpush.msra.mxu0 %v920
    %1858 = vmatpush.msra.mxu0 %v912
    %1859 = vmatpush.msra.mxu0 %v904
    %1860 = vmatpush.msra.mxu0 %v896
    %1861 = vmatpush.msra.mxu0 %v888
    %1862 = vmatpush.msra.mxu0 %v880
    %1863 = vmatpush.msra.mxu0 %v872
    %1864 = vmatpush.msra.mxu0 %v864
    %1865 = vmatpush.msra.mxu0 %v856
    %1866 = vmatpush.msra.mxu0 %v848
    %1867 = vmatpush.msra.mxu0 %v840
    %1868 = vmatmul.f32.gmra.mxu0 %v66
    %v1869 = vpop.f32.mrf.mxu0
    %v1870 = vadd.f32 %v1850, %v1869
    %1871 = vdwg.mxu0
    %1872 = vmatpush.msra.mxu0 %v1088
    %1873 = vmatpush.msra.mxu0 %v1080
    %1874 = vmatpush.msra.mxu0 %v1072
    %1875 = vmatpush.msra.mxu0 %v1064
    %1876 = vmatpush.msra.mxu0 %v1056
    %1877 = vmatpush.msra.mxu0 %v1048
    %1878 = vmatpush.msra.mxu0 %v1040
    %1879 = vmatpush.msra.mxu0 %v1032
    %1880 = vmatpush.msra.mxu0 %v1024
    %1881 = vmatpush.msra.mxu0 %v1016
    %1882 = vmatpush.msra.mxu0 %v1008
    %1883 = vmatpush.msra.mxu0 %v1000
    %1884 = vmatpush.msra.mxu0 %v992
    %1885 = vmatpush.msra.mxu0 %v984
    %1886 = vmatpush.msra.mxu0 %v976
    %1887 = vmatpush.msra.mxu0 %v968
    %1888 = vmatmul.f32.gmra.mxu0 %v67
    %v1889 = vpop.f32.mrf.mxu0
    %v1890 = vadd.f32 %v1870, %v1889
    %1891 = vdwg.mxu0
    %1892 = vmatpush.msra.mxu0 %v193
    %1893 = vmatpush.msra.mxu0 %v185
    %1894 = vmatpush.msra.mxu0 %v177
    %1895 = vmatpush.msra.mxu0 %v169
    %1896 = vmatpush.msra.mxu0 %v161
    %1897 = vmatpush.msra.mxu0 %v153
    %1898 = vmatpush.msra.mxu0 %v145
    %1899 = vmatpush.msra.mxu0 %v137
    %1900 = vmatpush.msra.mxu0 %v129
    %1901 = vmatpush.msra.mxu0 %v121
    %1902 = vmatpush.msra.mxu0 %v113
    %1903 = vmatpush.msra.mxu0 %v105
    %1904 = vmatpush.msra.mxu0 %v97
    %1905 = vmatpush.msra.mxu0 %v89
    %1906 = vmatpush.msra.mxu0 %v81
    %1907 = vmatpush.msra.mxu0 %v73
    %1908 = vmatmul.f32.gmra.mxu0 %v60
    %v1909 = vpop.f32.mrf.mxu0
    %v1910 = vadd.f32 0.0, %v1909
    %1911 = vdwg.mxu0
    %1912 = vmatpush.msra.mxu0 %v321
    %1913 = vmatpush.msra.mxu0 %v313
    %1914 = vmatpush.msra.mxu0 %v305
    %1915 = vmatpush.msra.mxu0 %v297
    %1916 = vmatpush.msra.mxu0 %v289
    %1917 = vmatpush.msra.mxu0 %v281
    %1918 = vmatpush.msra.mxu0 %v273
    %1919 = vmatpush.msra.mxu0 %v265
    %1920 = vmatpush.msra.mxu0 %v257
    %1921 = vmatpush.msra.mxu0 %v249
    %1922 = vmatpush.msra.mxu0 %v241
    %1923 = vmatpush.msra.mxu0 %v233
    %1924 = vmatpush.msra.mxu0 %v225
    %1925 = vmatpush.msra.mxu0 %v217
    %1926 = vmatpush.msra.mxu0 %v209
    %1927 = vmatpush.msra.mxu0 %v201
    %1928 = vmatmul.f32.gmra.mxu0 %v61
    %v1929 = vpop.f32.mrf.mxu0
    %v1930 = vadd.f32 %v1910, %v1929
    %1931 = vdwg.mxu0
    %1932 = vmatpush.msra.mxu0 %v449
    %1933 = vmatpush.msra.mxu0 %v441
    %1934 = vmatpush.msra.mxu0 %v433
    %1935 = vmatpush.msra.mxu0 %v425
    %1936 = vmatpush.msra.mxu0 %v417
    %1937 = vmatpush.msra.mxu0 %v409
    %1938 = vmatpush.msra.mxu0 %v401
    %1939 = vmatpush.msra.mxu0 %v393
    %1940 = vmatpush.msra.mxu0 %v385
    %1941 = vmatpush.msra.mxu0 %v377
    %1942 = vmatpush.msra.mxu0 %v369
    %1943 = vmatpush.msra.mxu0 %v361
    %1944 = vmatpush.msra.mxu0 %v353
    %1945 = vmatpush.msra.mxu0 %v345
    %1946 = vmatpush.msra.mxu0 %v337
    %1947 = vmatpush.msra.mxu0 %v329
    %1948 = vmatmul.f32.gmra.mxu0 %v62
    %v1949 = vpop.f32.mrf.mxu0
    %v1950 = vadd.f32 %v1930, %v1949
    %1951 = vdwg.mxu0
    %1952 = vmatpush.msra.mxu0 %v577
    %1953 = vmatpush.msra.mxu0 %v569
    %1954 = vmatpush.msra.mxu0 %v561
    %1955 = vmatpush.msra.mxu0 %v553
    %1956 = vmatpush.msra.mxu0 %v545
    %1957 = vmatpush.msra.mxu0 %v537
    %1958 = vmatpush.msra.mxu0 %v529
    %1959 = vmatpush.msra.mxu0 %v521
    %1960 = vmatpush.msra.mxu0 %v513
    %1961 = vmatpush.msra.mxu0 %v505
    %1962 = vmatpush.msra.mxu0 %v497
    %1963 = vmatpush.msra.mxu0 %v489
    %1964 = vmatpush.msra.mxu0 %v481
    %1965 = vmatpush.msra.mxu0 %v473
    %1966 = vmatpush.msra.mxu0 %v465
    %1967 = vmatpush.msra.mxu0 %v457
    %1968 = vmatmul.f32.gmra.mxu0 %v63
    %v1969 = vpop.f32.mrf.mxu0
    %v1970 = vadd.f32 %v1950, %v1969
    %1971 = vdwg.mxu0
    %1972 = vmatpush.msra.mxu0 %v705
    %1973 = vmatpush.msra.mxu0 %v697
    %1974 = vmatpush.msra.mxu0 %v689
    %1975 = vmatpush.msra.mxu0 %v681
    %1976 = vmatpush.msra.mxu0 %v673
    %1977 = vmatpush.msra.mxu0 %v665
    %1978 = vmatpush.msra.mxu0 %v657
    %1979 = vmatpush.msra.mxu0 %v649
    %1980 = vmatpush.msra.mxu0 %v641
    %1981 = vmatpush.msra.mxu0 %v633
    %1982 = vmatpush.msra.mxu0 %v625
    %1983 = vmatpush.msra.mxu0 %v617
    %1984 = vmatpush.msra.mxu0 %v609
    %1985 = vmatpush.msra.mxu0 %v601
    %1986 = vmatpush.msra.mxu0 %v593
    %1987 = vmatpush.msra.mxu0 %v585
    %1988 = vmatmul.f32.gmra.mxu0 %v64
    %v1989 = vpop.f32.mrf.mxu0
    %v1990 = vadd.f32 %v1970, %v1989
    %1991 = vdwg.mxu0
    %1992 = vmatpush.msra.mxu0 %v833
    %1993 = vmatpush.msra.mxu0 %v825
    %1994 = vmatpush.msra.mxu0 %v817
    %1995 = vmatpush.msra.mxu0 %v809
    %1996 = vmatpush.msra.mxu0 %v801
    %1997 = vmatpush.msra.mxu0 %v793
    %1998 = vmatpush.msra.mxu0 %v785
    %1999 = vmatpush.msra.mxu0 %v777
    %2000 = vmatpush.msra.mxu0 %v769
    %2001 = vmatpush.msra.mxu0 %v761
    %2002 = vmatpush.msra.mxu0 %v753
    %2003 = vmatpush.msra.mxu0 %v745
    %2004 = vmatpush.msra.mxu0 %v737
    %2005 = vmatpush.msra.mxu0 %v729
    %2006 = vmatpush.msra.mxu0 %v721
    %2007 = vmatpush.msra.mxu0 %v713
    %2008 = vmatmul.f32.gmra.mxu0 %v65
    %v2009 = vpop.f32.mrf.mxu0
    %v2010 = vadd.f32 %v1990, %v2009
    %2011 = vdwg.mxu0
    %2012 = vmatpush.msra.mxu0 %v961
    %2013 = vmatpush.msra.mxu0 %v953
    %2014 = vmatpush.msra.mxu0 %v945
    %2015 = vmatpush.msra.mxu0 %v937
    %2016 = vmatpush.msra.mxu0 %v929
    %2017 = vmatpush.msra.mxu0 %v921
    %2018 = vmatpush.msra.mxu0 %v913
    %2019 = vmatpush.msra.mxu0 %v905
    %2020 = vmatpush.msra.mxu0 %v897
    %2021 = vmatpush.msra.mxu0 %v889
    %2022 = vmatpush.msra.mxu0 %v881
    %2023 = vmatpush.msra.mxu0 %v873
    %2024 = vmatpush.msra.mxu0 %v865
    %2025 = vmatpush.msra.mxu0 %v857
    %2026 = vmatpush.msra.mxu0 %v849
    %2027 = vmatpush.msra.mxu0 %v841
    %2028 = vmatmul.f32.gmra.mxu0 %v66
    %v2029 = vpop.f32.mrf.mxu0
    %v2030 = vadd.f32 %v2010, %v2029
    %2031 = vdwg.mxu0
    %2032 = vmatpush.msra.mxu0 %v1089
    %2033 = vmatpush.msra.mxu0 %v1081
    %2034 = vmatpush.msra.mxu0 %v1073
    %2035 = vmatpush.msra.mxu0 %v1065
    %2036 = vmatpush.msra.mxu0 %v1057
    %2037 = vmatpush.msra.mxu0 %v1049
    %2038 = vmatpush.msra.mxu0 %v1041
    %2039 = vmatpush.msra.mxu0 %v1033
    %2040 = vmatpush.msra.mxu0 %v1025
    %2041 = vmatpush.msra.mxu0 %v1017
    %2042 = vmatpush.msra.mxu0 %v1009
    %2043 = vmatpush.msra.mxu0 %v1001
    %2044 = vmatpush.msra.mxu0 %v993
    %2045 = vmatpush.msra.mxu0 %v985
    %2046 = vmatpush.msra.mxu0 %v977
    %2047 = vmatpush.msra.mxu0 %v969
    %2048 = vmatmul.f32.gmra.mxu0 %v67
    %v2049 = vpop.f32.mrf.mxu0
    %v2050 = vadd.f32 %v2030, %v2049
    %2051 = vdwg.mxu0
    %2052 = vmatpush.msra.mxu0 %v194
    %2053 = vmatpush.msra.mxu0 %v186
    %2054 = vmatpush.msra.mxu0 %v178
    %2055 = vmatpush.msra.mxu0 %v170
    %2056 = vmatpush.msra.mxu0 %v162
    %2057 = vmatpush.msra.mxu0 %v154
    %2058 = vmatpush.msra.mxu0 %v146
    %2059 = vmatpush.msra.mxu0 %v138
    %2060 = vmatpush.msra.mxu0 %v130
    %2061 = vmatpush.msra.mxu0 %v122
    %2062 = vmatpush.msra.mxu0 %v114
    %2063 = vmatpush.msra.mxu0 %v106
    %2064 = vmatpush.msra.mxu0 %v98
    %2065 = vmatpush.msra.mxu0 %v90
    %2066 = vmatpush.msra.mxu0 %v82
    %2067 = vmatpush.msra.mxu0 %v74
    %2068 = vmatmul.f32.gmra.mxu0 %v60
    %v2069 = vpop.f32.mrf.mxu0
    %v2070 = vadd.f32 0.0, %v2069
    %2071 = vdwg.mxu0
    %2072 = vmatpush.msra.mxu0 %v322
    %2073 = vmatpush.msra.mxu0 %v314
    %2074 = vmatpush.msra.mxu0 %v306
    %2075 = vmatpush.msra.mxu0 %v298
    %2076 = vmatpush.msra.mxu0 %v290
    %2077 = vmatpush.msra.mxu0 %v282
    %2078 = vmatpush.msra.mxu0 %v274
    %2079 = vmatpush.msra.mxu0 %v266
    %2080 = vmatpush.msra.mxu0 %v258
    %2081 = vmatpush.msra.mxu0 %v250
    %2082 = vmatpush.msra.mxu0 %v242
    %2083 = vmatpush.msra.mxu0 %v234
    %2084 = vmatpush.msra.mxu0 %v226
    %2085 = vmatpush.msra.mxu0 %v218
    %2086 = vmatpush.msra.mxu0 %v210
    %2087 = vmatpush.msra.mxu0 %v202
    %2088 = vmatmul.f32.gmra.mxu0 %v61
    %v2089 = vpop.f32.mrf.mxu0
    %v2090 = vadd.f32 %v2070, %v2089
    %2091 = vdwg.mxu0
    %2092 = vmatpush.msra.mxu0 %v450
    %2093 = vmatpush.msra.mxu0 %v442
    %2094 = vmatpush.msra.mxu0 %v434
    %2095 = vmatpush.msra.mxu0 %v426
    %2096 = vmatpush.msra.mxu0 %v418
    %2097 = vmatpush.msra.mxu0 %v410
    %2098 = vmatpush.msra.mxu0 %v402
    %2099 = vmatpush.msra.mxu0 %v394
    %2100 = vmatpush.msra.mxu0 %v386
    %2101 = vmatpush.msra.mxu0 %v378
    %2102 = vmatpush.msra.mxu0 %v370
    %2103 = vmatpush.msra.mxu0 %v362
    %2104 = vmatpush.msra.mxu0 %v354
    %2105 = vmatpush.msra.mxu0 %v346
    %2106 = vmatpush.msra.mxu0 %v338
    %2107 = vmatpush.msra.mxu0 %v330
    %2108 = vmatmul.f32.gmra.mxu0 %v62
    %v2109 = vpop.f32.mrf.mxu0
    %v2110 = vadd.f32 %v2090, %v2109
    %2111 = vdwg.mxu0
    %2112 = vmatpush.msra.mxu0 %v578
    %2113 = vmatpush.msra.mxu0 %v570
    %2114 = vmatpush.msra.mxu0 %v562
    %2115 = vmatpush.msra.mxu0 %v554
    %2116 = vmatpush.msra.mxu0 %v546
    %2117 = vmatpush.msra.mxu0 %v538
    %2118 = vmatpush.msra.mxu0 %v530
    %2119 = vmatpush.msra.mxu0 %v522
    %2120 = vmatpush.msra.mxu0 %v514
    %2121 = vmatpush.msra.mxu0 %v506
    %2122 = vmatpush.msra.mxu0 %v498
    %2123 = vmatpush.msra.mxu0 %v490
    %2124 = vmatpush.msra.mxu0 %v482
    %2125 = vmatpush.msra.mxu0 %v474
    %2126 = vmatpush.msra.mxu0 %v466
    %2127 = vmatpush.msra.mxu0 %v458
    %2128 = vmatmul.f32.gmra.mxu0 %v63
    %v2129 = vpop.f32.mrf.mxu0
    %v2130 = vadd.f32 %v2110, %v2129
    %2131 = vdwg.mxu0
    %2132 = vmatpush.msra.mxu0 %v706
    %2133 = vmatpush.msra.mxu0 %v698
    %2134 = vmatpush.msra.mxu0 %v690
    %2135 = vmatpush.msra.mxu0 %v682
    %2136 = vmatpush.msra.mxu0 %v674
    %2137 = vmatpush.msra.mxu0 %v666
    %2138 = vmatpush.msra.mxu0 %v658
    %2139 = vmatpush.msra.mxu0 %v650
    %2140 = vmatpush.msra.mxu0 %v642
    %2141 = vmatpush.msra.mxu0 %v634
    %2142 = vmatpush.msra.mxu0 %v626
    %2143 = vmatpush.msra.mxu0 %v618
    %2144 = vmatpush.msra.mxu0 %v610
    %2145 = vmatpush.msra.mxu0 %v602
    %2146 = vmatpush.msra.mxu0 %v594
    %2147 = vmatpush.msra.mxu0 %v586
    %2148 = vmatmul.f32.gmra.mxu0 %v64
    %v2149 = vpop.f32.mrf.mxu0
    %v2150 = vadd.f32 %v2130, %v2149
    %2151 = vdwg.mxu0
    %2152 = vmatpush.msra.mxu0 %v834
    %2153 = vmatpush.msra.mxu0 %v826
    %2154 = vmatpush.msra.mxu0 %v818
    %2155 = vmatpush.msra.mxu0 %v810
    %2156 = vmatpush.msra.mxu0 %v802
    %2157 = vmatpush.msra.mxu0 %v794
    %2158 = vmatpush.msra.mxu0 %v786
    %2159 = vmatpush.msra.mxu0 %v778
    %2160 = vmatpush.msra.mxu0 %v770
    %2161 = vmatpush.msra.mxu0 %v762
    %2162 = vmatpush.msra.mxu0 %v754
    %2163 = vmatpush.msra.mxu0 %v746
    %2164 = vmatpush.msra.mxu0 %v738
    %2165 = vmatpush.msra.mxu0 %v730
    %2166 = vmatpush.msra.mxu0 %v722
    %2167 = vmatpush.msra.mxu0 %v714
    %2168 = vmatmul.f32.gmra.mxu0 %v65
    %v2169 = vpop.f32.mrf.mxu0
    %v2170 = vadd.f32 %v2150, %v2169
    %2171 = vdwg.mxu0
    %2172 = vmatpush.msra.mxu0 %v962
    %2173 = vmatpush.msra.mxu0 %v954
    %2174 = vmatpush.msra.mxu0 %v946
    %2175 = vmatpush.msra.mxu0 %v938
    %2176 = vmatpush.msra.mxu0 %v930
    %2177 = vmatpush.msra.mxu0 %v922
    %2178 = vmatpush.msra.mxu0 %v914
    %2179 = vmatpush.msra.mxu0 %v906
    %2180 = vmatpush.msra.mxu0 %v898
    %2181 = vmatpush.msra.mxu0 %v890
    %2182 = vmatpush.msra.mxu0 %v882
    %2183 = vmatpush.msra.mxu0 %v874
    %2184 = vmatpush.msra.mxu0 %v866
    %2185 = vmatpush.msra.mxu0 %v858
    %2186 = vmatpush.msra.mxu0 %v850
    %2187 = vmatpush.msra.mxu0 %v842
    %2188 = vmatmul.f32.gmra.mxu0 %v66
    %v2189 = vpop.f32.mrf.mxu0
    %v2190 = vadd.f32 %v2170, %v2189
    %2191 = vdwg.mxu0
    %2192 = vmatpush.msra.mxu0 %v1090
    %2193 = vmatpush.msra.mxu0 %v1082
    %2194 = vmatpush.msra.mxu0 %v1074
    %2195 = vmatpush.msra.mxu0 %v1066
    %2196 = vmatpush.msra.mxu0 %v1058
    %2197 = vmatpush.msra.mxu0 %v1050
    %2198 = vmatpush.msra.mxu0 %v1042
    %2199 = vmatpush.msra.mxu0 %v1034
    %2200 = vmatpush.msra.mxu0 %v1026
    %2201 = vmatpush.msra.mxu0 %v1018
    %2202 = vmatpush.msra.mxu0 %v1010
    %2203 = vmatpush.msra.mxu0 %v1002
    %2204 = vmatpush.msra.mxu0 %v994
    %2205 = vmatpush.msra.mxu0 %v986
    %2206 = vmatpush.msra.mxu0 %v978
    %2207 = vmatpush.msra.mxu0 %v970
    %2208 = vmatmul.f32.gmra.mxu0 %v67
    %v2209 = vpop.f32.mrf.mxu0
    %v2210 = vadd.f32 %v2190, %v2209
    %2211 = vdwg.mxu0
    %2212 = vmatpush.msra.mxu0 %v195
    %2213 = vmatpush.msra.mxu0 %v187
    %2214 = vmatpush.msra.mxu0 %v179
    %2215 = vmatpush.msra.mxu0 %v171
    %2216 = vmatpush.msra.mxu0 %v163
    %2217 = vmatpush.msra.mxu0 %v155
    %2218 = vmatpush.msra.mxu0 %v147
    %2219 = vmatpush.msra.mxu0 %v139
    %2220 = vmatpush.msra.mxu0 %v131
    %2221 = vmatpush.msra.mxu0 %v123
    %2222 = vmatpush.msra.mxu0 %v115
    %2223 = vmatpush.msra.mxu0 %v107
    %2224 = vmatpush.msra.mxu0 %v99
    %2225 = vmatpush.msra.mxu0 %v91
    %2226 = vmatpush.msra.mxu0 %v83
    %2227 = vmatpush.msra.mxu0 %v75
    %2228 = vmatmul.f32.gmra.mxu0 %v60
    %v2229 = vpop.f32.mrf.mxu0
    %v2230 = vadd.f32 0.0, %v2229
    %2231 = vdwg.mxu0
    %2232 = vmatpush.msra.mxu0 %v323
    %2233 = vmatpush.msra.mxu0 %v315
    %2234 = vmatpush.msra.mxu0 %v307
    %2235 = vmatpush.msra.mxu0 %v299
    %2236 = vmatpush.msra.mxu0 %v291
    %2237 = vmatpush.msra.mxu0 %v283
    %2238 = vmatpush.msra.mxu0 %v275
    %2239 = vmatpush.msra.mxu0 %v267
    %2240 = vmatpush.msra.mxu0 %v259
    %2241 = vmatpush.msra.mxu0 %v251
    %2242 = vmatpush.msra.mxu0 %v243
    %2243 = vmatpush.msra.mxu0 %v235
    %2244 = vmatpush.msra.mxu0 %v227
    %2245 = vmatpush.msra.mxu0 %v219
    %2246 = vmatpush.msra.mxu0 %v211
    %2247 = vmatpush.msra.mxu0 %v203
    %2248 = vmatmul.f32.gmra.mxu0 %v61
    %v2249 = vpop.f32.mrf.mxu0
    %v2250 = vadd.f32 %v2230, %v2249
    %2251 = vdwg.mxu0
    %2252 = vmatpush.msra.mxu0 %v451
    %2253 = vmatpush.msra.mxu0 %v443
    %2254 = vmatpush.msra.mxu0 %v435
    %2255 = vmatpush.msra.mxu0 %v427
    %2256 = vmatpush.msra.mxu0 %v419
    %2257 = vmatpush.msra.mxu0 %v411
    %2258 = vmatpush.msra.mxu0 %v403
    %2259 = vmatpush.msra.mxu0 %v395
    %2260 = vmatpush.msra.mxu0 %v387
    %2261 = vmatpush.msra.mxu0 %v379
    %2262 = vmatpush.msra.mxu0 %v371
    %2263 = vmatpush.msra.mxu0 %v363
    %2264 = vmatpush.msra.mxu0 %v355
    %2265 = vmatpush.msra.mxu0 %v347
    %2266 = vmatpush.msra.mxu0 %v339
    %2267 = vmatpush.msra.mxu0 %v331
    %2268 = vmatmul.f32.gmra.mxu0 %v62
    %v2269 = vpop.f32.mrf.mxu0
    %v2270 = vadd.f32 %v2250, %v2269
    %2271 = vdwg.mxu0
    %2272 = vmatpush.msra.mxu0 %v579
    %2273 = vmatpush.msra.mxu0 %v571
    %2274 = vmatpush.msra.mxu0 %v563
    %2275 = vmatpush.msra.mxu0 %v555
    %2276 = vmatpush.msra.mxu0 %v547
    %2277 = vmatpush.msra.mxu0 %v539
    %2278 = vmatpush.msra.mxu0 %v531
    %2279 = vmatpush.msra.mxu0 %v523
    %2280 = vmatpush.msra.mxu0 %v515
    %2281 = vmatpush.msra.mxu0 %v507
    %2282 = vmatpush.msra.mxu0 %v499
    %2283 = vmatpush.msra.mxu0 %v491
    %2284 = vmatpush.msra.mxu0 %v483
    %2285 = vmatpush.msra.mxu0 %v475
    %2286 = vmatpush.msra.mxu0 %v467
    %2287 = vmatpush.msra.mxu0 %v459
    %2288 = vmatmul.f32.gmra.mxu0 %v63
    %v2289 = vpop.f32.mrf.mxu0
    %v2290 = vadd.f32 %v2270, %v2289
    %2291 = vdwg.mxu0
    %2292 = vmatpush.msra.mxu0 %v707
    %2293 = vmatpush.msra.mxu0 %v699
    %2294 = vmatpush.msra.mxu0 %v691
    %2295 = vmatpush.msra.mxu0 %v683
    %2296 = vmatpush.msra.mxu0 %v675
    %2297 = vmatpush.msra.mxu0 %v667
    %2298 = vmatpush.msra.mxu0 %v659
    %2299 = vmatpush.msra.mxu0 %v651
    %2300 = vmatpush.msra.mxu0 %v643
    %2301 = vmatpush.msra.mxu0 %v635
    %2302 = vmatpush.msra.mxu0 %v627
    %2303 = vmatpush.msra.mxu0 %v619
    %2304 = vmatpush.msra.mxu0 %v611
    %2305 = vmatpush.msra.mxu0 %v603
    %2306 = vmatpush.msra.mxu0 %v595
    %2307 = vmatpush.msra.mxu0 %v587
    %2308 = vmatmul.f32.gmra.mxu0 %v64
    %v2309 = vpop.f32.mrf.mxu0
    %v2310 = vadd.f32 %v2290, %v2309
    %2311 = vdwg.mxu0
    %2312 = vmatpush.msra.mxu0 %v835
    %2313 = vmatpush.msra.mxu0 %v827
    %2314 = vmatpush.msra.mxu0 %v819
    %2315 = vmatpush.msra.mxu0 %v811
    %2316 = vmatpush.msra.mxu0 %v803
    %2317 = vmatpush.msra.mxu0 %v795
    %2318 = vmatpush.msra.mxu0 %v787
    %2319 = vmatpush.msra.mxu0 %v779
    %2320 = vmatpush.msra.mxu0 %v771
    %2321 = vmatpush.msra.mxu0 %v763
    %2322 = vmatpush.msra.mxu0 %v755
    %2323 = vmatpush.msra.mxu0 %v747
    %2324 = vmatpush.msra.mxu0 %v739
    %2325 = vmatpush.msra.mxu0 %v731
    %2326 = vmatpush.msra.mxu0 %v723
    %2327 = vmatpush.msra.mxu0 %v715
    %2328 = vmatmul.f32.gmra.mxu0 %v65
    %v2329 = vpop.f32.mrf.mxu0
    %v2330 = vadd.f32 %v2310, %v2329
    %2331 = vdwg.mxu0
    %2332 = vmatpush.msra.mxu0 %v963
    %2333 = vmatpush.msra.mxu0 %v955
    %2334 = vmatpush.msra.mxu0 %v947
    %2335 = vmatpush.msra.mxu0 %v939
    %2336 = vmatpush.msra.mxu0 %v931
    %2337 = vmatpush.msra.mxu0 %v923
    %2338 = vmatpush.msra.mxu0 %v915
    %2339 = vmatpush.msra.mxu0 %v907
    %2340 = vmatpush.msra.mxu0 %v899
    %2341 = vmatpush.msra.mxu0 %v891
    %2342 = vmatpush.msra.mxu0 %v883
    %2343 = vmatpush.msra.mxu0 %v875
    %2344 = vmatpush.msra.mxu0 %v867
    %2345 = vmatpush.msra.mxu0 %v859
    %2346 = vmatpush.msra.mxu0 %v851
    %2347 = vmatpush.msra.mxu0 %v843
    %2348 = vmatmul.f32.gmra.mxu0 %v66
    %v2349 = vpop.f32.mrf.mxu0
    %v2350 = vadd.f32 %v2330, %v2349
    %2351 = vdwg.mxu0
    %2352 = vmatpush.msra.mxu0 %v1091
    %2353 = vmatpush.msra.mxu0 %v1083
    %2354 = vmatpush.msra.mxu0 %v1075
    %2355 = vmatpush.msra.mxu0 %v1067
    %2356 = vmatpush.msra.mxu0 %v1059
    %2357 = vmatpush.msra.mxu0 %v1051
    %2358 = vmatpush.msra.mxu0 %v1043
    %2359 = vmatpush.msra.mxu0 %v1035
    %2360 = vmatpush.msra.mxu0 %v1027
    %2361 = vmatpush.msra.mxu0 %v1019
    %2362 = vmatpush.msra.mxu0 %v1011
    %2363 = vmatpush.msra.mxu0 %v1003
    %2364 = vmatpush.msra.mxu0 %v995
    %2365 = vmatpush.msra.mxu0 %v987
    %2366 = vmatpush.msra.mxu0 %v979
    %2367 = vmatpush.msra.mxu0 %v971
    %2368 = vmatmul.f32.gmra.mxu0 %v67
    %v2369 = vpop.f32.mrf.mxu0
    %v2370 = vadd.f32 %v2350, %v2369
    %2371 = vdwg.mxu0
    %v2372 = vmul.f32 %v1250, 0.5
    %v2373 = vmul.f32 %v1410, 0.5
    %v2374 = vmul.f32 %v1570, 0.5
    %v2375 = vmul.f32 %v1730, 0.5
    %v2376 = vmul.f32 %v1890, 0.5
    %v2377 = vmul.f32 %v2050, 0.5
    %v2378 = vmul.f32 %v2210, 0.5
    %v2379 = vmul.f32 %v2370, 0.5
    %v2380 = vmul.f32 %v1250, 0.70710677
    %v2381 = vmul.f32 %v1410, 0.70710677
    %v2382 = vmul.f32 %v1570, 0.70710677
    %v2383 = vmul.f32 %v1730, 0.70710677
    %v2384 = vmul.f32 %v1890, 0.70710677
    %v2385 = vmul.f32 %v2050, 0.70710677
    %v2386 = vmul.f32 %v2210, 0.70710677
    %v2387 = vmul.f32 %v2370, 0.70710677
    %v2388 = vmul.f32 %v2380, %v2380
    %v2389 = vmin.f32 16.0, %v2388
    %v2390 = vmul.f32 %v2389, 2.1237322e-06
    %v2391 = vadd.f32 %v2390, 0.00028619796
    %v2392 = vmul.f32 %v2389, %v2391
    %v2393 = vadd.f32 %v2392, 0.0036580483
    %v2394 = vmul.f32 %v2389, %v2393
    %v2395 = vadd.f32 %v2394, 0.05243302
    %v2396 = vmul.f32 %v2389, %v2395
    %v2397 = vadd.f32 %v2396, 0.18741608
    %v2398 = vmul.f32 %v2389, %v2397
    %v2399 = vadd.f32 %v2398, 1.1283791
    %v2400 = vmul.f32 %v2380, %v2399
    %v2401 = vmul.f32 %v2389, 3.8918573e-05
    %v2402 = vadd.f32 %v2401, 0.001143296
    %v2403 = vmul.f32 %v2389, %v2402
    %v2404 = vadd.f32 %v2403, 0.014752088
    %v2405 = vmul.f32 %v2389, %v2404
    %v2406 = vadd.f32 %v2405, 0.112945676
    %v2407 = vmul.f32 %v2389, %v2406
    %v2408 = vadd.f32 %v2407, 0.4994258
    %v2409 = vmul.f32 %v2389, %v2408
    %v2410 = vadd.f32 %v2409, 1.0
    %v2411 = vrcp.pop %v2410
    %v2412 = vmul.f32 %v2410, %v2411
    %v2413 = vsub.f32 1.0, %v2412
    %v2414 = vmul.f32 %v2411, %v2413
    %v2415 = vadd.f32 %v2411, %v2414
    %vm2416 = vweird.f32 %v2410
    %vm2417 = vweird.f32 %v2411
    %vm2418 = vmor %vm2416, %vm2417
    %v2419 = vsel %vm2418, %v2411, %v2415
    %v2420 = vand.u32 2147483647, %v2410
    %vm2421 = vcmp.eq.f32.partialorder %v2420, 8.507059e+37
    %v2422 = vand.u32 %v2410, 2147483648
    %v2423 = vor.u32 1.1754944e-38, %v2422
    %v2424 = vsel %vm2421, %v2423, %v2419
    %v2425 = vmul.f32 %v2400, %v2424
    %v2426 = vmin.f32 %v2425, 1.0
    %v2427 = vmax.f32 %v2426, -1.0
    %v2428 = vmul.f32 %v2381, %v2381
    %v2429 = vmin.f32 16.0, %v2428
    %v2430 = vmul.f32 %v2429, 2.1237322e-06
    %v2431 = vadd.f32 %v2430, 0.00028619796
    %v2432 = vmul.f32 %v2429, %v2431
    %v2433 = vadd.f32 %v2432, 0.0036580483
    %v2434 = vmul.f32 %v2429, %v2433
    %v2435 = vadd.f32 %v2434, 0.05243302
    %v2436 = vmul.f32 %v2429, %v2435
    %v2437 = vadd.f32 %v2436, 0.18741608
    %v2438 = vmul.f32 %v2429, %v2437
    %v2439 = vadd.f32 %v2438, 1.1283791
    %v2440 = vmul.f32 %v2381, %v2439
    %v2441 = vmul.f32 %v2429, 3.8918573e-05
    %v2442 = vadd.f32 %v2441, 0.001143296
    %v2443 = vmul.f32 %v2429, %v2442
    %v2444 = vadd.f32 %v2443, 0.014752088
    %v2445 = vmul.f32 %v2429, %v2444
    %v2446 = vadd.f32 %v2445, 0.112945676
    %v2447 = vmul.f32 %v2429, %v2446
    %v2448 = vadd.f32 %v2447, 0.4994258
    %v2449 = vmul.f32 %v2429, %v2448
    %v2450 = vadd.f32 %v2449, 1.0
    %v2451 = vrcp.pop %v2450
    %v2452 = vmul.f32 %v2450, %v2451
    %v2453 = vsub.f32 1.0, %v2452
    %v2454 = vmul.f32 %v2451, %v2453
    %v2455 = vadd.f32 %v2451, %v2454
    %vm2456 = vweird.f32 %v2450
    %vm2457 = vweird.f32 %v2451
    %vm2458 = vmor %vm2456, %vm2457
    %v2459 = vsel %vm2458, %v2451, %v2455
    %v2460 = vand.u32 2147483647, %v2450
    %vm2461 = vcmp.eq.f32.partialorder %v2460, 8.507059e+37
    %v2462 = vand.u32 %v2450, 2147483648
    %v2463 = vor.u32 1.1754944e-38, %v2462
    %v2464 = vsel %vm2461, %v2463, %v2459
    %v2465 = vmul.f32 %v2440, %v2464
    %v2466 = vmin.f32 %v2465, 1.0
    %v2467 = vmax.f32 %v2466, -1.0
    %v2468 = vmul.f32 %v2382, %v2382
    %v2469 = vmin.f32 16.0, %v2468
    %v2470 = vmul.f32 %v2469, 2.1237322e-06
    %v2471 = vadd.f32 %v2470, 0.00028619796
    %v2472 = vmul.f32 %v2469, %v2471
    %v2473 = vadd.f32 %v2472, 0.0036580483
    %v2474 = vmul.f32 %v2469, %v2473
    %v2475 = vadd.f32 %v2474, 0.05243302
    %v2476 = vmul.f32 %v2469, %v2475
    %v2477 = vadd.f32 %v2476, 0.18741608
    %v2478 = vmul.f32 %v2469, %v2477
    %v2479 = vadd.f32 %v2478, 1.1283791
    %v2480 = vmul.f32 %v2382, %v2479
    %v2481 = vmul.f32 %v2469, 3.8918573e-05
    %v2482 = vadd.f32 %v2481, 0.001143296
    %v2483 = vmul.f32 %v2469, %v2482
    %v2484 = vadd.f32 %v2483, 0.014752088
    %v2485 = vmul.f32 %v2469, %v2484
    %v2486 = vadd.f32 %v2485, 0.112945676
    %v2487 = vmul.f32 %v2469, %v2486
    %v2488 = vadd.f32 %v2487, 0.4994258
    %v2489 = vmul.f32 %v2469, %v2488
    %v2490 = vadd.f32 %v2489, 1.0
    %v2491 = vrcp.pop %v2490
    %v2492 = vmul.f32 %v2490, %v2491
    %v2493 = vsub.f32 1.0, %v2492
    %v2494 = vmul.f32 %v2491, %v2493
    %v2495 = vadd.f32 %v2491, %v2494
    %vm2496 = vweird.f32 %v2490
    %vm2497 = vweird.f32 %v2491
    %vm2498 = vmor %vm2496, %vm2497
    %v2499 = vsel %vm2498, %v2491, %v2495
    %v2500 = vand.u32 2147483647, %v2490
    %vm2501 = vcmp.eq.f32.partialorder %v2500, 8.507059e+37
    %v2502 = vand.u32 %v2490, 2147483648
    %v2503 = vor.u32 1.1754944e-38, %v2502
    %v2504 = vsel %vm2501, %v2503, %v2499
    %v2505 = vmul.f32 %v2480, %v2504
    %v2506 = vmin.f32 %v2505, 1.0
    %v2507 = vmax.f32 %v2506, -1.0
    %v2508 = vmul.f32 %v2383, %v2383
    %v2509 = vmin.f32 16.0, %v2508
    %v2510 = vmul.f32 %v2509, 2.1237322e-06
    %v2511 = vadd.f32 %v2510, 0.00028619796
    %v2512 = vmul.f32 %v2509, %v2511
    %v2513 = vadd.f32 %v2512, 0.0036580483
    %v2514 = vmul.f32 %v2509, %v2513
    %v2515 = vadd.f32 %v2514, 0.05243302
    %v2516 = vmul.f32 %v2509, %v2515
    %v2517 = vadd.f32 %v2516, 0.18741608
    %v2518 = vmul.f32 %v2509, %v2517
    %v2519 = vadd.f32 %v2518, 1.1283791
    %v2520 = vmul.f32 %v2383, %v2519
    %v2521 = vmul.f32 %v2509, 3.8918573e-05
    %v2522 = vadd.f32 %v2521, 0.001143296
    %v2523 = vmul.f32 %v2509, %v2522
    %v2524 = vadd.f32 %v2523, 0.014752088
    %v2525 = vmul.f32 %v2509, %v2524
    %v2526 = vadd.f32 %v2525, 0.112945676
    %v2527 = vmul.f32 %v2509, %v2526
    %v2528 = vadd.f32 %v2527, 0.4994258
    %v2529 = vmul.f32 %v2509, %v2528
    %v2530 = vadd.f32 %v2529, 1.0
    %v2531 = vrcp.pop %v2530
    %v2532 = vmul.f32 %v2530, %v2531
    %v2533 = vsub.f32 1.0, %v2532
    %v2534 = vmul.f32 %v2531, %v2533
    %v2535 = vadd.f32 %v2531, %v2534
    %vm2536 = vweird.f32 %v2530
    %vm2537 = vweird.f32 %v2531
    %vm2538 = vmor %vm2536, %vm2537
    %v2539 = vsel %vm2538, %v2531, %v2535
    %v2540 = vand.u32 2147483647, %v2530
    %vm2541 = vcmp.eq.f32.partialorder %v2540, 8.507059e+37
    %v2542 = vand.u32 %v2530, 2147483648
    %v2543 = vor.u32 1.1754944e-38, %v2542
    %v2544 = vsel %vm2541, %v2543, %v2539
    %v2545 = vmul.f32 %v2520, %v2544
    %v2546 = vmin.f32 %v2545, 1.0
    %v2547 = vmax.f32 %v2546, -1.0
    %v2548 = vmul.f32 %v2384, %v2384
    %v2549 = vmin.f32 16.0, %v2548
    %v2550 = vmul.f32 %v2549, 2.1237322e-06
    %v2551 = vadd.f32 %v2550, 0.00028619796
    %v2552 = vmul.f32 %v2549, %v2551
    %v2553 = vadd.f32 %v2552, 0.0036580483
    %v2554 = vmul.f32 %v2549, %v2553
    %v2555 = vadd.f32 %v2554, 0.05243302
    %v2556 = vmul.f32 %v2549, %v2555
    %v2557 = vadd.f32 %v2556, 0.18741608
    %v2558 = vmul.f32 %v2549, %v2557
    %v2559 = vadd.f32 %v2558, 1.1283791
    %v2560 = vmul.f32 %v2384, %v2559
    %v2561 = vmul.f32 %v2549, 3.8918573e-05
    %v2562 = vadd.f32 %v2561, 0.001143296
    %v2563 = vmul.f32 %v2549, %v2562
    %v2564 = vadd.f32 %v2563, 0.014752088
    %v2565 = vmul.f32 %v2549, %v2564
    %v2566 = vadd.f32 %v2565, 0.112945676
    %v2567 = vmul.f32 %v2549, %v2566
    %v2568 = vadd.f32 %v2567, 0.4994258
    %v2569 = vmul.f32 %v2549, %v2568
    %v2570 = vadd.f32 %v2569, 1.0
    %v2571 = vrcp.pop %v2570
    %v2572 = vmul.f32 %v2570, %v2571
    %v2573 = vsub.f32 1.0, %v2572
    %v2574 = vmul.f32 %v2571, %v2573
    %v2575 = vadd.f32 %v2571, %v2574
    %vm2576 = vweird.f32 %v2570
    %vm2577 = vweird.f32 %v2571
    %vm2578 = vmor %vm2576, %vm2577
    %v2579 = vsel %vm2578, %v2571, %v2575
    %v2580 = vand.u32 2147483647, %v2570
    %vm2581 = vcmp.eq.f32.partialorder %v2580, 8.507059e+37
    %v2582 = vand.u32 %v2570, 2147483648
    %v2583 = vor.u32 1.1754944e-38, %v2582
    %v2584 = vsel %vm2581, %v2583, %v2579
    %v2585 = vmul.f32 %v2560, %v2584
    %v2586 = vmin.f32 %v2585, 1.0
    %v2587 = vmax.f32 %v2586, -1.0
    %v2588 = vmul.f32 %v2385, %v2385
    %v2589 = vmin.f32 16.0, %v2588
    %v2590 = vmul.f32 %v2589, 2.1237322e-06
    %v2591 = vadd.f32 %v2590, 0.00028619796
    %v2592 = vmul.f32 %v2589, %v2591
    %v2593 = vadd.f32 %v2592, 0.0036580483
    %v2594 = vmul.f32 %v2589, %v2593
    %v2595 = vadd.f32 %v2594, 0.05243302
    %v2596 = vmul.f32 %v2589, %v2595
    %v2597 = vadd.f32 %v2596, 0.18741608
    %v2598 = vmul.f32 %v2589, %v2597
    %v2599 = vadd.f32 %v2598, 1.1283791
    %v2600 = vmul.f32 %v2385, %v2599
    %v2601 = vmul.f32 %v2589, 3.8918573e-05
    %v2602 = vadd.f32 %v2601, 0.001143296
    %v2603 = vmul.f32 %v2589, %v2602
    %v2604 = vadd.f32 %v2603, 0.014752088
    %v2605 = vmul.f32 %v2589, %v2604
    %v2606 = vadd.f32 %v2605, 0.112945676
    %v2607 = vmul.f32 %v2589, %v2606
    %v2608 = vadd.f32 %v2607, 0.4994258
    %v2609 = vmul.f32 %v2589, %v2608
    %v2610 = vadd.f32 %v2609, 1.0
    %v2611 = vrcp.pop %v2610
    %v2612 = vmul.f32 %v2610, %v2611
    %v2613 = vsub.f32 1.0, %v2612
    %v2614 = vmul.f32 %v2611, %v2613
    %v2615 = vadd.f32 %v2611, %v2614
    %vm2616 = vweird.f32 %v2610
    %vm2617 = vweird.f32 %v2611
    %vm2618 = vmor %vm2616, %vm2617
    %v2619 = vsel %vm2618, %v2611, %v2615
    %v2620 = vand.u32 2147483647, %v2610
    %vm2621 = vcmp.eq.f32.partialorder %v2620, 8.507059e+37
    %v2622 = vand.u32 %v2610, 2147483648
    %v2623 = vor.u32 1.1754944e-38, %v2622
    %v2624 = vsel %vm2621, %v2623, %v2619
    %v2625 = vmul.f32 %v2600, %v2624
    %v2626 = vmin.f32 %v2625, 1.0
    %v2627 = vmax.f32 %v2626, -1.0
    %v2628 = vmul.f32 %v2386, %v2386
    %v2629 = vmin.f32 16.0, %v2628
    %v2630 = vmul.f32 %v2629, 2.1237322e-06
    %v2631 = vadd.f32 %v2630, 0.00028619796
    %v2632 = vmul.f32 %v2629, %v2631
    %v2633 = vadd.f32 %v2632, 0.0036580483
    %v2634 = vmul.f32 %v2629, %v2633
    %v2635 = vadd.f32 %v2634, 0.05243302
    %v2636 = vmul.f32 %v2629, %v2635
    %v2637 = vadd.f32 %v2636, 0.18741608
    %v2638 = vmul.f32 %v2629, %v2637
    %v2639 = vadd.f32 %v2638, 1.1283791
    %v2640 = vmul.f32 %v2386, %v2639
    %v2641 = vmul.f32 %v2629, 3.8918573e-05
    %v2642 = vadd.f32 %v2641, 0.001143296
    %v2643 = vmul.f32 %v2629, %v2642
    %v2644 = vadd.f32 %v2643, 0.014752088
    %v2645 = vmul.f32 %v2629, %v2644
    %v2646 = vadd.f32 %v2645, 0.112945676
    %v2647 = vmul.f32 %v2629, %v2646
    %v2648 = vadd.f32 %v2647, 0.4994258
    %v2649 = vmul.f32 %v2629, %v2648
    %v2650 = vadd.f32 %v2649, 1.0
    %v2651 = vrcp.pop %v2650
    %v2652 = vmul.f32 %v2650, %v2651
    %v2653 = vsub.f32 1.0, %v2652
    %v2654 = vmul.f32 %v2651, %v2653
    %v2655 = vadd.f32 %v2651, %v2654
    %vm2656 = vweird.f32 %v2650
    %vm2657 = vweird.f32 %v2651
    %vm2658 = vmor %vm2656, %vm2657
    %v2659 = vsel %vm2658, %v2651, %v2655
    %v2660 = vand.u32 2147483647, %v2650
    %vm2661 = vcmp.eq.f32.partialorder %v2660, 8.507059e+37
    %v2662 = vand.u32 %v2650, 2147483648
    %v2663 = vor.u32 1.1754944e-38, %v2662
    %v2664 = vsel %vm2661, %v2663, %v2659
    %v2665 = vmul.f32 %v2640, %v2664
    %v2666 = vmin.f32 %v2665, 1.0
    %v2667 = vmax.f32 %v2666, -1.0
    %v2668 = vmul.f32 %v2387, %v2387
    %v2669 = vmin.f32 16.0, %v2668
    %v2670 = vmul.f32 %v2669, 2.1237322e-06
    %v2671 = vadd.f32 %v2670, 0.00028619796
    %v2672 = vmul.f32 %v2669, %v2671
    %v2673 = vadd.f32 %v2672, 0.0036580483
    %v2674 = vmul.f32 %v2669, %v2673
    %v2675 = vadd.f32 %v2674, 0.05243302
    %v2676 = vmul.f32 %v2669, %v2675
    %v2677 = vadd.f32 %v2676, 0.18741608
    %v2678 = vmul.f32 %v2669, %v2677
    %v2679 = vadd.f32 %v2678, 1.1283791
    %v2680 = vmul.f32 %v2387, %v2679
    %v2681 = vmul.f32 %v2669, 3.8918573e-05
    %v2682 = vadd.f32 %v2681, 0.001143296
    %v2683 = vmul.f32 %v2669, %v2682
    %v2684 = vadd.f32 %v2683, 0.014752088
    %v2685 = vmul.f32 %v2669, %v2684
    %v2686 = vadd.f32 %v2685, 0.112945676
    %v2687 = vmul.f32 %v2669, %v2686
    %v2688 = vadd.f32 %v2687, 0.4994258
    %v2689 = vmul.f32 %v2669, %v2688
    %v2690 = vadd.f32 %v2689, 1.0
    %v2691 = vrcp.pop %v2690
    %v2692 = vmul.f32 %v2690, %v2691
    %v2693 = vsub.f32 1.0, %v2692
    %v2694 = vmul.f32 %v2691, %v2693
    %v2695 = vadd.f32 %v2691, %v2694
    %vm2696 = vweird.f32 %v2690
    %vm2697 = vweird.f32 %v2691
    %vm2698 = vmor %vm2696, %vm2697
    %v2699 = vsel %vm2698, %v2691, %v2695
    %v2700 = vand.u32 2147483647, %v2690
    %vm2701 = vcmp.eq.f32.partialorder %v2700, 8.507059e+37
    %v2702 = vand.u32 %v2690, 2147483648
    %v2703 = vor.u32 1.1754944e-38, %v2702
    %v2704 = vsel %vm2701, %v2703, %v2699
    %v2705 = vmul.f32 %v2680, %v2704
    %v2706 = vmin.f32 %v2705, 1.0
    %v2707 = vmax.f32 %v2706, -1.0
    %v2708 = vadd.f32 %v2427, 1.0
    %v2709 = vadd.f32 %v2467, 1.0
    %v2710 = vadd.f32 %v2507, 1.0
    %v2711 = vadd.f32 %v2547, 1.0
    %v2712 = vadd.f32 %v2587, 1.0
    %v2713 = vadd.f32 %v2627, 1.0
    %v2714 = vadd.f32 %v2667, 1.0
    %v2715 = vadd.f32 %v2707, 1.0
    %v2716 = vmul.f32 %v2372, %v2708
    %v2717 = vmul.f32 %v2373, %v2709
    %v2718 = vmul.f32 %v2374, %v2710
    %v2719 = vmul.f32 %v2375, %v2711
    %v2720 = vmul.f32 %v2376, %v2712
    %v2721 = vmul.f32 %v2377, %v2713
    %v2722 = vmul.f32 %v2378, %v2714
    %v2723 = vmul.f32 %v2379, %v2715
    %v2724 = vld [vmem:[#allocation7] sm:$0xff]
    %v2725 = vld [vmem:[#allocation7 + $0x8] sm:$0xff]
    %v2726 = vld [vmem:[#allocation7 + $0x10] sm:$0xff]
    %v2727 = vld [vmem:[#allocation7 + $0x18] sm:$0xff]
    %v2728 = vld [vmem:[#allocation7 + $0x20] sm:$0xff]
    %v2729 = vld [vmem:[#allocation7 + $0x28] sm:$0xff]
    %v2730 = vld [vmem:[#allocation7 + $0x30] sm:$0xff]
    %v2731 = vld [vmem:[#allocation7 + $0x38] sm:$0xff]
    %v2732 = vld [vmem:[#allocation7 + $0x40] sm:$0xff]
    %v2733 = vld [vmem:[#allocation7 + $0x48] sm:$0xff]
    %v2734 = vld [vmem:[#allocation7 + $0x50] sm:$0xff]
    %v2735 = vld [vmem:[#allocation7 + $0x58] sm:$0xff]
    %v2736 = vld [vmem:[#allocation7 + $0x60] sm:$0xff]
    %v2737 = vld [vmem:[#allocation7 + $0x68] sm:$0xff]
    %v2738 = vld [vmem:[#allocation7 + $0x70] sm:$0xff]
    %v2739 = vld [vmem:[#allocation7 + $0x78] sm:$0xff]
    %v2740 = vld [vmem:[#allocation7 + $0x80] sm:$0xff]
    %v2741 = vld [vmem:[#allocation7 + $0x88] sm:$0xff]
    %v2742 = vld [vmem:[#allocation7 + $0x90] sm:$0xff]
    %v2743 = vld [vmem:[#allocation7 + $0x98] sm:$0xff]
    %v2744 = vld [vmem:[#allocation7 + $0xa0] sm:$0xff]
    %v2745 = vld [vmem:[#allocation7 + $0xa8] sm:$0xff]
    %v2746 = vld [vmem:[#allocation7 + $0xb0] sm:$0xff]
    %v2747 = vld [vmem:[#allocation7 + $0xb8] sm:$0xff]
    %v2748 = vld [vmem:[#allocation7 + $0xc0] sm:$0xff]
    %v2749 = vld [vmem:[#allocation7 + $0xc8] sm:$0xff]
    %v2750 = vld [vmem:[#allocation7 + $0xd0] sm:$0xff]
    %v2751 = vld [vmem:[#allocation7 + $0xd8] sm:$0xff]
    %v2752 = vld [vmem:[#allocation7 + $0xe0] sm:$0xff]
    %v2753 = vld [vmem:[#allocation7 + $0xe8] sm:$0xff]
    %v2754 = vld [vmem:[#allocation7 + $0xf0] sm:$0xff]
    %v2755 = vld [vmem:[#allocation7 + $0xf8] sm:$0xff]
    %v2756 = vld [vmem:[#allocation7 + $0x100] sm:$0xff]
    %v2757 = vld [vmem:[#allocation7 + $0x108] sm:$0xff]
    %v2758 = vld [vmem:[#allocation7 + $0x110] sm:$0xff]
    %v2759 = vld [vmem:[#allocation7 + $0x118] sm:$0xff]
    %v2760 = vld [vmem:[#allocation7 + $0x120] sm:$0xff]
    %v2761 = vld [vmem:[#allocation7 + $0x128] sm:$0xff]
    %v2762 = vld [vmem:[#allocation7 + $0x130] sm:$0xff]
    %v2763 = vld [vmem:[#allocation7 + $0x138] sm:$0xff]
    %v2764 = vld [vmem:[#allocation7 + $0x140] sm:$0xff]
    %v2765 = vld [vmem:[#allocation7 + $0x148] sm:$0xff]
    %v2766 = vld [vmem:[#allocation7 + $0x150] sm:$0xff]
    %v2767 = vld [vmem:[#allocation7 + $0x158] sm:$0xff]
    %v2768 = vld [vmem:[#allocation7 + $0x160] sm:$0xff]
    %v2769 = vld [vmem:[#allocation7 + $0x168] sm:$0xff]
    %v2770 = vld [vmem:[#allocation7 + $0x170] sm:$0xff]
    %v2771 = vld [vmem:[#allocation7 + $0x178] sm:$0xff]
    %v2772 = vld [vmem:[#allocation7 + $0x180] sm:$0xff]
    %v2773 = vld [vmem:[#allocation7 + $0x188] sm:$0xff]
    %v2774 = vld [vmem:[#allocation7 + $0x190] sm:$0xff]
    %v2775 = vld [vmem:[#allocation7 + $0x198] sm:$0xff]
    %v2776 = vld [vmem:[#allocation7 + $0x1a0] sm:$0xff]
    %v2777 = vld [vmem:[#allocation7 + $0x1a8] sm:$0xff]
    %v2778 = vld [vmem:[#allocation7 + $0x1b0] sm:$0xff]
    %v2779 = vld [vmem:[#allocation7 + $0x1b8] sm:$0xff]
    %v2780 = vld [vmem:[#allocation7 + $0x1c0] sm:$0xff]
    %v2781 = vld [vmem:[#allocation7 + $0x1c8] sm:$0xff]
    %v2782 = vld [vmem:[#allocation7 + $0x1d0] sm:$0xff]
    %v2783 = vld [vmem:[#allocation7 + $0x1d8] sm:$0xff]
    %v2784 = vld [vmem:[#allocation7 + $0x1e0] sm:$0xff]
    %v2785 = vld [vmem:[#allocation7 + $0x1e8] sm:$0xff]
    %v2786 = vld [vmem:[#allocation7 + $0x1f0] sm:$0xff]
    %v2787 = vld [vmem:[#allocation7 + $0x1f8] sm:$0xff]
    %v2788 = vld [vmem:[#allocation7 + $0x200] sm:$0xff]
    %v2789 = vld [vmem:[#allocation7 + $0x208] sm:$0xff]
    %v2790 = vld [vmem:[#allocation7 + $0x210] sm:$0xff]
    %v2791 = vld [vmem:[#allocation7 + $0x218] sm:$0xff]
    %v2792 = vld [vmem:[#allocation7 + $0x220] sm:$0xff]
    %v2793 = vld [vmem:[#allocation7 + $0x228] sm:$0xff]
    %v2794 = vld [vmem:[#allocation7 + $0x230] sm:$0xff]
    %v2795 = vld [vmem:[#allocation7 + $0x238] sm:$0xff]
    %v2796 = vld [vmem:[#allocation7 + $0x240] sm:$0xff]
    %v2797 = vld [vmem:[#allocation7 + $0x248] sm:$0xff]
    %v2798 = vld [vmem:[#allocation7 + $0x250] sm:$0xff]
    %v2799 = vld [vmem:[#allocation7 + $0x258] sm:$0xff]
    %v2800 = vld [vmem:[#allocation7 + $0x260] sm:$0xff]
    %v2801 = vld [vmem:[#allocation7 + $0x268] sm:$0xff]
    %v2802 = vld [vmem:[#allocation7 + $0x270] sm:$0xff]
    %v2803 = vld [vmem:[#allocation7 + $0x278] sm:$0xff]
    %v2804 = vld [vmem:[#allocation7 + $0x280] sm:$0xff]
    %v2805 = vld [vmem:[#allocation7 + $0x288] sm:$0xff]
    %v2806 = vld [vmem:[#allocation7 + $0x290] sm:$0xff]
    %v2807 = vld [vmem:[#allocation7 + $0x298] sm:$0xff]
    %v2808 = vld [vmem:[#allocation7 + $0x2a0] sm:$0xff]
    %v2809 = vld [vmem:[#allocation7 + $0x2a8] sm:$0xff]
    %v2810 = vld [vmem:[#allocation7 + $0x2b0] sm:$0xff]
    %v2811 = vld [vmem:[#allocation7 + $0x2b8] sm:$0xff]
    %v2812 = vld [vmem:[#allocation7 + $0x2c0] sm:$0xff]
    %v2813 = vld [vmem:[#allocation7 + $0x2c8] sm:$0xff]
    %v2814 = vld [vmem:[#allocation7 + $0x2d0] sm:$0xff]
    %v2815 = vld [vmem:[#allocation7 + $0x2d8] sm:$0xff]
    %v2816 = vld [vmem:[#allocation7 + $0x2e0] sm:$0xff]
    %v2817 = vld [vmem:[#allocation7 + $0x2e8] sm:$0xff]
    %v2818 = vld [vmem:[#allocation7 + $0x2f0] sm:$0xff]
    %v2819 = vld [vmem:[#allocation7 + $0x2f8] sm:$0xff]
    %v2820 = vld [vmem:[#allocation7 + $0x300] sm:$0xff]
    %v2821 = vld [vmem:[#allocation7 + $0x308] sm:$0xff]
    %v2822 = vld [vmem:[#allocation7 + $0x310] sm:$0xff]
    %v2823 = vld [vmem:[#allocation7 + $0x318] sm:$0xff]
    %v2824 = vld [vmem:[#allocation7 + $0x320] sm:$0xff]
    %v2825 = vld [vmem:[#allocation7 + $0x328] sm:$0xff]
    %v2826 = vld [vmem:[#allocation7 + $0x330] sm:$0xff]
    %v2827 = vld [vmem:[#allocation7 + $0x338] sm:$0xff]
    %v2828 = vld [vmem:[#allocation7 + $0x340] sm:$0xff]
    %v2829 = vld [vmem:[#allocation7 + $0x348] sm:$0xff]
    %v2830 = vld [vmem:[#allocation7 + $0x350] sm:$0xff]
    %v2831 = vld [vmem:[#allocation7 + $0x358] sm:$0xff]
    %v2832 = vld [vmem:[#allocation7 + $0x360] sm:$0xff]
    %v2833 = vld [vmem:[#allocation7 + $0x368] sm:$0xff]
    %v2834 = vld [vmem:[#allocation7 + $0x370] sm:$0xff]
    %v2835 = vld [vmem:[#allocation7 + $0x378] sm:$0xff]
    %v2836 = vld [vmem:[#allocation7 + $0x380] sm:$0xff]
    %v2837 = vld [vmem:[#allocation7 + $0x388] sm:$0xff]
    %v2838 = vld [vmem:[#allocation7 + $0x390] sm:$0xff]
    %v2839 = vld [vmem:[#allocation7 + $0x398] sm:$0xff]
    %v2840 = vld [vmem:[#allocation7 + $0x3a0] sm:$0xff]
    %v2841 = vld [vmem:[#allocation7 + $0x3a8] sm:$0xff]
    %v2842 = vld [vmem:[#allocation7 + $0x3b0] sm:$0xff]
    %v2843 = vld [vmem:[#allocation7 + $0x3b8] sm:$0xff]
    %v2844 = vld [vmem:[#allocation7 + $0x3c0] sm:$0xff]
    %v2845 = vld [vmem:[#allocation7 + $0x3c8] sm:$0xff]
    %v2846 = vld [vmem:[#allocation7 + $0x3d0] sm:$0xff]
    %v2847 = vld [vmem:[#allocation7 + $0x3d8] sm:$0xff]
    %v2848 = vld [vmem:[#allocation7 + $0x3e0] sm:$0xff]
    %v2849 = vld [vmem:[#allocation7 + $0x3e8] sm:$0xff]
    %v2850 = vld [vmem:[#allocation7 + $0x3f0] sm:$0xff]
    %v2851 = vld [vmem:[#allocation7 + $0x3f8] sm:$0xff]
    %v2852 = vld [vmem:[#allocation7 + $0x400] sm:$0xff]
    %v2853 = vld [vmem:[#allocation7 + $0x408] sm:$0xff]
    %v2854 = vld [vmem:[#allocation7 + $0x410] sm:$0xff]
    %v2855 = vld [vmem:[#allocation7 + $0x418] sm:$0xff]
    %v2856 = vld [vmem:[#allocation7 + $0x420] sm:$0xff]
    %v2857 = vld [vmem:[#allocation7 + $0x428] sm:$0xff]
    %v2858 = vld [vmem:[#allocation7 + $0x430] sm:$0xff]
    %v2859 = vld [vmem:[#allocation7 + $0x438] sm:$0xff]
    %v2860 = vld [vmem:[#allocation7 + $0x440] sm:$0xff]
    %v2861 = vld [vmem:[#allocation7 + $0x448] sm:$0xff]
    %v2862 = vld [vmem:[#allocation7 + $0x450] sm:$0xff]
    %v2863 = vld [vmem:[#allocation7 + $0x458] sm:$0xff]
    %v2864 = vld [vmem:[#allocation7 + $0x460] sm:$0xff]
    %v2865 = vld [vmem:[#allocation7 + $0x468] sm:$0xff]
    %v2866 = vld [vmem:[#allocation7 + $0x470] sm:$0xff]
    %v2867 = vld [vmem:[#allocation7 + $0x478] sm:$0xff]
    %v2868 = vld [vmem:[#allocation7 + $0x480] sm:$0xff]
    %v2869 = vld [vmem:[#allocation7 + $0x488] sm:$0xff]
    %v2870 = vld [vmem:[#allocation7 + $0x490] sm:$0xff]
    %v2871 = vld [vmem:[#allocation7 + $0x498] sm:$0xff]
    %v2872 = vld [vmem:[#allocation7 + $0x4a0] sm:$0xff]
    %v2873 = vld [vmem:[#allocation7 + $0x4a8] sm:$0xff]
    %v2874 = vld [vmem:[#allocation7 + $0x4b0] sm:$0xff]
    %v2875 = vld [vmem:[#allocation7 + $0x4b8] sm:$0xff]
    %v2876 = vld [vmem:[#allocation7 + $0x4c0] sm:$0xff]
    %v2877 = vld [vmem:[#allocation7 + $0x4c8] sm:$0xff]
    %v2878 = vld [vmem:[#allocation7 + $0x4d0] sm:$0xff]
    %v2879 = vld [vmem:[#allocation7 + $0x4d8] sm:$0xff]
    %v2880 = vld [vmem:[#allocation7 + $0x4e0] sm:$0xff]
    %v2881 = vld [vmem:[#allocation7 + $0x4e8] sm:$0xff]
    %v2882 = vld [vmem:[#allocation7 + $0x4f0] sm:$0xff]
    %v2883 = vld [vmem:[#allocation7 + $0x4f8] sm:$0xff]
    %v2884 = vld [vmem:[#allocation7 + $0x500] sm:$0xff]
    %v2885 = vld [vmem:[#allocation7 + $0x508] sm:$0xff]
    %v2886 = vld [vmem:[#allocation7 + $0x510] sm:$0xff]
    %v2887 = vld [vmem:[#allocation7 + $0x518] sm:$0xff]
    %v2888 = vld [vmem:[#allocation7 + $0x520] sm:$0xff]
    %v2889 = vld [vmem:[#allocation7 + $0x528] sm:$0xff]
    %v2890 = vld [vmem:[#allocation7 + $0x530] sm:$0xff]
    %v2891 = vld [vmem:[#allocation7 + $0x538] sm:$0xff]
    %v2892 = vld [vmem:[#allocation7 + $0x540] sm:$0xff]
    %v2893 = vld [vmem:[#allocation7 + $0x548] sm:$0xff]
    %v2894 = vld [vmem:[#allocation7 + $0x550] sm:$0xff]
    %v2895 = vld [vmem:[#allocation7 + $0x558] sm:$0xff]
    %v2896 = vld [vmem:[#allocation7 + $0x560] sm:$0xff]
    %v2897 = vld [vmem:[#allocation7 + $0x568] sm:$0xff]
    %v2898 = vld [vmem:[#allocation7 + $0x570] sm:$0xff]
    %v2899 = vld [vmem:[#allocation7 + $0x578] sm:$0xff]
    %v2900 = vld [vmem:[#allocation7 + $0x580] sm:$0xff]
    %v2901 = vld [vmem:[#allocation7 + $0x588] sm:$0xff]
    %v2902 = vld [vmem:[#allocation7 + $0x590] sm:$0xff]
    %v2903 = vld [vmem:[#allocation7 + $0x598] sm:$0xff]
    %v2904 = vld [vmem:[#allocation7 + $0x5a0] sm:$0xff]
    %v2905 = vld [vmem:[#allocation7 + $0x5a8] sm:$0xff]
    %v2906 = vld [vmem:[#allocation7 + $0x5b0] sm:$0xff]
    %v2907 = vld [vmem:[#allocation7 + $0x5b8] sm:$0xff]
    %v2908 = vld [vmem:[#allocation7 + $0x5c0] sm:$0xff]
    %v2909 = vld [vmem:[#allocation7 + $0x5c8] sm:$0xff]
    %v2910 = vld [vmem:[#allocation7 + $0x5d0] sm:$0xff]
    %v2911 = vld [vmem:[#allocation7 + $0x5d8] sm:$0xff]
    %v2912 = vld [vmem:[#allocation7 + $0x5e0] sm:$0xff]
    %v2913 = vld [vmem:[#allocation7 + $0x5e8] sm:$0xff]
    %v2914 = vld [vmem:[#allocation7 + $0x5f0] sm:$0xff]
    %v2915 = vld [vmem:[#allocation7 + $0x5f8] sm:$0xff]
    %v2916 = vld [vmem:[#allocation7 + $0x600] sm:$0xff]
    %v2917 = vld [vmem:[#allocation7 + $0x608] sm:$0xff]
    %v2918 = vld [vmem:[#allocation7 + $0x610] sm:$0xff]
    %v2919 = vld [vmem:[#allocation7 + $0x618] sm:$0xff]
    %v2920 = vld [vmem:[#allocation7 + $0x620] sm:$0xff]
    %v2921 = vld [vmem:[#allocation7 + $0x628] sm:$0xff]
    %v2922 = vld [vmem:[#allocation7 + $0x630] sm:$0xff]
    %v2923 = vld [vmem:[#allocation7 + $0x638] sm:$0xff]
    %v2924 = vld [vmem:[#allocation7 + $0x640] sm:$0xff]
    %v2925 = vld [vmem:[#allocation7 + $0x648] sm:$0xff]
    %v2926 = vld [vmem:[#allocation7 + $0x650] sm:$0xff]
    %v2927 = vld [vmem:[#allocation7 + $0x658] sm:$0xff]
    %v2928 = vld [vmem:[#allocation7 + $0x660] sm:$0xff]
    %v2929 = vld [vmem:[#allocation7 + $0x668] sm:$0xff]
    %v2930 = vld [vmem:[#allocation7 + $0x670] sm:$0xff]
    %v2931 = vld [vmem:[#allocation7 + $0x678] sm:$0xff]
    %v2932 = vld [vmem:[#allocation7 + $0x680] sm:$0xff]
    %v2933 = vld [vmem:[#allocation7 + $0x688] sm:$0xff]
    %v2934 = vld [vmem:[#allocation7 + $0x690] sm:$0xff]
    %v2935 = vld [vmem:[#allocation7 + $0x698] sm:$0xff]
    %v2936 = vld [vmem:[#allocation7 + $0x6a0] sm:$0xff]
    %v2937 = vld [vmem:[#allocation7 + $0x6a8] sm:$0xff]
    %v2938 = vld [vmem:[#allocation7 + $0x6b0] sm:$0xff]
    %v2939 = vld [vmem:[#allocation7 + $0x6b8] sm:$0xff]
    %v2940 = vld [vmem:[#allocation7 + $0x6c0] sm:$0xff]
    %v2941 = vld [vmem:[#allocation7 + $0x6c8] sm:$0xff]
    %v2942 = vld [vmem:[#allocation7 + $0x6d0] sm:$0xff]
    %v2943 = vld [vmem:[#allocation7 + $0x6d8] sm:$0xff]
    %v2944 = vld [vmem:[#allocation7 + $0x6e0] sm:$0xff]
    %v2945 = vld [vmem:[#allocation7 + $0x6e8] sm:$0xff]
    %v2946 = vld [vmem:[#allocation7 + $0x6f0] sm:$0xff]
    %v2947 = vld [vmem:[#allocation7 + $0x6f8] sm:$0xff]
    %v2948 = vld [vmem:[#allocation7 + $0x700] sm:$0xff]
    %v2949 = vld [vmem:[#allocation7 + $0x708] sm:$0xff]
    %v2950 = vld [vmem:[#allocation7 + $0x710] sm:$0xff]
    %v2951 = vld [vmem:[#allocation7 + $0x718] sm:$0xff]
    %v2952 = vld [vmem:[#allocation7 + $0x720] sm:$0xff]
    %v2953 = vld [vmem:[#allocation7 + $0x728] sm:$0xff]
    %v2954 = vld [vmem:[#allocation7 + $0x730] sm:$0xff]
    %v2955 = vld [vmem:[#allocation7 + $0x738] sm:$0xff]
    %v2956 = vld [vmem:[#allocation7 + $0x740] sm:$0xff]
    %v2957 = vld [vmem:[#allocation7 + $0x748] sm:$0xff]
    %v2958 = vld [vmem:[#allocation7 + $0x750] sm:$0xff]
    %v2959 = vld [vmem:[#allocation7 + $0x758] sm:$0xff]
    %v2960 = vld [vmem:[#allocation7 + $0x760] sm:$0xff]
    %v2961 = vld [vmem:[#allocation7 + $0x768] sm:$0xff]
    %v2962 = vld [vmem:[#allocation7 + $0x770] sm:$0xff]
    %v2963 = vld [vmem:[#allocation7 + $0x778] sm:$0xff]
    %v2964 = vld [vmem:[#allocation7 + $0x780] sm:$0xff]
    %v2965 = vld [vmem:[#allocation7 + $0x788] sm:$0xff]
    %v2966 = vld [vmem:[#allocation7 + $0x790] sm:$0xff]
    %v2967 = vld [vmem:[#allocation7 + $0x798] sm:$0xff]
    %v2968 = vld [vmem:[#allocation7 + $0x7a0] sm:$0xff]
    %v2969 = vld [vmem:[#allocation7 + $0x7a8] sm:$0xff]
    %v2970 = vld [vmem:[#allocation7 + $0x7b0] sm:$0xff]
    %v2971 = vld [vmem:[#allocation7 + $0x7b8] sm:$0xff]
    %v2972 = vld [vmem:[#allocation7 + $0x7c0] sm:$0xff]
    %v2973 = vld [vmem:[#allocation7 + $0x7c8] sm:$0xff]
    %v2974 = vld [vmem:[#allocation7 + $0x7d0] sm:$0xff]
    %v2975 = vld [vmem:[#allocation7 + $0x7d8] sm:$0xff]
    %v2976 = vld [vmem:[#allocation7 + $0x7e0] sm:$0xff]
    %v2977 = vld [vmem:[#allocation7 + $0x7e8] sm:$0xff]
    %v2978 = vld [vmem:[#allocation7 + $0x7f0] sm:$0xff]
    %v2979 = vld [vmem:[#allocation7 + $0x7f8] sm:$0xff]
    %v2980 = vld [vmem:[#allocation7 + $0x800] sm:$0xff]
    %v2981 = vld [vmem:[#allocation7 + $0x808] sm:$0xff]
    %v2982 = vld [vmem:[#allocation7 + $0x810] sm:$0xff]
    %v2983 = vld [vmem:[#allocation7 + $0x818] sm:$0xff]
    %v2984 = vld [vmem:[#allocation7 + $0x820] sm:$0xff]
    %v2985 = vld [vmem:[#allocation7 + $0x828] sm:$0xff]
    %v2986 = vld [vmem:[#allocation7 + $0x830] sm:$0xff]
    %v2987 = vld [vmem:[#allocation7 + $0x838] sm:$0xff]
    %v2988 = vld [vmem:[#allocation7 + $0x840] sm:$0xff]
    %v2989 = vld [vmem:[#allocation7 + $0x848] sm:$0xff]
    %v2990 = vld [vmem:[#allocation7 + $0x850] sm:$0xff]
    %v2991 = vld [vmem:[#allocation7 + $0x858] sm:$0xff]
    %v2992 = vld [vmem:[#allocation7 + $0x860] sm:$0xff]
    %v2993 = vld [vmem:[#allocation7 + $0x868] sm:$0xff]
    %v2994 = vld [vmem:[#allocation7 + $0x870] sm:$0xff]
    %v2995 = vld [vmem:[#allocation7 + $0x878] sm:$0xff]
    %v2996 = vld [vmem:[#allocation7 + $0x880] sm:$0xff]
    %v2997 = vld [vmem:[#allocation7 + $0x888] sm:$0xff]
    %v2998 = vld [vmem:[#allocation7 + $0x890] sm:$0xff]
    %v2999 = vld [vmem:[#allocation7 + $0x898] sm:$0xff]
    %v3000 = vld [vmem:[#allocation7 + $0x8a0] sm:$0xff]
    %v3001 = vld [vmem:[#allocation7 + $0x8a8] sm:$0xff]
    %v3002 = vld [vmem:[#allocation7 + $0x8b0] sm:$0xff]
    %v3003 = vld [vmem:[#allocation7 + $0x8b8] sm:$0xff]
    %v3004 = vld [vmem:[#allocation7 + $0x8c0] sm:$0xff]
    %v3005 = vld [vmem:[#allocation7 + $0x8c8] sm:$0xff]
    %v3006 = vld [vmem:[#allocation7 + $0x8d0] sm:$0xff]
    %v3007 = vld [vmem:[#allocation7 + $0x8d8] sm:$0xff]
    %v3008 = vld [vmem:[#allocation7 + $0x8e0] sm:$0xff]
    %v3009 = vld [vmem:[#allocation7 + $0x8e8] sm:$0xff]
    %v3010 = vld [vmem:[#allocation7 + $0x8f0] sm:$0xff]
    %v3011 = vld [vmem:[#allocation7 + $0x8f8] sm:$0xff]
    %v3012 = vld [vmem:[#allocation7 + $0x900] sm:$0xff]
    %v3013 = vld [vmem:[#allocation7 + $0x908] sm:$0xff]
    %v3014 = vld [vmem:[#allocation7 + $0x910] sm:$0xff]
    %v3015 = vld [vmem:[#allocation7 + $0x918] sm:$0xff]
    %v3016 = vld [vmem:[#allocation7 + $0x920] sm:$0xff]
    %v3017 = vld [vmem:[#allocation7 + $0x928] sm:$0xff]
    %v3018 = vld [vmem:[#allocation7 + $0x930] sm:$0xff]
    %v3019 = vld [vmem:[#allocation7 + $0x938] sm:$0xff]
    %v3020 = vld [vmem:[#allocation7 + $0x940] sm:$0xff]
    %v3021 = vld [vmem:[#allocation7 + $0x948] sm:$0xff]
    %v3022 = vld [vmem:[#allocation7 + $0x950] sm:$0xff]
    %v3023 = vld [vmem:[#allocation7 + $0x958] sm:$0xff]
    %v3024 = vld [vmem:[#allocation7 + $0x960] sm:$0xff]
    %v3025 = vld [vmem:[#allocation7 + $0x968] sm:$0xff]
    %v3026 = vld [vmem:[#allocation7 + $0x970] sm:$0xff]
    %v3027 = vld [vmem:[#allocation7 + $0x978] sm:$0xff]
    %v3028 = vld [vmem:[#allocation7 + $0x980] sm:$0xff]
    %v3029 = vld [vmem:[#allocation7 + $0x988] sm:$0xff]
    %v3030 = vld [vmem:[#allocation7 + $0x990] sm:$0xff]
    %v3031 = vld [vmem:[#allocation7 + $0x998] sm:$0xff]
    %v3032 = vld [vmem:[#allocation7 + $0x9a0] sm:$0xff]
    %v3033 = vld [vmem:[#allocation7 + $0x9a8] sm:$0xff]
    %v3034 = vld [vmem:[#allocation7 + $0x9b0] sm:$0xff]
    %v3035 = vld [vmem:[#allocation7 + $0x9b8] sm:$0xff]
    %v3036 = vld [vmem:[#allocation7 + $0x9c0] sm:$0xff]
    %v3037 = vld [vmem:[#allocation7 + $0x9c8] sm:$0xff]
    %v3038 = vld [vmem:[#allocation7 + $0x9d0] sm:$0xff]
    %v3039 = vld [vmem:[#allocation7 + $0x9d8] sm:$0xff]
    %v3040 = vld [vmem:[#allocation7 + $0x9e0] sm:$0xff]
    %v3041 = vld [vmem:[#allocation7 + $0x9e8] sm:$0xff]
    %v3042 = vld [vmem:[#allocation7 + $0x9f0] sm:$0xff]
    %v3043 = vld [vmem:[#allocation7 + $0x9f8] sm:$0xff]
    %v3044 = vld [vmem:[#allocation7 + $0xa00] sm:$0xff]
    %v3045 = vld [vmem:[#allocation7 + $0xa08] sm:$0xff]
    %v3046 = vld [vmem:[#allocation7 + $0xa10] sm:$0xff]
    %v3047 = vld [vmem:[#allocation7 + $0xa18] sm:$0xff]
    %v3048 = vld [vmem:[#allocation7 + $0xa20] sm:$0xff]
    %v3049 = vld [vmem:[#allocation7 + $0xa28] sm:$0xff]
    %v3050 = vld [vmem:[#allocation7 + $0xa30] sm:$0xff]
    %v3051 = vld [vmem:[#allocation7 + $0xa38] sm:$0xff]
    %v3052 = vld [vmem:[#allocation7 + $0xa40] sm:$0xff]
    %v3053 = vld [vmem:[#allocation7 + $0xa48] sm:$0xff]
    %v3054 = vld [vmem:[#allocation7 + $0xa50] sm:$0xff]
    %v3055 = vld [vmem:[#allocation7 + $0xa58] sm:$0xff]
    %v3056 = vld [vmem:[#allocation7 + $0xa60] sm:$0xff]
    %v3057 = vld [vmem:[#allocation7 + $0xa68] sm:$0xff]
    %v3058 = vld [vmem:[#allocation7 + $0xa70] sm:$0xff]
    %v3059 = vld [vmem:[#allocation7 + $0xa78] sm:$0xff]
    %v3060 = vld [vmem:[#allocation7 + $0xa80] sm:$0xff]
    %v3061 = vld [vmem:[#allocation7 + $0xa88] sm:$0xff]
    %v3062 = vld [vmem:[#allocation7 + $0xa90] sm:$0xff]
    %v3063 = vld [vmem:[#allocation7 + $0xa98] sm:$0xff]
    %v3064 = vld [vmem:[#allocation7 + $0xaa0] sm:$0xff]
    %v3065 = vld [vmem:[#allocation7 + $0xaa8] sm:$0xff]
    %v3066 = vld [vmem:[#allocation7 + $0xab0] sm:$0xff]
    %v3067 = vld [vmem:[#allocation7 + $0xab8] sm:$0xff]
    %v3068 = vld [vmem:[#allocation7 + $0xac0] sm:$0xff]
    %v3069 = vld [vmem:[#allocation7 + $0xac8] sm:$0xff]
    %v3070 = vld [vmem:[#allocation7 + $0xad0] sm:$0xff]
    %v3071 = vld [vmem:[#allocation7 + $0xad8] sm:$0xff]
    %v3072 = vld [vmem:[#allocation7 + $0xae0] sm:$0xff]
    %v3073 = vld [vmem:[#allocation7 + $0xae8] sm:$0xff]
    %v3074 = vld [vmem:[#allocation7 + $0xaf0] sm:$0xff]
    %v3075 = vld [vmem:[#allocation7 + $0xaf8] sm:$0xff]
    %v3076 = vld [vmem:[#allocation7 + $0xb00] sm:$0xff]
    %v3077 = vld [vmem:[#allocation7 + $0xb08] sm:$0xff]
    %v3078 = vld [vmem:[#allocation7 + $0xb10] sm:$0xff]
    %v3079 = vld [vmem:[#allocation7 + $0xb18] sm:$0xff]
    %v3080 = vld [vmem:[#allocation7 + $0xb20] sm:$0xff]
    %v3081 = vld [vmem:[#allocation7 + $0xb28] sm:$0xff]
    %v3082 = vld [vmem:[#allocation7 + $0xb30] sm:$0xff]
    %v3083 = vld [vmem:[#allocation7 + $0xb38] sm:$0xff]
    %v3084 = vld [vmem:[#allocation7 + $0xb40] sm:$0xff]
    %v3085 = vld [vmem:[#allocation7 + $0xb48] sm:$0xff]
    %v3086 = vld [vmem:[#allocation7 + $0xb50] sm:$0xff]
    %v3087 = vld [vmem:[#allocation7 + $0xb58] sm:$0xff]
    %v3088 = vld [vmem:[#allocation7 + $0xb60] sm:$0xff]
    %v3089 = vld [vmem:[#allocation7 + $0xb68] sm:$0xff]
    %v3090 = vld [vmem:[#allocation7 + $0xb70] sm:$0xff]
    %v3091 = vld [vmem:[#allocation7 + $0xb78] sm:$0xff]
    %v3092 = vld [vmem:[#allocation7 + $0xb80] sm:$0xff]
    %v3093 = vld [vmem:[#allocation7 + $0xb88] sm:$0xff]
    %v3094 = vld [vmem:[#allocation7 + $0xb90] sm:$0xff]
    %v3095 = vld [vmem:[#allocation7 + $0xb98] sm:$0xff]
    %v3096 = vld [vmem:[#allocation7 + $0xba0] sm:$0xff]
    %v3097 = vld [vmem:[#allocation7 + $0xba8] sm:$0xff]
    %v3098 = vld [vmem:[#allocation7 + $0xbb0] sm:$0xff]
    %v3099 = vld [vmem:[#allocation7 + $0xbb8] sm:$0xff]
    %v3100 = vld [vmem:[#allocation7 + $0xbc0] sm:$0xff]
    %v3101 = vld [vmem:[#allocation7 + $0xbc8] sm:$0xff]
    %v3102 = vld [vmem:[#allocation7 + $0xbd0] sm:$0xff]
    %v3103 = vld [vmem:[#allocation7 + $0xbd8] sm:$0xff]
    %v3104 = vld [vmem:[#allocation7 + $0xbe0] sm:$0xff]
    %v3105 = vld [vmem:[#allocation7 + $0xbe8] sm:$0xff]
    %v3106 = vld [vmem:[#allocation7 + $0xbf0] sm:$0xff]
    %v3107 = vld [vmem:[#allocation7 + $0xbf8] sm:$0xff]
    %v3108 = vld [vmem:[#allocation7 + $0xc00] sm:$0xff]
    %v3109 = vld [vmem:[#allocation7 + $0xc08] sm:$0xff]
    %v3110 = vld [vmem:[#allocation7 + $0xc10] sm:$0xff]
    %v3111 = vld [vmem:[#allocation7 + $0xc18] sm:$0xff]
    %v3112 = vld [vmem:[#allocation7 + $0xc20] sm:$0xff]
    %v3113 = vld [vmem:[#allocation7 + $0xc28] sm:$0xff]
    %v3114 = vld [vmem:[#allocation7 + $0xc30] sm:$0xff]
    %v3115 = vld [vmem:[#allocation7 + $0xc38] sm:$0xff]
    %v3116 = vld [vmem:[#allocation7 + $0xc40] sm:$0xff]
    %v3117 = vld [vmem:[#allocation7 + $0xc48] sm:$0xff]
    %v3118 = vld [vmem:[#allocation7 + $0xc50] sm:$0xff]
    %v3119 = vld [vmem:[#allocation7 + $0xc58] sm:$0xff]
    %v3120 = vld [vmem:[#allocation7 + $0xc60] sm:$0xff]
    %v3121 = vld [vmem:[#allocation7 + $0xc68] sm:$0xff]
    %v3122 = vld [vmem:[#allocation7 + $0xc70] sm:$0xff]
    %v3123 = vld [vmem:[#allocation7 + $0xc78] sm:$0xff]
    %v3124 = vld [vmem:[#allocation7 + $0xc80] sm:$0xff]
    %v3125 = vld [vmem:[#allocation7 + $0xc88] sm:$0xff]
    %v3126 = vld [vmem:[#allocation7 + $0xc90] sm:$0xff]
    %v3127 = vld [vmem:[#allocation7 + $0xc98] sm:$0xff]
    %v3128 = vld [vmem:[#allocation7 + $0xca0] sm:$0xff]
    %v3129 = vld [vmem:[#allocation7 + $0xca8] sm:$0xff]
    %v3130 = vld [vmem:[#allocation7 + $0xcb0] sm:$0xff]
    %v3131 = vld [vmem:[#allocation7 + $0xcb8] sm:$0xff]
    %v3132 = vld [vmem:[#allocation7 + $0xcc0] sm:$0xff]
    %v3133 = vld [vmem:[#allocation7 + $0xcc8] sm:$0xff]
    %v3134 = vld [vmem:[#allocation7 + $0xcd0] sm:$0xff]
    %v3135 = vld [vmem:[#allocation7 + $0xcd8] sm:$0xff]
    %v3136 = vld [vmem:[#allocation7 + $0xce0] sm:$0xff]
    %v3137 = vld [vmem:[#allocation7 + $0xce8] sm:$0xff]
    %v3138 = vld [vmem:[#allocation7 + $0xcf0] sm:$0xff]
    %v3139 = vld [vmem:[#allocation7 + $0xcf8] sm:$0xff]
    %v3140 = vld [vmem:[#allocation7 + $0xd00] sm:$0xff]
    %v3141 = vld [vmem:[#allocation7 + $0xd08] sm:$0xff]
    %v3142 = vld [vmem:[#allocation7 + $0xd10] sm:$0xff]
    %v3143 = vld [vmem:[#allocation7 + $0xd18] sm:$0xff]
    %v3144 = vld [vmem:[#allocation7 + $0xd20] sm:$0xff]
    %v3145 = vld [vmem:[#allocation7 + $0xd28] sm:$0xff]
    %v3146 = vld [vmem:[#allocation7 + $0xd30] sm:$0xff]
    %v3147 = vld [vmem:[#allocation7 + $0xd38] sm:$0xff]
    %v3148 = vld [vmem:[#allocation7 + $0xd40] sm:$0xff]
    %v3149 = vld [vmem:[#allocation7 + $0xd48] sm:$0xff]
    %v3150 = vld [vmem:[#allocation7 + $0xd50] sm:$0xff]
    %v3151 = vld [vmem:[#allocation7 + $0xd58] sm:$0xff]
    %v3152 = vld [vmem:[#allocation7 + $0xd60] sm:$0xff]
    %v3153 = vld [vmem:[#allocation7 + $0xd68] sm:$0xff]
    %v3154 = vld [vmem:[#allocation7 + $0xd70] sm:$0xff]
    %v3155 = vld [vmem:[#allocation7 + $0xd78] sm:$0xff]
    %v3156 = vld [vmem:[#allocation7 + $0xd80] sm:$0xff]
    %v3157 = vld [vmem:[#allocation7 + $0xd88] sm:$0xff]
    %v3158 = vld [vmem:[#allocation7 + $0xd90] sm:$0xff]
    %v3159 = vld [vmem:[#allocation7 + $0xd98] sm:$0xff]
    %v3160 = vld [vmem:[#allocation7 + $0xda0] sm:$0xff]
    %v3161 = vld [vmem:[#allocation7 + $0xda8] sm:$0xff]
    %v3162 = vld [vmem:[#allocation7 + $0xdb0] sm:$0xff]
    %v3163 = vld [vmem:[#allocation7 + $0xdb8] sm:$0xff]
    %v3164 = vld [vmem:[#allocation7 + $0xdc0] sm:$0xff]
    %v3165 = vld [vmem:[#allocation7 + $0xdc8] sm:$0xff]
    %v3166 = vld [vmem:[#allocation7 + $0xdd0] sm:$0xff]
    %v3167 = vld [vmem:[#allocation7 + $0xdd8] sm:$0xff]
    %v3168 = vld [vmem:[#allocation7 + $0xde0] sm:$0xff]
    %v3169 = vld [vmem:[#allocation7 + $0xde8] sm:$0xff]
    %v3170 = vld [vmem:[#allocation7 + $0xdf0] sm:$0xff]
    %v3171 = vld [vmem:[#allocation7 + $0xdf8] sm:$0xff]
    %v3172 = vld [vmem:[#allocation7 + $0xe00] sm:$0xff]
    %v3173 = vld [vmem:[#allocation7 + $0xe08] sm:$0xff]
    %v3174 = vld [vmem:[#allocation7 + $0xe10] sm:$0xff]
    %v3175 = vld [vmem:[#allocation7 + $0xe18] sm:$0xff]
    %v3176 = vld [vmem:[#allocation7 + $0xe20] sm:$0xff]
    %v3177 = vld [vmem:[#allocation7 + $0xe28] sm:$0xff]
    %v3178 = vld [vmem:[#allocation7 + $0xe30] sm:$0xff]
    %v3179 = vld [vmem:[#allocation7 + $0xe38] sm:$0xff]
    %v3180 = vld [vmem:[#allocation7 + $0xe40] sm:$0xff]
    %v3181 = vld [vmem:[#allocation7 + $0xe48] sm:$0xff]
    %v3182 = vld [vmem:[#allocation7 + $0xe50] sm:$0xff]
    %v3183 = vld [vmem:[#allocation7 + $0xe58] sm:$0xff]
    %v3184 = vld [vmem:[#allocation7 + $0xe60] sm:$0xff]
    %v3185 = vld [vmem:[#allocation7 + $0xe68] sm:$0xff]
    %v3186 = vld [vmem:[#allocation7 + $0xe70] sm:$0xff]
    %v3187 = vld [vmem:[#allocation7 + $0xe78] sm:$0xff]
    %v3188 = vld [vmem:[#allocation7 + $0xe80] sm:$0xff]
    %v3189 = vld [vmem:[#allocation7 + $0xe88] sm:$0xff]
    %v3190 = vld [vmem:[#allocation7 + $0xe90] sm:$0xff]
    %v3191 = vld [vmem:[#allocation7 + $0xe98] sm:$0xff]
    %v3192 = vld [vmem:[#allocation7 + $0xea0] sm:$0xff]
    %v3193 = vld [vmem:[#allocation7 + $0xea8] sm:$0xff]
    %v3194 = vld [vmem:[#allocation7 + $0xeb0] sm:$0xff]
    %v3195 = vld [vmem:[#allocation7 + $0xeb8] sm:$0xff]
    %v3196 = vld [vmem:[#allocation7 + $0xec0] sm:$0xff]
    %v3197 = vld [vmem:[#allocation7 + $0xec8] sm:$0xff]
    %v3198 = vld [vmem:[#allocation7 + $0xed0] sm:$0xff]
    %v3199 = vld [vmem:[#allocation7 + $0xed8] sm:$0xff]
    %v3200 = vld [vmem:[#allocation7 + $0xee0] sm:$0xff]
    %v3201 = vld [vmem:[#allocation7 + $0xee8] sm:$0xff]
    %v3202 = vld [vmem:[#allocation7 + $0xef0] sm:$0xff]
    %v3203 = vld [vmem:[#allocation7 + $0xef8] sm:$0xff]
    %v3204 = vld [vmem:[#allocation7 + $0xf00] sm:$0xff]
    %v3205 = vld [vmem:[#allocation7 + $0xf08] sm:$0xff]
    %v3206 = vld [vmem:[#allocation7 + $0xf10] sm:$0xff]
    %v3207 = vld [vmem:[#allocation7 + $0xf18] sm:$0xff]
    %v3208 = vld [vmem:[#allocation7 + $0xf20] sm:$0xff]
    %v3209 = vld [vmem:[#allocation7 + $0xf28] sm:$0xff]
    %v3210 = vld [vmem:[#allocation7 + $0xf30] sm:$0xff]
    %v3211 = vld [vmem:[#allocation7 + $0xf38] sm:$0xff]
    %v3212 = vld [vmem:[#allocation7 + $0xf40] sm:$0xff]
    %v3213 = vld [vmem:[#allocation7 + $0xf48] sm:$0xff]
    %v3214 = vld [vmem:[#allocation7 + $0xf50] sm:$0xff]
    %v3215 = vld [vmem:[#allocation7 + $0xf58] sm:$0xff]
    %v3216 = vld [vmem:[#allocation7 + $0xf60] sm:$0xff]
    %v3217 = vld [vmem:[#allocation7 + $0xf68] sm:$0xff]
    %v3218 = vld [vmem:[#allocation7 + $0xf70] sm:$0xff]
    %v3219 = vld [vmem:[#allocation7 + $0xf78] sm:$0xff]
    %v3220 = vld [vmem:[#allocation7 + $0xf80] sm:$0xff]
    %v3221 = vld [vmem:[#allocation7 + $0xf88] sm:$0xff]
    %v3222 = vld [vmem:[#allocation7 + $0xf90] sm:$0xff]
    %v3223 = vld [vmem:[#allocation7 + $0xf98] sm:$0xff]
    %v3224 = vld [vmem:[#allocation7 + $0xfa0] sm:$0xff]
    %v3225 = vld [vmem:[#allocation7 + $0xfa8] sm:$0xff]
    %v3226 = vld [vmem:[#allocation7 + $0xfb0] sm:$0xff]
    %v3227 = vld [vmem:[#allocation7 + $0xfb8] sm:$0xff]
    %v3228 = vld [vmem:[#allocation7 + $0xfc0] sm:$0xff]
    %v3229 = vld [vmem:[#allocation7 + $0xfc8] sm:$0xff]
    %v3230 = vld [vmem:[#allocation7 + $0xfd0] sm:$0xff]
    %v3231 = vld [vmem:[#allocation7 + $0xfd8] sm:$0xff]
    %v3232 = vld [vmem:[#allocation7 + $0xfe0] sm:$0xff]
    %v3233 = vld [vmem:[#allocation7 + $0xfe8] sm:$0xff]
    %v3234 = vld [vmem:[#allocation7 + $0xff0] sm:$0xff]
    %v3235 = vld [vmem:[#allocation7 + $0xff8] sm:$0xff]
    %v3236 = vld [vmem:[#allocation7 + $0x1000] sm:$0xff]
    %v3237 = vld [vmem:[#allocation7 + $0x1008] sm:$0xff]
    %v3238 = vld [vmem:[#allocation7 + $0x1010] sm:$0xff]
    %v3239 = vld [vmem:[#allocation7 + $0x1018] sm:$0xff]
    %v3240 = vld [vmem:[#allocation7 + $0x1020] sm:$0xff]
    %v3241 = vld [vmem:[#allocation7 + $0x1028] sm:$0xff]
    %v3242 = vld [vmem:[#allocation7 + $0x1030] sm:$0xff]
    %v3243 = vld [vmem:[#allocation7 + $0x1038] sm:$0xff]
    %v3244 = vld [vmem:[#allocation7 + $0x1040] sm:$0xff]
    %v3245 = vld [vmem:[#allocation7 + $0x1048] sm:$0xff]
    %v3246 = vld [vmem:[#allocation7 + $0x1050] sm:$0xff]
    %v3247 = vld [vmem:[#allocation7 + $0x1058] sm:$0xff]
    %v3248 = vld [vmem:[#allocation7 + $0x1060] sm:$0xff]
    %v3249 = vld [vmem:[#allocation7 + $0x1068] sm:$0xff]
    %v3250 = vld [vmem:[#allocation7 + $0x1070] sm:$0xff]
    %v3251 = vld [vmem:[#allocation7 + $0x1078] sm:$0xff]
    %v3252 = vld [vmem:[#allocation7 + $0x1080] sm:$0xff]
    %v3253 = vld [vmem:[#allocation7 + $0x1088] sm:$0xff]
    %v3254 = vld [vmem:[#allocation7 + $0x1090] sm:$0xff]
    %v3255 = vld [vmem:[#allocation7 + $0x1098] sm:$0xff]
    %v3256 = vld [vmem:[#allocation7 + $0x10a0] sm:$0xff]
    %v3257 = vld [vmem:[#allocation7 + $0x10a8] sm:$0xff]
    %v3258 = vld [vmem:[#allocation7 + $0x10b0] sm:$0xff]
    %v3259 = vld [vmem:[#allocation7 + $0x10b8] sm:$0xff]
    %v3260 = vld [vmem:[#allocation7 + $0x10c0] sm:$0xff]
    %v3261 = vld [vmem:[#allocation7 + $0x10c8] sm:$0xff]
    %v3262 = vld [vmem:[#allocation7 + $0x10d0] sm:$0xff]
    %v3263 = vld [vmem:[#allocation7 + $0x10d8] sm:$0xff]
    %v3264 = vld [vmem:[#allocation7 + $0x10e0] sm:$0xff]
    %v3265 = vld [vmem:[#allocation7 + $0x10e8] sm:$0xff]
    %v3266 = vld [vmem:[#allocation7 + $0x10f0] sm:$0xff]
    %v3267 = vld [vmem:[#allocation7 + $0x10f8] sm:$0xff]
    %v3268 = vld [vmem:[#allocation7 + $0x1100] sm:$0xff]
    %v3269 = vld [vmem:[#allocation7 + $0x1108] sm:$0xff]
    %v3270 = vld [vmem:[#allocation7 + $0x1110] sm:$0xff]
    %v3271 = vld [vmem:[#allocation7 + $0x1118] sm:$0xff]
    %v3272 = vld [vmem:[#allocation7 + $0x1120] sm:$0xff]
    %v3273 = vld [vmem:[#allocation7 + $0x1128] sm:$0xff]
    %v3274 = vld [vmem:[#allocation7 + $0x1130] sm:$0xff]
    %v3275 = vld [vmem:[#allocation7 + $0x1138] sm:$0xff]
    %v3276 = vld [vmem:[#allocation7 + $0x1140] sm:$0xff]
    %v3277 = vld [vmem:[#allocation7 + $0x1148] sm:$0xff]
    %v3278 = vld [vmem:[#allocation7 + $0x1150] sm:$0xff]
    %v3279 = vld [vmem:[#allocation7 + $0x1158] sm:$0xff]
    %v3280 = vld [vmem:[#allocation7 + $0x1160] sm:$0xff]
    %v3281 = vld [vmem:[#allocation7 + $0x1168] sm:$0xff]
    %v3282 = vld [vmem:[#allocation7 + $0x1170] sm:$0xff]
    %v3283 = vld [vmem:[#allocation7 + $0x1178] sm:$0xff]
    %v3284 = vld [vmem:[#allocation7 + $0x1180] sm:$0xff]
    %v3285 = vld [vmem:[#allocation7 + $0x1188] sm:$0xff]
    %v3286 = vld [vmem:[#allocation7 + $0x1190] sm:$0xff]
    %v3287 = vld [vmem:[#allocation7 + $0x1198] sm:$0xff]
    %v3288 = vld [vmem:[#allocation7 + $0x11a0] sm:$0xff]
    %v3289 = vld [vmem:[#allocation7 + $0x11a8] sm:$0xff]
    %v3290 = vld [vmem:[#allocation7 + $0x11b0] sm:$0xff]
    %v3291 = vld [vmem:[#allocation7 + $0x11b8] sm:$0xff]
    %v3292 = vld [vmem:[#allocation7 + $0x11c0] sm:$0xff]
    %v3293 = vld [vmem:[#allocation7 + $0x11c8] sm:$0xff]
    %v3294 = vld [vmem:[#allocation7 + $0x11d0] sm:$0xff]
    %v3295 = vld [vmem:[#allocation7 + $0x11d8] sm:$0xff]
    %v3296 = vld [vmem:[#allocation7 + $0x11e0] sm:$0xff]
    %v3297 = vld [vmem:[#allocation7 + $0x11e8] sm:$0xff]
    %v3298 = vld [vmem:[#allocation7 + $0x11f0] sm:$0xff]
    %v3299 = vld [vmem:[#allocation7 + $0x11f8] sm:$0xff]
    %v3300 = vld [vmem:[#allocation7 + $0x1200] sm:$0xff]
    %v3301 = vld [vmem:[#allocation7 + $0x1208] sm:$0xff]
    %v3302 = vld [vmem:[#allocation7 + $0x1210] sm:$0xff]
    %v3303 = vld [vmem:[#allocation7 + $0x1218] sm:$0xff]
    %v3304 = vld [vmem:[#allocation7 + $0x1220] sm:$0xff]
    %v3305 = vld [vmem:[#allocation7 + $0x1228] sm:$0xff]
    %v3306 = vld [vmem:[#allocation7 + $0x1230] sm:$0xff]
    %v3307 = vld [vmem:[#allocation7 + $0x1238] sm:$0xff]
    %v3308 = vld [vmem:[#allocation7 + $0x1240] sm:$0xff]
    %v3309 = vld [vmem:[#allocation7 + $0x1248] sm:$0xff]
    %v3310 = vld [vmem:[#allocation7 + $0x1250] sm:$0xff]
    %v3311 = vld [vmem:[#allocation7 + $0x1258] sm:$0xff]
    %v3312 = vld [vmem:[#allocation7 + $0x1260] sm:$0xff]
    %v3313 = vld [vmem:[#allocation7 + $0x1268] sm:$0xff]
    %v3314 = vld [vmem:[#allocation7 + $0x1270] sm:$0xff]
    %v3315 = vld [vmem:[#allocation7 + $0x1278] sm:$0xff]
    %v3316 = vld [vmem:[#allocation7 + $0x1280] sm:$0xff]
    %v3317 = vld [vmem:[#allocation7 + $0x1288] sm:$0xff]
    %v3318 = vld [vmem:[#allocation7 + $0x1290] sm:$0xff]
    %v3319 = vld [vmem:[#allocation7 + $0x1298] sm:$0xff]
    %v3320 = vld [vmem:[#allocation7 + $0x12a0] sm:$0xff]
    %v3321 = vld [vmem:[#allocation7 + $0x12a8] sm:$0xff]
    %v3322 = vld [vmem:[#allocation7 + $0x12b0] sm:$0xff]
    %v3323 = vld [vmem:[#allocation7 + $0x12b8] sm:$0xff]
    %v3324 = vld [vmem:[#allocation7 + $0x12c0] sm:$0xff]
    %v3325 = vld [vmem:[#allocation7 + $0x12c8] sm:$0xff]
    %v3326 = vld [vmem:[#allocation7 + $0x12d0] sm:$0xff]
    %v3327 = vld [vmem:[#allocation7 + $0x12d8] sm:$0xff]
    %v3328 = vld [vmem:[#allocation7 + $0x12e0] sm:$0xff]
    %v3329 = vld [vmem:[#allocation7 + $0x12e8] sm:$0xff]
    %v3330 = vld [vmem:[#allocation7 + $0x12f0] sm:$0xff]
    %v3331 = vld [vmem:[#allocation7 + $0x12f8] sm:$0xff]
    %v3332 = vld [vmem:[#allocation7 + $0x1300] sm:$0xff]
    %v3333 = vld [vmem:[#allocation7 + $0x1308] sm:$0xff]
    %v3334 = vld [vmem:[#allocation7 + $0x1310] sm:$0xff]
    %v3335 = vld [vmem:[#allocation7 + $0x1318] sm:$0xff]
    %v3336 = vld [vmem:[#allocation7 + $0x1320] sm:$0xff]
    %v3337 = vld [vmem:[#allocation7 + $0x1328] sm:$0xff]
    %v3338 = vld [vmem:[#allocation7 + $0x1330] sm:$0xff]
    %v3339 = vld [vmem:[#allocation7 + $0x1338] sm:$0xff]
    %v3340 = vld [vmem:[#allocation7 + $0x1340] sm:$0xff]
    %v3341 = vld [vmem:[#allocation7 + $0x1348] sm:$0xff]
    %v3342 = vld [vmem:[#allocation7 + $0x1350] sm:$0xff]
    %v3343 = vld [vmem:[#allocation7 + $0x1358] sm:$0xff]
    %v3344 = vld [vmem:[#allocation7 + $0x1360] sm:$0xff]
    %v3345 = vld [vmem:[#allocation7 + $0x1368] sm:$0xff]
    %v3346 = vld [vmem:[#allocation7 + $0x1370] sm:$0xff]
    %v3347 = vld [vmem:[#allocation7 + $0x1378] sm:$0xff]
    %v3348 = vld [vmem:[#allocation7 + $0x1380] sm:$0xff]
    %v3349 = vld [vmem:[#allocation7 + $0x1388] sm:$0xff]
    %v3350 = vld [vmem:[#allocation7 + $0x1390] sm:$0xff]
    %v3351 = vld [vmem:[#allocation7 + $0x1398] sm:$0xff]
    %v3352 = vld [vmem:[#allocation7 + $0x13a0] sm:$0xff]
    %v3353 = vld [vmem:[#allocation7 + $0x13a8] sm:$0xff]
    %v3354 = vld [vmem:[#allocation7 + $0x13b0] sm:$0xff]
    %v3355 = vld [vmem:[#allocation7 + $0x13b8] sm:$0xff]
    %v3356 = vld [vmem:[#allocation7 + $0x13c0] sm:$0xff]
    %v3357 = vld [vmem:[#allocation7 + $0x13c8] sm:$0xff]
    %v3358 = vld [vmem:[#allocation7 + $0x13d0] sm:$0xff]
    %v3359 = vld [vmem:[#allocation7 + $0x13d8] sm:$0xff]
    %v3360 = vld [vmem:[#allocation7 + $0x13e0] sm:$0xff]
    %v3361 = vld [vmem:[#allocation7 + $0x13e8] sm:$0xff]
    %v3362 = vld [vmem:[#allocation7 + $0x13f0] sm:$0xff]
    %v3363 = vld [vmem:[#allocation7 + $0x13f8] sm:$0xff]
    %v3364 = vld [vmem:[#allocation7 + $0x1400] sm:$0xff]
    %v3365 = vld [vmem:[#allocation7 + $0x1408] sm:$0xff]
    %v3366 = vld [vmem:[#allocation7 + $0x1410] sm:$0xff]
    %v3367 = vld [vmem:[#allocation7 + $0x1418] sm:$0xff]
    %v3368 = vld [vmem:[#allocation7 + $0x1420] sm:$0xff]
    %v3369 = vld [vmem:[#allocation7 + $0x1428] sm:$0xff]
    %v3370 = vld [vmem:[#allocation7 + $0x1430] sm:$0xff]
    %v3371 = vld [vmem:[#allocation7 + $0x1438] sm:$0xff]
    %v3372 = vld [vmem:[#allocation7 + $0x1440] sm:$0xff]
    %v3373 = vld [vmem:[#allocation7 + $0x1448] sm:$0xff]
    %v3374 = vld [vmem:[#allocation7 + $0x1450] sm:$0xff]
    %v3375 = vld [vmem:[#allocation7 + $0x1458] sm:$0xff]
    %v3376 = vld [vmem:[#allocation7 + $0x1460] sm:$0xff]
    %v3377 = vld [vmem:[#allocation7 + $0x1468] sm:$0xff]
    %v3378 = vld [vmem:[#allocation7 + $0x1470] sm:$0xff]
    %v3379 = vld [vmem:[#allocation7 + $0x1478] sm:$0xff]
    %v3380 = vld [vmem:[#allocation7 + $0x1480] sm:$0xff]
    %v3381 = vld [vmem:[#allocation7 + $0x1488] sm:$0xff]
    %v3382 = vld [vmem:[#allocation7 + $0x1490] sm:$0xff]
    %v3383 = vld [vmem:[#allocation7 + $0x1498] sm:$0xff]
    %v3384 = vld [vmem:[#allocation7 + $0x14a0] sm:$0xff]
    %v3385 = vld [vmem:[#allocation7 + $0x14a8] sm:$0xff]
    %v3386 = vld [vmem:[#allocation7 + $0x14b0] sm:$0xff]
    %v3387 = vld [vmem:[#allocation7 + $0x14b8] sm:$0xff]
    %v3388 = vld [vmem:[#allocation7 + $0x14c0] sm:$0xff]
    %v3389 = vld [vmem:[#allocation7 + $0x14c8] sm:$0xff]
    %v3390 = vld [vmem:[#allocation7 + $0x14d0] sm:$0xff]
    %v3391 = vld [vmem:[#allocation7 + $0x14d8] sm:$0xff]
    %v3392 = vld [vmem:[#allocation7 + $0x14e0] sm:$0xff]
    %v3393 = vld [vmem:[#allocation7 + $0x14e8] sm:$0xff]
    %v3394 = vld [vmem:[#allocation7 + $0x14f0] sm:$0xff]
    %v3395 = vld [vmem:[#allocation7 + $0x14f8] sm:$0xff]
    %v3396 = vld [vmem:[#allocation7 + $0x1500] sm:$0xff]
    %v3397 = vld [vmem:[#allocation7 + $0x1508] sm:$0xff]
    %v3398 = vld [vmem:[#allocation7 + $0x1510] sm:$0xff]
    %v3399 = vld [vmem:[#allocation7 + $0x1518] sm:$0xff]
    %v3400 = vld [vmem:[#allocation7 + $0x1520] sm:$0xff]
    %v3401 = vld [vmem:[#allocation7 + $0x1528] sm:$0xff]
    %v3402 = vld [vmem:[#allocation7 + $0x1530] sm:$0xff]
    %v3403 = vld [vmem:[#allocation7 + $0x1538] sm:$0xff]
    %v3404 = vld [vmem:[#allocation7 + $0x1540] sm:$0xff]
    %v3405 = vld [vmem:[#allocation7 + $0x1548] sm:$0xff]
    %v3406 = vld [vmem:[#allocation7 + $0x1550] sm:$0xff]
    %v3407 = vld [vmem:[#allocation7 + $0x1558] sm:$0xff]
    %v3408 = vld [vmem:[#allocation7 + $0x1560] sm:$0xff]
    %v3409 = vld [vmem:[#allocation7 + $0x1568] sm:$0xff]
    %v3410 = vld [vmem:[#allocation7 + $0x1570] sm:$0xff]
    %v3411 = vld [vmem:[#allocation7 + $0x1578] sm:$0xff]
    %v3412 = vld [vmem:[#allocation7 + $0x1580] sm:$0xff]
    %v3413 = vld [vmem:[#allocation7 + $0x1588] sm:$0xff]
    %v3414 = vld [vmem:[#allocation7 + $0x1590] sm:$0xff]
    %v3415 = vld [vmem:[#allocation7 + $0x1598] sm:$0xff]
    %v3416 = vld [vmem:[#allocation7 + $0x15a0] sm:$0xff]
    %v3417 = vld [vmem:[#allocation7 + $0x15a8] sm:$0xff]
    %v3418 = vld [vmem:[#allocation7 + $0x15b0] sm:$0xff]
    %v3419 = vld [vmem:[#allocation7 + $0x15b8] sm:$0xff]
    %v3420 = vld [vmem:[#allocation7 + $0x15c0] sm:$0xff]
    %v3421 = vld [vmem:[#allocation7 + $0x15c8] sm:$0xff]
    %v3422 = vld [vmem:[#allocation7 + $0x15d0] sm:$0xff]
    %v3423 = vld [vmem:[#allocation7 + $0x15d8] sm:$0xff]
    %v3424 = vld [vmem:[#allocation7 + $0x15e0] sm:$0xff]
    %v3425 = vld [vmem:[#allocation7 + $0x15e8] sm:$0xff]
    %v3426 = vld [vmem:[#allocation7 + $0x15f0] sm:$0xff]
    %v3427 = vld [vmem:[#allocation7 + $0x15f8] sm:$0xff]
    %v3428 = vld [vmem:[#allocation7 + $0x1600] sm:$0xff]
    %v3429 = vld [vmem:[#allocation7 + $0x1608] sm:$0xff]
    %v3430 = vld [vmem:[#allocation7 + $0x1610] sm:$0xff]
    %v3431 = vld [vmem:[#allocation7 + $0x1618] sm:$0xff]
    %v3432 = vld [vmem:[#allocation7 + $0x1620] sm:$0xff]
    %v3433 = vld [vmem:[#allocation7 + $0x1628] sm:$0xff]
    %v3434 = vld [vmem:[#allocation7 + $0x1630] sm:$0xff]
    %v3435 = vld [vmem:[#allocation7 + $0x1638] sm:$0xff]
    %v3436 = vld [vmem:[#allocation7 + $0x1640] sm:$0xff]
    %v3437 = vld [vmem:[#allocation7 + $0x1648] sm:$0xff]
    %v3438 = vld [vmem:[#allocation7 + $0x1650] sm:$0xff]
    %v3439 = vld [vmem:[#allocation7 + $0x1658] sm:$0xff]
    %v3440 = vld [vmem:[#allocation7 + $0x1660] sm:$0xff]
    %v3441 = vld [vmem:[#allocation7 + $0x1668] sm:$0xff]
    %v3442 = vld [vmem:[#allocation7 + $0x1670] sm:$0xff]
    %v3443 = vld [vmem:[#allocation7 + $0x1678] sm:$0xff]
    %v3444 = vld [vmem:[#allocation7 + $0x1680] sm:$0xff]
    %v3445 = vld [vmem:[#allocation7 + $0x1688] sm:$0xff]
    %v3446 = vld [vmem:[#allocation7 + $0x1690] sm:$0xff]
    %v3447 = vld [vmem:[#allocation7 + $0x1698] sm:$0xff]
    %v3448 = vld [vmem:[#allocation7 + $0x16a0] sm:$0xff]
    %v3449 = vld [vmem:[#allocation7 + $0x16a8] sm:$0xff]
    %v3450 = vld [vmem:[#allocation7 + $0x16b0] sm:$0xff]
    %v3451 = vld [vmem:[#allocation7 + $0x16b8] sm:$0xff]
    %v3452 = vld [vmem:[#allocation7 + $0x16c0] sm:$0xff]
    %v3453 = vld [vmem:[#allocation7 + $0x16c8] sm:$0xff]
    %v3454 = vld [vmem:[#allocation7 + $0x16d0] sm:$0xff]
    %v3455 = vld [vmem:[#allocation7 + $0x16d8] sm:$0xff]
    %v3456 = vld [vmem:[#allocation7 + $0x16e0] sm:$0xff]
    %v3457 = vld [vmem:[#allocation7 + $0x16e8] sm:$0xff]
    %v3458 = vld [vmem:[#allocation7 + $0x16f0] sm:$0xff]
    %v3459 = vld [vmem:[#allocation7 + $0x16f8] sm:$0xff]
    %v3460 = vld [vmem:[#allocation7 + $0x1700] sm:$0xff]
    %v3461 = vld [vmem:[#allocation7 + $0x1708] sm:$0xff]
    %v3462 = vld [vmem:[#allocation7 + $0x1710] sm:$0xff]
    %v3463 = vld [vmem:[#allocation7 + $0x1718] sm:$0xff]
    %v3464 = vld [vmem:[#allocation7 + $0x1720] sm:$0xff]
    %v3465 = vld [vmem:[#allocation7 + $0x1728] sm:$0xff]
    %v3466 = vld [vmem:[#allocation7 + $0x1730] sm:$0xff]
    %v3467 = vld [vmem:[#allocation7 + $0x1738] sm:$0xff]
    %v3468 = vld [vmem:[#allocation7 + $0x1740] sm:$0xff]
    %v3469 = vld [vmem:[#allocation7 + $0x1748] sm:$0xff]
    %v3470 = vld [vmem:[#allocation7 + $0x1750] sm:$0xff]
    %v3471 = vld [vmem:[#allocation7 + $0x1758] sm:$0xff]
    %v3472 = vld [vmem:[#allocation7 + $0x1760] sm:$0xff]
    %v3473 = vld [vmem:[#allocation7 + $0x1768] sm:$0xff]
    %v3474 = vld [vmem:[#allocation7 + $0x1770] sm:$0xff]
    %v3475 = vld [vmem:[#allocation7 + $0x1778] sm:$0xff]
    %v3476 = vld [vmem:[#allocation7 + $0x1780] sm:$0xff]
    %v3477 = vld [vmem:[#allocation7 + $0x1788] sm:$0xff]
    %v3478 = vld [vmem:[#allocation7 + $0x1790] sm:$0xff]
    %v3479 = vld [vmem:[#allocation7 + $0x1798] sm:$0xff]
    %v3480 = vld [vmem:[#allocation7 + $0x17a0] sm:$0xff]
    %v3481 = vld [vmem:[#allocation7 + $0x17a8] sm:$0xff]
    %v3482 = vld [vmem:[#allocation7 + $0x17b0] sm:$0xff]
    %v3483 = vld [vmem:[#allocation7 + $0x17b8] sm:$0xff]
    %v3484 = vld [vmem:[#allocation7 + $0x17c0] sm:$0xff]
    %v3485 = vld [vmem:[#allocation7 + $0x17c8] sm:$0xff]
    %v3486 = vld [vmem:[#allocation7 + $0x17d0] sm:$0xff]
    %v3487 = vld [vmem:[#allocation7 + $0x17d8] sm:$0xff]
    %v3488 = vld [vmem:[#allocation7 + $0x17e0] sm:$0xff]
    %v3489 = vld [vmem:[#allocation7 + $0x17e8] sm:$0xff]
    %v3490 = vld [vmem:[#allocation7 + $0x17f0] sm:$0xff]
    %v3491 = vld [vmem:[#allocation7 + $0x17f8] sm:$0xff]
    %v3492 = vld [vmem:[#allocation7 + $0x1800] sm:$0xff]
    %v3493 = vld [vmem:[#allocation7 + $0x1808] sm:$0xff]
    %v3494 = vld [vmem:[#allocation7 + $0x1810] sm:$0xff]
    %v3495 = vld [vmem:[#allocation7 + $0x1818] sm:$0xff]
    %v3496 = vld [vmem:[#allocation7 + $0x1820] sm:$0xff]
    %v3497 = vld [vmem:[#allocation7 + $0x1828] sm:$0xff]
    %v3498 = vld [vmem:[#allocation7 + $0x1830] sm:$0xff]
    %v3499 = vld [vmem:[#allocation7 + $0x1838] sm:$0xff]
    %v3500 = vld [vmem:[#allocation7 + $0x1840] sm:$0xff]
    %v3501 = vld [vmem:[#allocation7 + $0x1848] sm:$0xff]
    %v3502 = vld [vmem:[#allocation7 + $0x1850] sm:$0xff]
    %v3503 = vld [vmem:[#allocation7 + $0x1858] sm:$0xff]
    %v3504 = vld [vmem:[#allocation7 + $0x1860] sm:$0xff]
    %v3505 = vld [vmem:[#allocation7 + $0x1868] sm:$0xff]
    %v3506 = vld [vmem:[#allocation7 + $0x1870] sm:$0xff]
    %v3507 = vld [vmem:[#allocation7 + $0x1878] sm:$0xff]
    %v3508 = vld [vmem:[#allocation7 + $0x1880] sm:$0xff]
    %v3509 = vld [vmem:[#allocation7 + $0x1888] sm:$0xff]
    %v3510 = vld [vmem:[#allocation7 + $0x1890] sm:$0xff]
    %v3511 = vld [vmem:[#allocation7 + $0x1898] sm:$0xff]
    %v3512 = vld [vmem:[#allocation7 + $0x18a0] sm:$0xff]
    %v3513 = vld [vmem:[#allocation7 + $0x18a8] sm:$0xff]
    %v3514 = vld [vmem:[#allocation7 + $0x18b0] sm:$0xff]
    %v3515 = vld [vmem:[#allocation7 + $0x18b8] sm:$0xff]
    %v3516 = vld [vmem:[#allocation7 + $0x18c0] sm:$0xff]
    %v3517 = vld [vmem:[#allocation7 + $0x18c8] sm:$0xff]
    %v3518 = vld [vmem:[#allocation7 + $0x18d0] sm:$0xff]
    %v3519 = vld [vmem:[#allocation7 + $0x18d8] sm:$0xff]
    %v3520 = vld [vmem:[#allocation7 + $0x18e0] sm:$0xff]
    %v3521 = vld [vmem:[#allocation7 + $0x18e8] sm:$0xff]
    %v3522 = vld [vmem:[#allocation7 + $0x18f0] sm:$0xff]
    %v3523 = vld [vmem:[#allocation7 + $0x18f8] sm:$0xff]
    %v3524 = vld [vmem:[#allocation7 + $0x1900] sm:$0xff]
    %v3525 = vld [vmem:[#allocation7 + $0x1908] sm:$0xff]
    %v3526 = vld [vmem:[#allocation7 + $0x1910] sm:$0xff]
    %v3527 = vld [vmem:[#allocation7 + $0x1918] sm:$0xff]
    %v3528 = vld [vmem:[#allocation7 + $0x1920] sm:$0xff]
    %v3529 = vld [vmem:[#allocation7 + $0x1928] sm:$0xff]
    %v3530 = vld [vmem:[#allocation7 + $0x1930] sm:$0xff]
    %v3531 = vld [vmem:[#allocation7 + $0x1938] sm:$0xff]
    %v3532 = vld [vmem:[#allocation7 + $0x1940] sm:$0xff]
    %v3533 = vld [vmem:[#allocation7 + $0x1948] sm:$0xff]
    %v3534 = vld [vmem:[#allocation7 + $0x1950] sm:$0xff]
    %v3535 = vld [vmem:[#allocation7 + $0x1958] sm:$0xff]
    %v3536 = vld [vmem:[#allocation7 + $0x1960] sm:$0xff]
    %v3537 = vld [vmem:[#allocation7 + $0x1968] sm:$0xff]
    %v3538 = vld [vmem:[#allocation7 + $0x1970] sm:$0xff]
    %v3539 = vld [vmem:[#allocation7 + $0x1978] sm:$0xff]
    %v3540 = vld [vmem:[#allocation7 + $0x1980] sm:$0xff]
    %v3541 = vld [vmem:[#allocation7 + $0x1988] sm:$0xff]
    %v3542 = vld [vmem:[#allocation7 + $0x1990] sm:$0xff]
    %v3543 = vld [vmem:[#allocation7 + $0x1998] sm:$0xff]
    %v3544 = vld [vmem:[#allocation7 + $0x19a0] sm:$0xff]
    %v3545 = vld [vmem:[#allocation7 + $0x19a8] sm:$0xff]
    %v3546 = vld [vmem:[#allocation7 + $0x19b0] sm:$0xff]
    %v3547 = vld [vmem:[#allocation7 + $0x19b8] sm:$0xff]
    %v3548 = vld [vmem:[#allocation7 + $0x19c0] sm:$0xff]
    %v3549 = vld [vmem:[#allocation7 + $0x19c8] sm:$0xff]
    %v3550 = vld [vmem:[#allocation7 + $0x19d0] sm:$0xff]
    %v3551 = vld [vmem:[#allocation7 + $0x19d8] sm:$0xff]
    %v3552 = vld [vmem:[#allocation7 + $0x19e0] sm:$0xff]
    %v3553 = vld [vmem:[#allocation7 + $0x19e8] sm:$0xff]
    %v3554 = vld [vmem:[#allocation7 + $0x19f0] sm:$0xff]
    %v3555 = vld [vmem:[#allocation7 + $0x19f8] sm:$0xff]
    %v3556 = vld [vmem:[#allocation7 + $0x1a00] sm:$0xff]
    %v3557 = vld [vmem:[#allocation7 + $0x1a08] sm:$0xff]
    %v3558 = vld [vmem:[#allocation7 + $0x1a10] sm:$0xff]
    %v3559 = vld [vmem:[#allocation7 + $0x1a18] sm:$0xff]
    %v3560 = vld [vmem:[#allocation7 + $0x1a20] sm:$0xff]
    %v3561 = vld [vmem:[#allocation7 + $0x1a28] sm:$0xff]
    %v3562 = vld [vmem:[#allocation7 + $0x1a30] sm:$0xff]
    %v3563 = vld [vmem:[#allocation7 + $0x1a38] sm:$0xff]
    %v3564 = vld [vmem:[#allocation7 + $0x1a40] sm:$0xff]
    %v3565 = vld [vmem:[#allocation7 + $0x1a48] sm:$0xff]
    %v3566 = vld [vmem:[#allocation7 + $0x1a50] sm:$0xff]
    %v3567 = vld [vmem:[#allocation7 + $0x1a58] sm:$0xff]
    %v3568 = vld [vmem:[#allocation7 + $0x1a60] sm:$0xff]
    %v3569 = vld [vmem:[#allocation7 + $0x1a68] sm:$0xff]
    %v3570 = vld [vmem:[#allocation7 + $0x1a70] sm:$0xff]
    %v3571 = vld [vmem:[#allocation7 + $0x1a78] sm:$0xff]
    %v3572 = vld [vmem:[#allocation7 + $0x1a80] sm:$0xff]
    %v3573 = vld [vmem:[#allocation7 + $0x1a88] sm:$0xff]
    %v3574 = vld [vmem:[#allocation7 + $0x1a90] sm:$0xff]
    %v3575 = vld [vmem:[#allocation7 + $0x1a98] sm:$0xff]
    %v3576 = vld [vmem:[#allocation7 + $0x1aa0] sm:$0xff]
    %v3577 = vld [vmem:[#allocation7 + $0x1aa8] sm:$0xff]
    %v3578 = vld [vmem:[#allocation7 + $0x1ab0] sm:$0xff]
    %v3579 = vld [vmem:[#allocation7 + $0x1ab8] sm:$0xff]
    %v3580 = vld [vmem:[#allocation7 + $0x1ac0] sm:$0xff]
    %v3581 = vld [vmem:[#allocation7 + $0x1ac8] sm:$0xff]
    %v3582 = vld [vmem:[#allocation7 + $0x1ad0] sm:$0xff]
    %v3583 = vld [vmem:[#allocation7 + $0x1ad8] sm:$0xff]
    %v3584 = vld [vmem:[#allocation7 + $0x1ae0] sm:$0xff]
    %v3585 = vld [vmem:[#allocation7 + $0x1ae8] sm:$0xff]
    %v3586 = vld [vmem:[#allocation7 + $0x1af0] sm:$0xff]
    %v3587 = vld [vmem:[#allocation7 + $0x1af8] sm:$0xff]
    %v3588 = vld [vmem:[#allocation7 + $0x1b00] sm:$0xff]
    %v3589 = vld [vmem:[#allocation7 + $0x1b08] sm:$0xff]
    %v3590 = vld [vmem:[#allocation7 + $0x1b10] sm:$0xff]
    %v3591 = vld [vmem:[#allocation7 + $0x1b18] sm:$0xff]
    %v3592 = vld [vmem:[#allocation7 + $0x1b20] sm:$0xff]
    %v3593 = vld [vmem:[#allocation7 + $0x1b28] sm:$0xff]
    %v3594 = vld [vmem:[#allocation7 + $0x1b30] sm:$0xff]
    %v3595 = vld [vmem:[#allocation7 + $0x1b38] sm:$0xff]
    %v3596 = vld [vmem:[#allocation7 + $0x1b40] sm:$0xff]
    %v3597 = vld [vmem:[#allocation7 + $0x1b48] sm:$0xff]
    %v3598 = vld [vmem:[#allocation7 + $0x1b50] sm:$0xff]
    %v3599 = vld [vmem:[#allocation7 + $0x1b58] sm:$0xff]
    %v3600 = vld [vmem:[#allocation7 + $0x1b60] sm:$0xff]
    %v3601 = vld [vmem:[#allocation7 + $0x1b68] sm:$0xff]
    %v3602 = vld [vmem:[#allocation7 + $0x1b70] sm:$0xff]
    %v3603 = vld [vmem:[#allocation7 + $0x1b78] sm:$0xff]
    %v3604 = vld [vmem:[#allocation7 + $0x1b80] sm:$0xff]
    %v3605 = vld [vmem:[#allocation7 + $0x1b88] sm:$0xff]
    %v3606 = vld [vmem:[#allocation7 + $0x1b90] sm:$0xff]
    %v3607 = vld [vmem:[#allocation7 + $0x1b98] sm:$0xff]
    %v3608 = vld [vmem:[#allocation7 + $0x1ba0] sm:$0xff]
    %v3609 = vld [vmem:[#allocation7 + $0x1ba8] sm:$0xff]
    %v3610 = vld [vmem:[#allocation7 + $0x1bb0] sm:$0xff]
    %v3611 = vld [vmem:[#allocation7 + $0x1bb8] sm:$0xff]
    %v3612 = vld [vmem:[#allocation7 + $0x1bc0] sm:$0xff]
    %v3613 = vld [vmem:[#allocation7 + $0x1bc8] sm:$0xff]
    %v3614 = vld [vmem:[#allocation7 + $0x1bd0] sm:$0xff]
    %v3615 = vld [vmem:[#allocation7 + $0x1bd8] sm:$0xff]
    %v3616 = vld [vmem:[#allocation7 + $0x1be0] sm:$0xff]
    %v3617 = vld [vmem:[#allocation7 + $0x1be8] sm:$0xff]
    %v3618 = vld [vmem:[#allocation7 + $0x1bf0] sm:$0xff]
    %v3619 = vld [vmem:[#allocation7 + $0x1bf8] sm:$0xff]
    %v3620 = vld [vmem:[#allocation7 + $0x1c00] sm:$0xff]
    %v3621 = vld [vmem:[#allocation7 + $0x1c08] sm:$0xff]
    %v3622 = vld [vmem:[#allocation7 + $0x1c10] sm:$0xff]
    %v3623 = vld [vmem:[#allocation7 + $0x1c18] sm:$0xff]
    %v3624 = vld [vmem:[#allocation7 + $0x1c20] sm:$0xff]
    %v3625 = vld [vmem:[#allocation7 + $0x1c28] sm:$0xff]
    %v3626 = vld [vmem:[#allocation7 + $0x1c30] sm:$0xff]
    %v3627 = vld [vmem:[#allocation7 + $0x1c38] sm:$0xff]
    %v3628 = vld [vmem:[#allocation7 + $0x1c40] sm:$0xff]
    %v3629 = vld [vmem:[#allocation7 + $0x1c48] sm:$0xff]
    %v3630 = vld [vmem:[#allocation7 + $0x1c50] sm:$0xff]
    %v3631 = vld [vmem:[#allocation7 + $0x1c58] sm:$0xff]
    %v3632 = vld [vmem:[#allocation7 + $0x1c60] sm:$0xff]
    %v3633 = vld [vmem:[#allocation7 + $0x1c68] sm:$0xff]
    %v3634 = vld [vmem:[#allocation7 + $0x1c70] sm:$0xff]
    %v3635 = vld [vmem:[#allocation7 + $0x1c78] sm:$0xff]
    %v3636 = vld [vmem:[#allocation7 + $0x1c80] sm:$0xff]
    %v3637 = vld [vmem:[#allocation7 + $0x1c88] sm:$0xff]
    %v3638 = vld [vmem:[#allocation7 + $0x1c90] sm:$0xff]
    %v3639 = vld [vmem:[#allocation7 + $0x1c98] sm:$0xff]
    %v3640 = vld [vmem:[#allocation7 + $0x1ca0] sm:$0xff]
    %v3641 = vld [vmem:[#allocation7 + $0x1ca8] sm:$0xff]
    %v3642 = vld [vmem:[#allocation7 + $0x1cb0] sm:$0xff]
    %v3643 = vld [vmem:[#allocation7 + $0x1cb8] sm:$0xff]
    %v3644 = vld [vmem:[#allocation7 + $0x1cc0] sm:$0xff]
    %v3645 = vld [vmem:[#allocation7 + $0x1cc8] sm:$0xff]
    %v3646 = vld [vmem:[#allocation7 + $0x1cd0] sm:$0xff]
    %v3647 = vld [vmem:[#allocation7 + $0x1cd8] sm:$0xff]
    %v3648 = vld [vmem:[#allocation7 + $0x1ce0] sm:$0xff]
    %v3649 = vld [vmem:[#allocation7 + $0x1ce8] sm:$0xff]
    %v3650 = vld [vmem:[#allocation7 + $0x1cf0] sm:$0xff]
    %v3651 = vld [vmem:[#allocation7 + $0x1cf8] sm:$0xff]
    %v3652 = vld [vmem:[#allocation7 + $0x1d00] sm:$0xff]
    %v3653 = vld [vmem:[#allocation7 + $0x1d08] sm:$0xff]
    %v3654 = vld [vmem:[#allocation7 + $0x1d10] sm:$0xff]
    %v3655 = vld [vmem:[#allocation7 + $0x1d18] sm:$0xff]
    %v3656 = vld [vmem:[#allocation7 + $0x1d20] sm:$0xff]
    %v3657 = vld [vmem:[#allocation7 + $0x1d28] sm:$0xff]
    %v3658 = vld [vmem:[#allocation7 + $0x1d30] sm:$0xff]
    %v3659 = vld [vmem:[#allocation7 + $0x1d38] sm:$0xff]
    %v3660 = vld [vmem:[#allocation7 + $0x1d40] sm:$0xff]
    %v3661 = vld [vmem:[#allocation7 + $0x1d48] sm:$0xff]
    %v3662 = vld [vmem:[#allocation7 + $0x1d50] sm:$0xff]
    %v3663 = vld [vmem:[#allocation7 + $0x1d58] sm:$0xff]
    %v3664 = vld [vmem:[#allocation7 + $0x1d60] sm:$0xff]
    %v3665 = vld [vmem:[#allocation7 + $0x1d68] sm:$0xff]
    %v3666 = vld [vmem:[#allocation7 + $0x1d70] sm:$0xff]
    %v3667 = vld [vmem:[#allocation7 + $0x1d78] sm:$0xff]
    %v3668 = vld [vmem:[#allocation7 + $0x1d80] sm:$0xff]
    %v3669 = vld [vmem:[#allocation7 + $0x1d88] sm:$0xff]
    %v3670 = vld [vmem:[#allocation7 + $0x1d90] sm:$0xff]
    %v3671 = vld [vmem:[#allocation7 + $0x1d98] sm:$0xff]
    %v3672 = vld [vmem:[#allocation7 + $0x1da0] sm:$0xff]
    %v3673 = vld [vmem:[#allocation7 + $0x1da8] sm:$0xff]
    %v3674 = vld [vmem:[#allocation7 + $0x1db0] sm:$0xff]
    %v3675 = vld [vmem:[#allocation7 + $0x1db8] sm:$0xff]
    %v3676 = vld [vmem:[#allocation7 + $0x1dc0] sm:$0xff]
    %v3677 = vld [vmem:[#allocation7 + $0x1dc8] sm:$0xff]
    %v3678 = vld [vmem:[#allocation7 + $0x1dd0] sm:$0xff]
    %v3679 = vld [vmem:[#allocation7 + $0x1dd8] sm:$0xff]
    %v3680 = vld [vmem:[#allocation7 + $0x1de0] sm:$0xff]
    %v3681 = vld [vmem:[#allocation7 + $0x1de8] sm:$0xff]
    %v3682 = vld [vmem:[#allocation7 + $0x1df0] sm:$0xff]
    %v3683 = vld [vmem:[#allocation7 + $0x1df8] sm:$0xff]
    %v3684 = vld [vmem:[#allocation7 + $0x1e00] sm:$0xff]
    %v3685 = vld [vmem:[#allocation7 + $0x1e08] sm:$0xff]
    %v3686 = vld [vmem:[#allocation7 + $0x1e10] sm:$0xff]
    %v3687 = vld [vmem:[#allocation7 + $0x1e18] sm:$0xff]
    %v3688 = vld [vmem:[#allocation7 + $0x1e20] sm:$0xff]
    %v3689 = vld [vmem:[#allocation7 + $0x1e28] sm:$0xff]
    %v3690 = vld [vmem:[#allocation7 + $0x1e30] sm:$0xff]
    %v3691 = vld [vmem:[#allocation7 + $0x1e38] sm:$0xff]
    %v3692 = vld [vmem:[#allocation7 + $0x1e40] sm:$0xff]
    %v3693 = vld [vmem:[#allocation7 + $0x1e48] sm:$0xff]
    %v3694 = vld [vmem:[#allocation7 + $0x1e50] sm:$0xff]
    %v3695 = vld [vmem:[#allocation7 + $0x1e58] sm:$0xff]
    %v3696 = vld [vmem:[#allocation7 + $0x1e60] sm:$0xff]
    %v3697 = vld [vmem:[#allocation7 + $0x1e68] sm:$0xff]
    %v3698 = vld [vmem:[#allocation7 + $0x1e70] sm:$0xff]
    %v3699 = vld [vmem:[#allocation7 + $0x1e78] sm:$0xff]
    %v3700 = vld [vmem:[#allocation7 + $0x1e80] sm:$0xff]
    %v3701 = vld [vmem:[#allocation7 + $0x1e88] sm:$0xff]
    %v3702 = vld [vmem:[#allocation7 + $0x1e90] sm:$0xff]
    %v3703 = vld [vmem:[#allocation7 + $0x1e98] sm:$0xff]
    %v3704 = vld [vmem:[#allocation7 + $0x1ea0] sm:$0xff]
    %v3705 = vld [vmem:[#allocation7 + $0x1ea8] sm:$0xff]
    %v3706 = vld [vmem:[#allocation7 + $0x1eb0] sm:$0xff]
    %v3707 = vld [vmem:[#allocation7 + $0x1eb8] sm:$0xff]
    %v3708 = vld [vmem:[#allocation7 + $0x1ec0] sm:$0xff]
    %v3709 = vld [vmem:[#allocation7 + $0x1ec8] sm:$0xff]
    %v3710 = vld [vmem:[#allocation7 + $0x1ed0] sm:$0xff]
    %v3711 = vld [vmem:[#allocation7 + $0x1ed8] sm:$0xff]
    %v3712 = vld [vmem:[#allocation7 + $0x1ee0] sm:$0xff]
    %v3713 = vld [vmem:[#allocation7 + $0x1ee8] sm:$0xff]
    %v3714 = vld [vmem:[#allocation7 + $0x1ef0] sm:$0xff]
    %v3715 = vld [vmem:[#allocation7 + $0x1ef8] sm:$0xff]
    %v3716 = vld [vmem:[#allocation7 + $0x1f00] sm:$0xff]
    %v3717 = vld [vmem:[#allocation7 + $0x1f08] sm:$0xff]
    %v3718 = vld [vmem:[#allocation7 + $0x1f10] sm:$0xff]
    %v3719 = vld [vmem:[#allocation7 + $0x1f18] sm:$0xff]
    %v3720 = vld [vmem:[#allocation7 + $0x1f20] sm:$0xff]
    %v3721 = vld [vmem:[#allocation7 + $0x1f28] sm:$0xff]
    %v3722 = vld [vmem:[#allocation7 + $0x1f30] sm:$0xff]
    %v3723 = vld [vmem:[#allocation7 + $0x1f38] sm:$0xff]
    %v3724 = vld [vmem:[#allocation7 + $0x1f40] sm:$0xff]
    %v3725 = vld [vmem:[#allocation7 + $0x1f48] sm:$0xff]
    %v3726 = vld [vmem:[#allocation7 + $0x1f50] sm:$0xff]
    %v3727 = vld [vmem:[#allocation7 + $0x1f58] sm:$0xff]
    %v3728 = vld [vmem:[#allocation7 + $0x1f60] sm:$0xff]
    %v3729 = vld [vmem:[#allocation7 + $0x1f68] sm:$0xff]
    %v3730 = vld [vmem:[#allocation7 + $0x1f70] sm:$0xff]
    %v3731 = vld [vmem:[#allocation7 + $0x1f78] sm:$0xff]
    %v3732 = vld [vmem:[#allocation7 + $0x1f80] sm:$0xff]
    %v3733 = vld [vmem:[#allocation7 + $0x1f88] sm:$0xff]
    %v3734 = vld [vmem:[#allocation7 + $0x1f90] sm:$0xff]
    %v3735 = vld [vmem:[#allocation7 + $0x1f98] sm:$0xff]
    %v3736 = vld [vmem:[#allocation7 + $0x1fa0] sm:$0xff]
    %v3737 = vld [vmem:[#allocation7 + $0x1fa8] sm:$0xff]
    %v3738 = vld [vmem:[#allocation7 + $0x1fb0] sm:$0xff]
    %v3739 = vld [vmem:[#allocation7 + $0x1fb8] sm:$0xff]
    %v3740 = vld [vmem:[#allocation7 + $0x1fc0] sm:$0xff]
    %v3741 = vld [vmem:[#allocation7 + $0x1fc8] sm:$0xff]
    %v3742 = vld [vmem:[#allocation7 + $0x1fd0] sm:$0xff]
    %v3743 = vld [vmem:[#allocation7 + $0x1fd8] sm:$0xff]
    %v3744 = vld [vmem:[#allocation7 + $0x1fe0] sm:$0xff]
    %v3745 = vld [vmem:[#allocation7 + $0x1fe8] sm:$0xff]
    %v3746 = vld [vmem:[#allocation7 + $0x1ff0] sm:$0xff]
    %v3747 = vld [vmem:[#allocation7 + $0x1ff8] sm:$0xff]
    %3748 = vmatpush.msra.mxu0 %v2844
    %3749 = vmatpush.msra.mxu0 %v2836
    %3750 = vmatpush.msra.mxu0 %v2828
    %3751 = vmatpush.msra.mxu0 %v2820
    %3752 = vmatpush.msra.mxu0 %v2812
    %3753 = vmatpush.msra.mxu0 %v2804
    %3754 = vmatpush.msra.mxu0 %v2796
    %3755 = vmatpush.msra.mxu0 %v2788
    %3756 = vmatpush.msra.mxu0 %v2780
    %3757 = vmatpush.msra.mxu0 %v2772
    %3758 = vmatpush.msra.mxu0 %v2764
    %3759 = vmatpush.msra.mxu0 %v2756
    %3760 = vmatpush.msra.mxu0 %v2748
    %3761 = vmatpush.msra.mxu0 %v2740
    %3762 = vmatpush.msra.mxu0 %v2732
    %3763 = vmatpush.msra.mxu0 %v2724
    %3764 = vmatmul.f32.gmra.mxu0 %v2716
    %v3765 = vpop.f32.mrf.mxu0
    %v3766 = vadd.f32 0.0, %v3765
    %3767 = vdwg.mxu0
    %3768 = vmatpush.msra.mxu0 %v2972
    %3769 = vmatpush.msra.mxu0 %v2964
    %3770 = vmatpush.msra.mxu0 %v2956
    %3771 = vmatpush.msra.mxu0 %v2948
    %3772 = vmatpush.msra.mxu0 %v2940
    %3773 = vmatpush.msra.mxu0 %v2932
    %3774 = vmatpush.msra.mxu0 %v2924
    %3775 = vmatpush.msra.mxu0 %v2916
    %3776 = vmatpush.msra.mxu0 %v2908
    %3777 = vmatpush.msra.mxu0 %v2900
    %3778 = vmatpush.msra.mxu0 %v2892
    %3779 = vmatpush.msra.mxu0 %v2884
    %3780 = vmatpush.msra.mxu0 %v2876
    %3781 = vmatpush.msra.mxu0 %v2868
    %3782 = vmatpush.msra.mxu0 %v2860
    %3783 = vmatpush.msra.mxu0 %v2852
    %3784 = vmatmul.f32.gmra.mxu0 %v2717
    %v3785 = vpop.f32.mrf.mxu0
    %v3786 = vadd.f32 %v3766, %v3785
    %3787 = vdwg.mxu0
    %3788 = vmatpush.msra.mxu0 %v3100
    %3789 = vmatpush.msra.mxu0 %v3092
    %3790 = vmatpush.msra.mxu0 %v3084
    %3791 = vmatpush.msra.mxu0 %v3076
    %3792 = vmatpush.msra.mxu0 %v3068
    %3793 = vmatpush.msra.mxu0 %v3060
    %3794 = vmatpush.msra.mxu0 %v3052
    %3795 = vmatpush.msra.mxu0 %v3044
    %3796 = vmatpush.msra.mxu0 %v3036
    %3797 = vmatpush.msra.mxu0 %v3028
    %3798 = vmatpush.msra.mxu0 %v3020
    %3799 = vmatpush.msra.mxu0 %v3012
    %3800 = vmatpush.msra.mxu0 %v3004
    %3801 = vmatpush.msra.mxu0 %v2996
    %3802 = vmatpush.msra.mxu0 %v2988
    %3803 = vmatpush.msra.mxu0 %v2980
    %3804 = vmatmul.f32.gmra.mxu0 %v2718
    %v3805 = vpop.f32.mrf.mxu0
    %v3806 = vadd.f32 %v3786, %v3805
    %3807 = vdwg.mxu0
    %3808 = vmatpush.msra.mxu0 %v3228
    %3809 = vmatpush.msra.mxu0 %v3220
    %3810 = vmatpush.msra.mxu0 %v3212
    %3811 = vmatpush.msra.mxu0 %v3204
    %3812 = vmatpush.msra.mxu0 %v3196
    %3813 = vmatpush.msra.mxu0 %v3188
    %3814 = vmatpush.msra.mxu0 %v3180
    %3815 = vmatpush.msra.mxu0 %v3172
    %3816 = vmatpush.msra.mxu0 %v3164
    %3817 = vmatpush.msra.mxu0 %v3156
    %3818 = vmatpush.msra.mxu0 %v3148
    %3819 = vmatpush.msra.mxu0 %v3140
    %3820 = vmatpush.msra.mxu0 %v3132
    %3821 = vmatpush.msra.mxu0 %v3124
    %3822 = vmatpush.msra.mxu0 %v3116
    %3823 = vmatpush.msra.mxu0 %v3108
    %3824 = vmatmul.f32.gmra.mxu0 %v2719
    %v3825 = vpop.f32.mrf.mxu0
    %v3826 = vadd.f32 %v3806, %v3825
    %3827 = vdwg.mxu0
    %3828 = vmatpush.msra.mxu0 %v3356
    %3829 = vmatpush.msra.mxu0 %v3348
    %3830 = vmatpush.msra.mxu0 %v3340
    %3831 = vmatpush.msra.mxu0 %v3332
    %3832 = vmatpush.msra.mxu0 %v3324
    %3833 = vmatpush.msra.mxu0 %v3316
    %3834 = vmatpush.msra.mxu0 %v3308
    %3835 = vmatpush.msra.mxu0 %v3300
    %3836 = vmatpush.msra.mxu0 %v3292
    %3837 = vmatpush.msra.mxu0 %v3284
    %3838 = vmatpush.msra.mxu0 %v3276
    %3839 = vmatpush.msra.mxu0 %v3268
    %3840 = vmatpush.msra.mxu0 %v3260
    %3841 = vmatpush.msra.mxu0 %v3252
    %3842 = vmatpush.msra.mxu0 %v3244
    %3843 = vmatpush.msra.mxu0 %v3236
    %3844 = vmatmul.f32.gmra.mxu0 %v2720
    %v3845 = vpop.f32.mrf.mxu0
    %v3846 = vadd.f32 %v3826, %v3845
    %3847 = vdwg.mxu0
    %3848 = vmatpush.msra.mxu0 %v3484
    %3849 = vmatpush.msra.mxu0 %v3476
    %3850 = vmatpush.msra.mxu0 %v3468
    %3851 = vmatpush.msra.mxu0 %v3460
    %3852 = vmatpush.msra.mxu0 %v3452
    %3853 = vmatpush.msra.mxu0 %v3444
    %3854 = vmatpush.msra.mxu0 %v3436
    %3855 = vmatpush.msra.mxu0 %v3428
    %3856 = vmatpush.msra.mxu0 %v3420
    %3857 = vmatpush.msra.mxu0 %v3412
    %3858 = vmatpush.msra.mxu0 %v3404
    %3859 = vmatpush.msra.mxu0 %v3396
    %3860 = vmatpush.msra.mxu0 %v3388
    %3861 = vmatpush.msra.mxu0 %v3380
    %3862 = vmatpush.msra.mxu0 %v3372
    %3863 = vmatpush.msra.mxu0 %v3364
    %3864 = vmatmul.f32.gmra.mxu0 %v2721
    %v3865 = vpop.f32.mrf.mxu0
    %v3866 = vadd.f32 %v3846, %v3865
    %3867 = vdwg.mxu0
    %3868 = vmatpush.msra.mxu0 %v3612
    %3869 = vmatpush.msra.mxu0 %v3604
    %3870 = vmatpush.msra.mxu0 %v3596
    %3871 = vmatpush.msra.mxu0 %v3588
    %3872 = vmatpush.msra.mxu0 %v3580
    %3873 = vmatpush.msra.mxu0 %v3572
    %3874 = vmatpush.msra.mxu0 %v3564
    %3875 = vmatpush.msra.mxu0 %v3556
    %3876 = vmatpush.msra.mxu0 %v3548
    %3877 = vmatpush.msra.mxu0 %v3540
    %3878 = vmatpush.msra.mxu0 %v3532
    %3879 = vmatpush.msra.mxu0 %v3524
    %3880 = vmatpush.msra.mxu0 %v3516
    %3881 = vmatpush.msra.mxu0 %v3508
    %3882 = vmatpush.msra.mxu0 %v3500
    %3883 = vmatpush.msra.mxu0 %v3492
    %3884 = vmatmul.f32.gmra.mxu0 %v2722
    %v3885 = vpop.f32.mrf.mxu0
    %v3886 = vadd.f32 %v3866, %v3885
    %3887 = vdwg.mxu0
    %3888 = vmatpush.msra.mxu0 %v3740
    %3889 = vmatpush.msra.mxu0 %v3732
    %3890 = vmatpush.msra.mxu0 %v3724
    %3891 = vmatpush.msra.mxu0 %v3716
    %3892 = vmatpush.msra.mxu0 %v3708
    %3893 = vmatpush.msra.mxu0 %v3700
    %3894 = vmatpush.msra.mxu0 %v3692
    %3895 = vmatpush.msra.mxu0 %v3684
    %3896 = vmatpush.msra.mxu0 %v3676
    %3897 = vmatpush.msra.mxu0 %v3668
    %3898 = vmatpush.msra.mxu0 %v3660
    %3899 = vmatpush.msra.mxu0 %v3652
    %3900 = vmatpush.msra.mxu0 %v3644
    %3901 = vmatpush.msra.mxu0 %v3636
    %3902 = vmatpush.msra.mxu0 %v3628
    %3903 = vmatpush.msra.mxu0 %v3620
    %3904 = vmatmul.f32.gmra.mxu0 %v2723
    %v3905 = vpop.f32.mrf.mxu0
    %v3906 = vadd.f32 %v3886, %v3905
    %3907 = vdwg.mxu0
    %3908 = vmatpush.msra.mxu0 %v2845
    %3909 = vmatpush.msra.mxu0 %v2837
    %3910 = vmatpush.msra.mxu0 %v2829
    %3911 = vmatpush.msra.mxu0 %v2821
    %3912 = vmatpush.msra.mxu0 %v2813
    %3913 = vmatpush.msra.mxu0 %v2805
    %3914 = vmatpush.msra.mxu0 %v2797
    %3915 = vmatpush.msra.mxu0 %v2789
    %3916 = vmatpush.msra.mxu0 %v2781
    %3917 = vmatpush.msra.mxu0 %v2773
    %3918 = vmatpush.msra.mxu0 %v2765
    %3919 = vmatpush.msra.mxu0 %v2757
    %3920 = vmatpush.msra.mxu0 %v2749
    %3921 = vmatpush.msra.mxu0 %v2741
    %3922 = vmatpush.msra.mxu0 %v2733
    %3923 = vmatpush.msra.mxu0 %v2725
    %3924 = vmatmul.f32.gmra.mxu0 %v2716
    %v3925 = vpop.f32.mrf.mxu0
    %v3926 = vadd.f32 0.0, %v3925
    %3927 = vdwg.mxu0
    %3928 = vmatpush.msra.mxu0 %v2973
    %3929 = vmatpush.msra.mxu0 %v2965
    %3930 = vmatpush.msra.mxu0 %v2957
    %3931 = vmatpush.msra.mxu0 %v2949
    %3932 = vmatpush.msra.mxu0 %v2941
    %3933 = vmatpush.msra.mxu0 %v2933
    %3934 = vmatpush.msra.mxu0 %v2925
    %3935 = vmatpush.msra.mxu0 %v2917
    %3936 = vmatpush.msra.mxu0 %v2909
    %3937 = vmatpush.msra.mxu0 %v2901
    %3938 = vmatpush.msra.mxu0 %v2893
    %3939 = vmatpush.msra.mxu0 %v2885
    %3940 = vmatpush.msra.mxu0 %v2877
    %3941 = vmatpush.msra.mxu0 %v2869
    %3942 = vmatpush.msra.mxu0 %v2861
    %3943 = vmatpush.msra.mxu0 %v2853
    %3944 = vmatmul.f32.gmra.mxu0 %v2717
    %v3945 = vpop.f32.mrf.mxu0
    %v3946 = vadd.f32 %v3926, %v3945
    %3947 = vdwg.mxu0
    %3948 = vmatpush.msra.mxu0 %v3101
    %3949 = vmatpush.msra.mxu0 %v3093
    %3950 = vmatpush.msra.mxu0 %v3085
    %3951 = vmatpush.msra.mxu0 %v3077
    %3952 = vmatpush.msra.mxu0 %v3069
    %3953 = vmatpush.msra.mxu0 %v3061
    %3954 = vmatpush.msra.mxu0 %v3053
    %3955 = vmatpush.msra.mxu0 %v3045
    %3956 = vmatpush.msra.mxu0 %v3037
    %3957 = vmatpush.msra.mxu0 %v3029
    %3958 = vmatpush.msra.mxu0 %v3021
    %3959 = vmatpush.msra.mxu0 %v3013
    %3960 = vmatpush.msra.mxu0 %v3005
    %3961 = vmatpush.msra.mxu0 %v2997
    %3962 = vmatpush.msra.mxu0 %v2989
    %3963 = vmatpush.msra.mxu0 %v2981
    %3964 = vmatmul.f32.gmra.mxu0 %v2718
    %v3965 = vpop.f32.mrf.mxu0
    %v3966 = vadd.f32 %v3946, %v3965
    %3967 = vdwg.mxu0
    %3968 = vmatpush.msra.mxu0 %v3229
    %3969 = vmatpush.msra.mxu0 %v3221
    %3970 = vmatpush.msra.mxu0 %v3213
    %3971 = vmatpush.msra.mxu0 %v3205
    %3972 = vmatpush.msra.mxu0 %v3197
    %3973 = vmatpush.msra.mxu0 %v3189
    %3974 = vmatpush.msra.mxu0 %v3181
    %3975 = vmatpush.msra.mxu0 %v3173
    %3976 = vmatpush.msra.mxu0 %v3165
    %3977 = vmatpush.msra.mxu0 %v3157
    %3978 = vmatpush.msra.mxu0 %v3149
    %3979 = vmatpush.msra.mxu0 %v3141
    %3980 = vmatpush.msra.mxu0 %v3133
    %3981 = vmatpush.msra.mxu0 %v3125
    %3982 = vmatpush.msra.mxu0 %v3117
    %3983 = vmatpush.msra.mxu0 %v3109
    %3984 = vmatmul.f32.gmra.mxu0 %v2719
    %v3985 = vpop.f32.mrf.mxu0
    %v3986 = vadd.f32 %v3966, %v3985
    %3987 = vdwg.mxu0
    %3988 = vmatpush.msra.mxu0 %v3357
    %3989 = vmatpush.msra.mxu0 %v3349
    %3990 = vmatpush.msra.mxu0 %v3341
    %3991 = vmatpush.msra.mxu0 %v3333
    %3992 = vmatpush.msra.mxu0 %v3325
    %3993 = vmatpush.msra.mxu0 %v3317
    %3994 = vmatpush.msra.mxu0 %v3309
    %3995 = vmatpush.msra.mxu0 %v3301
    %3996 = vmatpush.msra.mxu0 %v3293
    %3997 = vmatpush.msra.mxu0 %v3285
    %3998 = vmatpush.msra.mxu0 %v3277
    %3999 = vmatpush.msra.mxu0 %v3269
    %4000 = vmatpush.msra.mxu0 %v3261
    %4001 = vmatpush.msra.mxu0 %v3253
    %4002 = vmatpush.msra.mxu0 %v3245
    %4003 = vmatpush.msra.mxu0 %v3237
    %4004 = vmatmul.f32.gmra.mxu0 %v2720
    %v4005 = vpop.f32.mrf.mxu0
    %v4006 = vadd.f32 %v3986, %v4005
    %4007 = vdwg.mxu0
    %4008 = vmatpush.msra.mxu0 %v3485
    %4009 = vmatpush.msra.mxu0 %v3477
    %4010 = vmatpush.msra.mxu0 %v3469
    %4011 = vmatpush.msra.mxu0 %v3461
    %4012 = vmatpush.msra.mxu0 %v3453
    %4013 = vmatpush.msra.mxu0 %v3445
    %4014 = vmatpush.msra.mxu0 %v3437
    %4015 = vmatpush.msra.mxu0 %v3429
    %4016 = vmatpush.msra.mxu0 %v3421
    %4017 = vmatpush.msra.mxu0 %v3413
    %4018 = vmatpush.msra.mxu0 %v3405
    %4019 = vmatpush.msra.mxu0 %v3397
    %4020 = vmatpush.msra.mxu0 %v3389
    %4021 = vmatpush.msra.mxu0 %v3381
    %4022 = vmatpush.msra.mxu0 %v3373
    %4023 = vmatpush.msra.mxu0 %v3365
    %4024 = vmatmul.f32.gmra.mxu0 %v2721
    %v4025 = vpop.f32.mrf.mxu0
    %v4026 = vadd.f32 %v4006, %v4025
    %4027 = vdwg.mxu0
    %4028 = vmatpush.msra.mxu0 %v3613
    %4029 = vmatpush.msra.mxu0 %v3605
    %4030 = vmatpush.msra.mxu0 %v3597
    %4031 = vmatpush.msra.mxu0 %v3589
    %4032 = vmatpush.msra.mxu0 %v3581
    %4033 = vmatpush.msra.mxu0 %v3573
    %4034 = vmatpush.msra.mxu0 %v3565
    %4035 = vmatpush.msra.mxu0 %v3557
    %4036 = vmatpush.msra.mxu0 %v3549
    %4037 = vmatpush.msra.mxu0 %v3541
    %4038 = vmatpush.msra.mxu0 %v3533
    %4039 = vmatpush.msra.mxu0 %v3525
    %4040 = vmatpush.msra.mxu0 %v3517
    %4041 = vmatpush.msra.mxu0 %v3509
    %4042 = vmatpush.msra.mxu0 %v3501
    %4043 = vmatpush.msra.mxu0 %v3493
    %4044 = vmatmul.f32.gmra.mxu0 %v2722
    %v4045 = vpop.f32.mrf.mxu0
    %v4046 = vadd.f32 %v4026, %v4045
    %4047 = vdwg.mxu0
    %4048 = vmatpush.msra.mxu0 %v3741
    %4049 = vmatpush.msra.mxu0 %v3733
    %4050 = vmatpush.msra.mxu0 %v3725
    %4051 = vmatpush.msra.mxu0 %v3717
    %4052 = vmatpush.msra.mxu0 %v3709
    %4053 = vmatpush.msra.mxu0 %v3701
    %4054 = vmatpush.msra.mxu0 %v3693
    %4055 = vmatpush.msra.mxu0 %v3685
    %4056 = vmatpush.msra.mxu0 %v3677
    %4057 = vmatpush.msra.mxu0 %v3669
    %4058 = vmatpush.msra.mxu0 %v3661
    %4059 = vmatpush.msra.mxu0 %v3653
    %4060 = vmatpush.msra.mxu0 %v3645
    %4061 = vmatpush.msra.mxu0 %v3637
    %4062 = vmatpush.msra.mxu0 %v3629
    %4063 = vmatpush.msra.mxu0 %v3621
    %4064 = vmatmul.f32.gmra.mxu0 %v2723
    %v4065 = vpop.f32.mrf.mxu0
    %v4066 = vadd.f32 %v4046, %v4065
    %4067 = vdwg.mxu0
    %4068 = vmatpush.msra.mxu0 %v2846
    %4069 = vmatpush.msra.mxu0 %v2838
    %4070 = vmatpush.msra.mxu0 %v2830
    %4071 = vmatpush.msra.mxu0 %v2822
    %4072 = vmatpush.msra.mxu0 %v2814
    %4073 = vmatpush.msra.mxu0 %v2806
    %4074 = vmatpush.msra.mxu0 %v2798
    %4075 = vmatpush.msra.mxu0 %v2790
    %4076 = vmatpush.msra.mxu0 %v2782
    %4077 = vmatpush.msra.mxu0 %v2774
    %4078 = vmatpush.msra.mxu0 %v2766
    %4079 = vmatpush.msra.mxu0 %v2758
    %4080 = vmatpush.msra.mxu0 %v2750
    %4081 = vmatpush.msra.mxu0 %v2742
    %4082 = vmatpush.msra.mxu0 %v2734
    %4083 = vmatpush.msra.mxu0 %v2726
    %4084 = vmatmul.f32.gmra.mxu0 %v2716
    %v4085 = vpop.f32.mrf.mxu0
    %v4086 = vadd.f32 0.0, %v4085
    %4087 = vdwg.mxu0
    %4088 = vmatpush.msra.mxu0 %v2974
    %4089 = vmatpush.msra.mxu0 %v2966
    %4090 = vmatpush.msra.mxu0 %v2958
    %4091 = vmatpush.msra.mxu0 %v2950
    %4092 = vmatpush.msra.mxu0 %v2942
    %4093 = vmatpush.msra.mxu0 %v2934
    %4094 = vmatpush.msra.mxu0 %v2926
    %4095 = vmatpush.msra.mxu0 %v2918
    %4096 = vmatpush.msra.mxu0 %v2910
    %4097 = vmatpush.msra.mxu0 %v2902
    %4098 = vmatpush.msra.mxu0 %v2894
    %4099 = vmatpush.msra.mxu0 %v2886
    %4100 = vmatpush.msra.mxu0 %v2878
    %4101 = vmatpush.msra.mxu0 %v2870
    %4102 = vmatpush.msra.mxu0 %v2862
    %4103 = vmatpush.msra.mxu0 %v2854
    %4104 = vmatmul.f32.gmra.mxu0 %v2717
    %v4105 = vpop.f32.mrf.mxu0
    %v4106 = vadd.f32 %v4086, %v4105
    %4107 = vdwg.mxu0
    %4108 = vmatpush.msra.mxu0 %v3102
    %4109 = vmatpush.msra.mxu0 %v3094
    %4110 = vmatpush.msra.mxu0 %v3086
    %4111 = vmatpush.msra.mxu0 %v3078
    %4112 = vmatpush.msra.mxu0 %v3070
    %4113 = vmatpush.msra.mxu0 %v3062
    %4114 = vmatpush.msra.mxu0 %v3054
    %4115 = vmatpush.msra.mxu0 %v3046
    %4116 = vmatpush.msra.mxu0 %v3038
    %4117 = vmatpush.msra.mxu0 %v3030
    %4118 = vmatpush.msra.mxu0 %v3022
    %4119 = vmatpush.msra.mxu0 %v3014
    %4120 = vmatpush.msra.mxu0 %v3006
    %4121 = vmatpush.msra.mxu0 %v2998
    %4122 = vmatpush.msra.mxu0 %v2990
    %4123 = vmatpush.msra.mxu0 %v2982
    %4124 = vmatmul.f32.gmra.mxu0 %v2718
    %v4125 = vpop.f32.mrf.mxu0
    %v4126 = vadd.f32 %v4106, %v4125
    %4127 = vdwg.mxu0
    %4128 = vmatpush.msra.mxu0 %v3230
    %4129 = vmatpush.msra.mxu0 %v3222
    %4130 = vmatpush.msra.mxu0 %v3214
    %4131 = vmatpush.msra.mxu0 %v3206
    %4132 = vmatpush.msra.mxu0 %v3198
    %4133 = vmatpush.msra.mxu0 %v3190
    %4134 = vmatpush.msra.mxu0 %v3182
    %4135 = vmatpush.msra.mxu0 %v3174
    %4136 = vmatpush.msra.mxu0 %v3166
    %4137 = vmatpush.msra.mxu0 %v3158
    %4138 = vmatpush.msra.mxu0 %v3150
    %4139 = vmatpush.msra.mxu0 %v3142
    %4140 = vmatpush.msra.mxu0 %v3134
    %4141 = vmatpush.msra.mxu0 %v3126
    %4142 = vmatpush.msra.mxu0 %v3118
    %4143 = vmatpush.msra.mxu0 %v3110
    %4144 = vmatmul.f32.gmra.mxu0 %v2719
    %v4145 = vpop.f32.mrf.mxu0
    %v4146 = vadd.f32 %v4126, %v4145
    %4147 = vdwg.mxu0
    %4148 = vmatpush.msra.mxu0 %v3358
    %4149 = vmatpush.msra.mxu0 %v3350
    %4150 = vmatpush.msra.mxu0 %v3342
    %4151 = vmatpush.msra.mxu0 %v3334
    %4152 = vmatpush.msra.mxu0 %v3326
    %4153 = vmatpush.msra.mxu0 %v3318
    %4154 = vmatpush.msra.mxu0 %v3310
    %4155 = vmatpush.msra.mxu0 %v3302
    %4156 = vmatpush.msra.mxu0 %v3294
    %4157 = vmatpush.msra.mxu0 %v3286
    %4158 = vmatpush.msra.mxu0 %v3278
    %4159 = vmatpush.msra.mxu0 %v3270
    %4160 = vmatpush.msra.mxu0 %v3262
    %4161 = vmatpush.msra.mxu0 %v3254
    %4162 = vmatpush.msra.mxu0 %v3246
    %4163 = vmatpush.msra.mxu0 %v3238
    %4164 = vmatmul.f32.gmra.mxu0 %v2720
    %v4165 = vpop.f32.mrf.mxu0
    %v4166 = vadd.f32 %v4146, %v4165
    %4167 = vdwg.mxu0
    %4168 = vmatpush.msra.mxu0 %v3486
    %4169 = vmatpush.msra.mxu0 %v3478
    %4170 = vmatpush.msra.mxu0 %v3470
    %4171 = vmatpush.msra.mxu0 %v3462
    %4172 = vmatpush.msra.mxu0 %v3454
    %4173 = vmatpush.msra.mxu0 %v3446
    %4174 = vmatpush.msra.mxu0 %v3438
    %4175 = vmatpush.msra.mxu0 %v3430
    %4176 = vmatpush.msra.mxu0 %v3422
    %4177 = vmatpush.msra.mxu0 %v3414
    %4178 = vmatpush.msra.mxu0 %v3406
    %4179 = vmatpush.msra.mxu0 %v3398
    %4180 = vmatpush.msra.mxu0 %v3390
    %4181 = vmatpush.msra.mxu0 %v3382
    %4182 = vmatpush.msra.mxu0 %v3374
    %4183 = vmatpush.msra.mxu0 %v3366
    %4184 = vmatmul.f32.gmra.mxu0 %v2721
    %v4185 = vpop.f32.mrf.mxu0
    %v4186 = vadd.f32 %v4166, %v4185
    %4187 = vdwg.mxu0
    %4188 = vmatpush.msra.mxu0 %v3614
    %4189 = vmatpush.msra.mxu0 %v3606
    %4190 = vmatpush.msra.mxu0 %v3598
    %4191 = vmatpush.msra.mxu0 %v3590
    %4192 = vmatpush.msra.mxu0 %v3582
    %4193 = vmatpush.msra.mxu0 %v3574
    %4194 = vmatpush.msra.mxu0 %v3566
    %4195 = vmatpush.msra.mxu0 %v3558
    %4196 = vmatpush.msra.mxu0 %v3550
    %4197 = vmatpush.msra.mxu0 %v3542
    %4198 = vmatpush.msra.mxu0 %v3534
    %4199 = vmatpush.msra.mxu0 %v3526
    %4200 = vmatpush.msra.mxu0 %v3518
    %4201 = vmatpush.msra.mxu0 %v3510
    %4202 = vmatpush.msra.mxu0 %v3502
    %4203 = vmatpush.msra.mxu0 %v3494
    %4204 = vmatmul.f32.gmra.mxu0 %v2722
    %v4205 = vpop.f32.mrf.mxu0
    %v4206 = vadd.f32 %v4186, %v4205
    %4207 = vdwg.mxu0
    %4208 = vmatpush.msra.mxu0 %v3742
    %4209 = vmatpush.msra.mxu0 %v3734
    %4210 = vmatpush.msra.mxu0 %v3726
    %4211 = vmatpush.msra.mxu0 %v3718
    %4212 = vmatpush.msra.mxu0 %v3710
    %4213 = vmatpush.msra.mxu0 %v3702
    %4214 = vmatpush.msra.mxu0 %v3694
    %4215 = vmatpush.msra.mxu0 %v3686
    %4216 = vmatpush.msra.mxu0 %v3678
    %4217 = vmatpush.msra.mxu0 %v3670
    %4218 = vmatpush.msra.mxu0 %v3662
    %4219 = vmatpush.msra.mxu0 %v3654
    %4220 = vmatpush.msra.mxu0 %v3646
    %4221 = vmatpush.msra.mxu0 %v3638
    %4222 = vmatpush.msra.mxu0 %v3630
    %4223 = vmatpush.msra.mxu0 %v3622
    %4224 = vmatmul.f32.gmra.mxu0 %v2723
    %v4225 = vpop.f32.mrf.mxu0
    %v4226 = vadd.f32 %v4206, %v4225
    %4227 = vdwg.mxu0
    %4228 = vmatpush.msra.mxu0 %v2847
    %4229 = vmatpush.msra.mxu0 %v2839
    %4230 = vmatpush.msra.mxu0 %v2831
    %4231 = vmatpush.msra.mxu0 %v2823
    %4232 = vmatpush.msra.mxu0 %v2815
    %4233 = vmatpush.msra.mxu0 %v2807
    %4234 = vmatpush.msra.mxu0 %v2799
    %4235 = vmatpush.msra.mxu0 %v2791
    %4236 = vmatpush.msra.mxu0 %v2783
    %4237 = vmatpush.msra.mxu0 %v2775
    %4238 = vmatpush.msra.mxu0 %v2767
    %4239 = vmatpush.msra.mxu0 %v2759
    %4240 = vmatpush.msra.mxu0 %v2751
    %4241 = vmatpush.msra.mxu0 %v2743
    %4242 = vmatpush.msra.mxu0 %v2735
    %4243 = vmatpush.msra.mxu0 %v2727
    %4244 = vmatmul.f32.gmra.mxu0 %v2716
    %v4245 = vpop.f32.mrf.mxu0
    %v4246 = vadd.f32 0.0, %v4245
    %4247 = vdwg.mxu0
    %4248 = vmatpush.msra.mxu0 %v2975
    %4249 = vmatpush.msra.mxu0 %v2967
    %4250 = vmatpush.msra.mxu0 %v2959
    %4251 = vmatpush.msra.mxu0 %v2951
    %4252 = vmatpush.msra.mxu0 %v2943
    %4253 = vmatpush.msra.mxu0 %v2935
    %4254 = vmatpush.msra.mxu0 %v2927
    %4255 = vmatpush.msra.mxu0 %v2919
    %4256 = vmatpush.msra.mxu0 %v2911
    %4257 = vmatpush.msra.mxu0 %v2903
    %4258 = vmatpush.msra.mxu0 %v2895
    %4259 = vmatpush.msra.mxu0 %v2887
    %4260 = vmatpush.msra.mxu0 %v2879
    %4261 = vmatpush.msra.mxu0 %v2871
    %4262 = vmatpush.msra.mxu0 %v2863
    %4263 = vmatpush.msra.mxu0 %v2855
    %4264 = vmatmul.f32.gmra.mxu0 %v2717
    %v4265 = vpop.f32.mrf.mxu0
    %v4266 = vadd.f32 %v4246, %v4265
    %4267 = vdwg.mxu0
    %4268 = vmatpush.msra.mxu0 %v3103
    %4269 = vmatpush.msra.mxu0 %v3095
    %4270 = vmatpush.msra.mxu0 %v3087
    %4271 = vmatpush.msra.mxu0 %v3079
    %4272 = vmatpush.msra.mxu0 %v3071
    %4273 = vmatpush.msra.mxu0 %v3063
    %4274 = vmatpush.msra.mxu0 %v3055
    %4275 = vmatpush.msra.mxu0 %v3047
    %4276 = vmatpush.msra.mxu0 %v3039
    %4277 = vmatpush.msra.mxu0 %v3031
    %4278 = vmatpush.msra.mxu0 %v3023
    %4279 = vmatpush.msra.mxu0 %v3015
    %4280 = vmatpush.msra.mxu0 %v3007
    %4281 = vmatpush.msra.mxu0 %v2999
    %4282 = vmatpush.msra.mxu0 %v2991
    %4283 = vmatpush.msra.mxu0 %v2983
    %4284 = vmatmul.f32.gmra.mxu0 %v2718
    %v4285 = vpop.f32.mrf.mxu0
    %v4286 = vadd.f32 %v4266, %v4285
    %4287 = vdwg.mxu0
    %4288 = vmatpush.msra.mxu0 %v3231
    %4289 = vmatpush.msra.mxu0 %v3223
    %4290 = vmatpush.msra.mxu0 %v3215
    %4291 = vmatpush.msra.mxu0 %v3207
    %4292 = vmatpush.msra.mxu0 %v3199
    %4293 = vmatpush.msra.mxu0 %v3191
    %4294 = vmatpush.msra.mxu0 %v3183
    %4295 = vmatpush.msra.mxu0 %v3175
    %4296 = vmatpush.msra.mxu0 %v3167
    %4297 = vmatpush.msra.mxu0 %v3159
    %4298 = vmatpush.msra.mxu0 %v3151
    %4299 = vmatpush.msra.mxu0 %v3143
    %4300 = vmatpush.msra.mxu0 %v3135
    %4301 = vmatpush.msra.mxu0 %v3127
    %4302 = vmatpush.msra.mxu0 %v3119
    %4303 = vmatpush.msra.mxu0 %v3111
    %4304 = vmatmul.f32.gmra.mxu0 %v2719
    %v4305 = vpop.f32.mrf.mxu0
    %v4306 = vadd.f32 %v4286, %v4305
    %4307 = vdwg.mxu0
    %4308 = vmatpush.msra.mxu0 %v3359
    %4309 = vmatpush.msra.mxu0 %v3351
    %4310 = vmatpush.msra.mxu0 %v3343
    %4311 = vmatpush.msra.mxu0 %v3335
    %4312 = vmatpush.msra.mxu0 %v3327
    %4313 = vmatpush.msra.mxu0 %v3319
    %4314 = vmatpush.msra.mxu0 %v3311
    %4315 = vmatpush.msra.mxu0 %v3303
    %4316 = vmatpush.msra.mxu0 %v3295
    %4317 = vmatpush.msra.mxu0 %v3287
    %4318 = vmatpush.msra.mxu0 %v3279
    %4319 = vmatpush.msra.mxu0 %v3271
    %4320 = vmatpush.msra.mxu0 %v3263
    %4321 = vmatpush.msra.mxu0 %v3255
    %4322 = vmatpush.msra.mxu0 %v3247
    %4323 = vmatpush.msra.mxu0 %v3239
    %4324 = vmatmul.f32.gmra.mxu0 %v2720
    %v4325 = vpop.f32.mrf.mxu0
    %v4326 = vadd.f32 %v4306, %v4325
    %4327 = vdwg.mxu0
    %4328 = vmatpush.msra.mxu0 %v3487
    %4329 = vmatpush.msra.mxu0 %v3479
    %4330 = vmatpush.msra.mxu0 %v3471
    %4331 = vmatpush.msra.mxu0 %v3463
    %4332 = vmatpush.msra.mxu0 %v3455
    %4333 = vmatpush.msra.mxu0 %v3447
    %4334 = vmatpush.msra.mxu0 %v3439
    %4335 = vmatpush.msra.mxu0 %v3431
    %4336 = vmatpush.msra.mxu0 %v3423
    %4337 = vmatpush.msra.mxu0 %v3415
    %4338 = vmatpush.msra.mxu0 %v3407
    %4339 = vmatpush.msra.mxu0 %v3399
    %4340 = vmatpush.msra.mxu0 %v3391
    %4341 = vmatpush.msra.mxu0 %v3383
    %4342 = vmatpush.msra.mxu0 %v3375
    %4343 = vmatpush.msra.mxu0 %v3367
    %4344 = vmatmul.f32.gmra.mxu0 %v2721
    %v4345 = vpop.f32.mrf.mxu0
    %v4346 = vadd.f32 %v4326, %v4345
    %4347 = vdwg.mxu0
    %4348 = vmatpush.msra.mxu0 %v3615
    %4349 = vmatpush.msra.mxu0 %v3607
    %4350 = vmatpush.msra.mxu0 %v3599
    %4351 = vmatpush.msra.mxu0 %v3591
    %4352 = vmatpush.msra.mxu0 %v3583
    %4353 = vmatpush.msra.mxu0 %v3575
    %4354 = vmatpush.msra.mxu0 %v3567
    %4355 = vmatpush.msra.mxu0 %v3559
    %4356 = vmatpush.msra.mxu0 %v3551
    %4357 = vmatpush.msra.mxu0 %v3543
    %4358 = vmatpush.msra.mxu0 %v3535
    %4359 = vmatpush.msra.mxu0 %v3527
    %4360 = vmatpush.msra.mxu0 %v3519
    %4361 = vmatpush.msra.mxu0 %v3511
    %4362 = vmatpush.msra.mxu0 %v3503
    %4363 = vmatpush.msra.mxu0 %v3495
    %4364 = vmatmul.f32.gmra.mxu0 %v2722
    %v4365 = vpop.f32.mrf.mxu0
    %v4366 = vadd.f32 %v4346, %v4365
    %4367 = vdwg.mxu0
    %4368 = vmatpush.msra.mxu0 %v3743
    %4369 = vmatpush.msra.mxu0 %v3735
    %4370 = vmatpush.msra.mxu0 %v3727
    %4371 = vmatpush.msra.mxu0 %v3719
    %4372 = vmatpush.msra.mxu0 %v3711
    %4373 = vmatpush.msra.mxu0 %v3703
    %4374 = vmatpush.msra.mxu0 %v3695
    %4375 = vmatpush.msra.mxu0 %v3687
    %4376 = vmatpush.msra.mxu0 %v3679
    %4377 = vmatpush.msra.mxu0 %v3671
    %4378 = vmatpush.msra.mxu0 %v3663
    %4379 = vmatpush.msra.mxu0 %v3655
    %4380 = vmatpush.msra.mxu0 %v3647
    %4381 = vmatpush.msra.mxu0 %v3639
    %4382 = vmatpush.msra.mxu0 %v3631
    %4383 = vmatpush.msra.mxu0 %v3623
    %4384 = vmatmul.f32.gmra.mxu0 %v2723
    %v4385 = vpop.f32.mrf.mxu0
    %v4386 = vadd.f32 %v4366, %v4385
    %4387 = vdwg.mxu0
    %4388 = vmatpush.msra.mxu0 %v2848
    %4389 = vmatpush.msra.mxu0 %v2840
    %4390 = vmatpush.msra.mxu0 %v2832
    %4391 = vmatpush.msra.mxu0 %v2824
    %4392 = vmatpush.msra.mxu0 %v2816
    %4393 = vmatpush.msra.mxu0 %v2808
    %4394 = vmatpush.msra.mxu0 %v2800
    %4395 = vmatpush.msra.mxu0 %v2792
    %4396 = vmatpush.msra.mxu0 %v2784
    %4397 = vmatpush.msra.mxu0 %v2776
    %4398 = vmatpush.msra.mxu0 %v2768
    %4399 = vmatpush.msra.mxu0 %v2760
    %4400 = vmatpush.msra.mxu0 %v2752
    %4401 = vmatpush.msra.mxu0 %v2744
    %4402 = vmatpush.msra.mxu0 %v2736
    %4403 = vmatpush.msra.mxu0 %v2728
    %4404 = vmatmul.f32.gmra.mxu0 %v2716
    %v4405 = vpop.f32.mrf.mxu0
    %v4406 = vadd.f32 0.0, %v4405
    %4407 = vdwg.mxu0
    %4408 = vmatpush.msra.mxu0 %v2976
    %4409 = vmatpush.msra.mxu0 %v2968
    %4410 = vmatpush.msra.mxu0 %v2960
    %4411 = vmatpush.msra.mxu0 %v2952
    %4412 = vmatpush.msra.mxu0 %v2944
    %4413 = vmatpush.msra.mxu0 %v2936
    %4414 = vmatpush.msra.mxu0 %v2928
    %4415 = vmatpush.msra.mxu0 %v2920
    %4416 = vmatpush.msra.mxu0 %v2912
    %4417 = vmatpush.msra.mxu0 %v2904
    %4418 = vmatpush.msra.mxu0 %v2896
    %4419 = vmatpush.msra.mxu0 %v2888
    %4420 = vmatpush.msra.mxu0 %v2880
    %4421 = vmatpush.msra.mxu0 %v2872
    %4422 = vmatpush.msra.mxu0 %v2864
    %4423 = vmatpush.msra.mxu0 %v2856
    %4424 = vmatmul.f32.gmra.mxu0 %v2717
    %v4425 = vpop.f32.mrf.mxu0
    %v4426 = vadd.f32 %v4406, %v4425
    %4427 = vdwg.mxu0
    %4428 = vmatpush.msra.mxu0 %v3104
    %4429 = vmatpush.msra.mxu0 %v3096
    %4430 = vmatpush.msra.mxu0 %v3088
    %4431 = vmatpush.msra.mxu0 %v3080
    %4432 = vmatpush.msra.mxu0 %v3072
    %4433 = vmatpush.msra.mxu0 %v3064
    %4434 = vmatpush.msra.mxu0 %v3056
    %4435 = vmatpush.msra.mxu0 %v3048
    %4436 = vmatpush.msra.mxu0 %v3040
    %4437 = vmatpush.msra.mxu0 %v3032
    %4438 = vmatpush.msra.mxu0 %v3024
    %4439 = vmatpush.msra.mxu0 %v3016
    %4440 = vmatpush.msra.mxu0 %v3008
    %4441 = vmatpush.msra.mxu0 %v3000
    %4442 = vmatpush.msra.mxu0 %v2992
    %4443 = vmatpush.msra.mxu0 %v2984
    %4444 = vmatmul.f32.gmra.mxu0 %v2718
    %v4445 = vpop.f32.mrf.mxu0
    %v4446 = vadd.f32 %v4426, %v4445
    %4447 = vdwg.mxu0
    %4448 = vmatpush.msra.mxu0 %v3232
    %4449 = vmatpush.msra.mxu0 %v3224
    %4450 = vmatpush.msra.mxu0 %v3216
    %4451 = vmatpush.msra.mxu0 %v3208
    %4452 = vmatpush.msra.mxu0 %v3200
    %4453 = vmatpush.msra.mxu0 %v3192
    %4454 = vmatpush.msra.mxu0 %v3184
    %4455 = vmatpush.msra.mxu0 %v3176
    %4456 = vmatpush.msra.mxu0 %v3168
    %4457 = vmatpush.msra.mxu0 %v3160
    %4458 = vmatpush.msra.mxu0 %v3152
    %4459 = vmatpush.msra.mxu0 %v3144
    %4460 = vmatpush.msra.mxu0 %v3136
    %4461 = vmatpush.msra.mxu0 %v3128
    %4462 = vmatpush.msra.mxu0 %v3120
    %4463 = vmatpush.msra.mxu0 %v3112
    %4464 = vmatmul.f32.gmra.mxu0 %v2719
    %v4465 = vpop.f32.mrf.mxu0
    %v4466 = vadd.f32 %v4446, %v4465
    %4467 = vdwg.mxu0
    %4468 = vmatpush.msra.mxu0 %v3360
    %4469 = vmatpush.msra.mxu0 %v3352
    %4470 = vmatpush.msra.mxu0 %v3344
    %4471 = vmatpush.msra.mxu0 %v3336
    %4472 = vmatpush.msra.mxu0 %v3328
    %4473 = vmatpush.msra.mxu0 %v3320
    %4474 = vmatpush.msra.mxu0 %v3312
    %4475 = vmatpush.msra.mxu0 %v3304
    %4476 = vmatpush.msra.mxu0 %v3296
    %4477 = vmatpush.msra.mxu0 %v3288
    %4478 = vmatpush.msra.mxu0 %v3280
    %4479 = vmatpush.msra.mxu0 %v3272
    %4480 = vmatpush.msra.mxu0 %v3264
    %4481 = vmatpush.msra.mxu0 %v3256
    %4482 = vmatpush.msra.mxu0 %v3248
    %4483 = vmatpush.msra.mxu0 %v3240
    %4484 = vmatmul.f32.gmra.mxu0 %v2720
    %v4485 = vpop.f32.mrf.mxu0
    %v4486 = vadd.f32 %v4466, %v4485
    %4487 = vdwg.mxu0
    %4488 = vmatpush.msra.mxu0 %v3488
    %4489 = vmatpush.msra.mxu0 %v3480
    %4490 = vmatpush.msra.mxu0 %v3472
    %4491 = vmatpush.msra.mxu0 %v3464
    %4492 = vmatpush.msra.mxu0 %v3456
    %4493 = vmatpush.msra.mxu0 %v3448
    %4494 = vmatpush.msra.mxu0 %v3440
    %4495 = vmatpush.msra.mxu0 %v3432
    %4496 = vmatpush.msra.mxu0 %v3424
    %4497 = vmatpush.msra.mxu0 %v3416
    %4498 = vmatpush.msra.mxu0 %v3408
    %4499 = vmatpush.msra.mxu0 %v3400
    %4500 = vmatpush.msra.mxu0 %v3392
    %4501 = vmatpush.msra.mxu0 %v3384
    %4502 = vmatpush.msra.mxu0 %v3376
    %4503 = vmatpush.msra.mxu0 %v3368
    %4504 = vmatmul.f32.gmra.mxu0 %v2721
    %v4505 = vpop.f32.mrf.mxu0
    %v4506 = vadd.f32 %v4486, %v4505
    %4507 = vdwg.mxu0
    %4508 = vmatpush.msra.mxu0 %v3616
    %4509 = vmatpush.msra.mxu0 %v3608
    %4510 = vmatpush.msra.mxu0 %v3600
    %4511 = vmatpush.msra.mxu0 %v3592
    %4512 = vmatpush.msra.mxu0 %v3584
    %4513 = vmatpush.msra.mxu0 %v3576
    %4514 = vmatpush.msra.mxu0 %v3568
    %4515 = vmatpush.msra.mxu0 %v3560
    %4516 = vmatpush.msra.mxu0 %v3552
    %4517 = vmatpush.msra.mxu0 %v3544
    %4518 = vmatpush.msra.mxu0 %v3536
    %4519 = vmatpush.msra.mxu0 %v3528
    %4520 = vmatpush.msra.mxu0 %v3520
    %4521 = vmatpush.msra.mxu0 %v3512
    %4522 = vmatpush.msra.mxu0 %v3504
    %4523 = vmatpush.msra.mxu0 %v3496
    %4524 = vmatmul.f32.gmra.mxu0 %v2722
    %v4525 = vpop.f32.mrf.mxu0
    %v4526 = vadd.f32 %v4506, %v4525
    %4527 = vdwg.mxu0
    %4528 = vmatpush.msra.mxu0 %v3744
    %4529 = vmatpush.msra.mxu0 %v3736
    %4530 = vmatpush.msra.mxu0 %v3728
    %4531 = vmatpush.msra.mxu0 %v3720
    %4532 = vmatpush.msra.mxu0 %v3712
    %4533 = vmatpush.msra.mxu0 %v3704
    %4534 = vmatpush.msra.mxu0 %v3696
    %4535 = vmatpush.msra.mxu0 %v3688
    %4536 = vmatpush.msra.mxu0 %v3680
    %4537 = vmatpush.msra.mxu0 %v3672
    %4538 = vmatpush.msra.mxu0 %v3664
    %4539 = vmatpush.msra.mxu0 %v3656
    %4540 = vmatpush.msra.mxu0 %v3648
    %4541 = vmatpush.msra.mxu0 %v3640
    %4542 = vmatpush.msra.mxu0 %v3632
    %4543 = vmatpush.msra.mxu0 %v3624
    %4544 = vmatmul.f32.gmra.mxu0 %v2723
    %v4545 = vpop.f32.mrf.mxu0
    %v4546 = vadd.f32 %v4526, %v4545
    %4547 = vdwg.mxu0
    %4548 = vmatpush.msra.mxu0 %v2849
    %4549 = vmatpush.msra.mxu0 %v2841
    %4550 = vmatpush.msra.mxu0 %v2833
    %4551 = vmatpush.msra.mxu0 %v2825
    %4552 = vmatpush.msra.mxu0 %v2817
    %4553 = vmatpush.msra.mxu0 %v2809
    %4554 = vmatpush.msra.mxu0 %v2801
    %4555 = vmatpush.msra.mxu0 %v2793
    %4556 = vmatpush.msra.mxu0 %v2785
    %4557 = vmatpush.msra.mxu0 %v2777
    %4558 = vmatpush.msra.mxu0 %v2769
    %4559 = vmatpush.msra.mxu0 %v2761
    %4560 = vmatpush.msra.mxu0 %v2753
    %4561 = vmatpush.msra.mxu0 %v2745
    %4562 = vmatpush.msra.mxu0 %v2737
    %4563 = vmatpush.msra.mxu0 %v2729
    %4564 = vmatmul.f32.gmra.mxu0 %v2716
    %v4565 = vpop.f32.mrf.mxu0
    %v4566 = vadd.f32 0.0, %v4565
    %4567 = vdwg.mxu0
    %4568 = vmatpush.msra.mxu0 %v2977
    %4569 = vmatpush.msra.mxu0 %v2969
    %4570 = vmatpush.msra.mxu0 %v2961
    %4571 = vmatpush.msra.mxu0 %v2953
    %4572 = vmatpush.msra.mxu0 %v2945
    %4573 = vmatpush.msra.mxu0 %v2937
    %4574 = vmatpush.msra.mxu0 %v2929
    %4575 = vmatpush.msra.mxu0 %v2921
    %4576 = vmatpush.msra.mxu0 %v2913
    %4577 = vmatpush.msra.mxu0 %v2905
    %4578 = vmatpush.msra.mxu0 %v2897
    %4579 = vmatpush.msra.mxu0 %v2889
    %4580 = vmatpush.msra.mxu0 %v2881
    %4581 = vmatpush.msra.mxu0 %v2873
    %4582 = vmatpush.msra.mxu0 %v2865
    %4583 = vmatpush.msra.mxu0 %v2857
    %4584 = vmatmul.f32.gmra.mxu0 %v2717
    %v4585 = vpop.f32.mrf.mxu0
    %v4586 = vadd.f32 %v4566, %v4585
    %4587 = vdwg.mxu0
    %4588 = vmatpush.msra.mxu0 %v3105
    %4589 = vmatpush.msra.mxu0 %v3097
    %4590 = vmatpush.msra.mxu0 %v3089
    %4591 = vmatpush.msra.mxu0 %v3081
    %4592 = vmatpush.msra.mxu0 %v3073
    %4593 = vmatpush.msra.mxu0 %v3065
    %4594 = vmatpush.msra.mxu0 %v3057
    %4595 = vmatpush.msra.mxu0 %v3049
    %4596 = vmatpush.msra.mxu0 %v3041
    %4597 = vmatpush.msra.mxu0 %v3033
    %4598 = vmatpush.msra.mxu0 %v3025
    %4599 = vmatpush.msra.mxu0 %v3017
    %4600 = vmatpush.msra.mxu0 %v3009
    %4601 = vmatpush.msra.mxu0 %v3001
    %4602 = vmatpush.msra.mxu0 %v2993
    %4603 = vmatpush.msra.mxu0 %v2985
    %4604 = vmatmul.f32.gmra.mxu0 %v2718
    %v4605 = vpop.f32.mrf.mxu0
    %v4606 = vadd.f32 %v4586, %v4605
    %4607 = vdwg.mxu0
    %4608 = vmatpush.msra.mxu0 %v3233
    %4609 = vmatpush.msra.mxu0 %v3225
    %4610 = vmatpush.msra.mxu0 %v3217
    %4611 = vmatpush.msra.mxu0 %v3209
    %4612 = vmatpush.msra.mxu0 %v3201
    %4613 = vmatpush.msra.mxu0 %v3193
    %4614 = vmatpush.msra.mxu0 %v3185
    %4615 = vmatpush.msra.mxu0 %v3177
    %4616 = vmatpush.msra.mxu0 %v3169
    %4617 = vmatpush.msra.mxu0 %v3161
    %4618 = vmatpush.msra.mxu0 %v3153
    %4619 = vmatpush.msra.mxu0 %v3145
    %4620 = vmatpush.msra.mxu0 %v3137
    %4621 = vmatpush.msra.mxu0 %v3129
    %4622 = vmatpush.msra.mxu0 %v3121
    %4623 = vmatpush.msra.mxu0 %v3113
    %4624 = vmatmul.f32.gmra.mxu0 %v2719
    %v4625 = vpop.f32.mrf.mxu0
    %v4626 = vadd.f32 %v4606, %v4625
    %4627 = vdwg.mxu0
    %4628 = vmatpush.msra.mxu0 %v3361
    %4629 = vmatpush.msra.mxu0 %v3353
    %4630 = vmatpush.msra.mxu0 %v3345
    %4631 = vmatpush.msra.mxu0 %v3337
    %4632 = vmatpush.msra.mxu0 %v3329
    %4633 = vmatpush.msra.mxu0 %v3321
    %4634 = vmatpush.msra.mxu0 %v3313
    %4635 = vmatpush.msra.mxu0 %v3305
    %4636 = vmatpush.msra.mxu0 %v3297
    %4637 = vmatpush.msra.mxu0 %v3289
    %4638 = vmatpush.msra.mxu0 %v3281
    %4639 = vmatpush.msra.mxu0 %v3273
    %4640 = vmatpush.msra.mxu0 %v3265
    %4641 = vmatpush.msra.mxu0 %v3257
    %4642 = vmatpush.msra.mxu0 %v3249
    %4643 = vmatpush.msra.mxu0 %v3241
    %4644 = vmatmul.f32.gmra.mxu0 %v2720
    %v4645 = vpop.f32.mrf.mxu0
    %v4646 = vadd.f32 %v4626, %v4645
    %4647 = vdwg.mxu0
    %4648 = vmatpush.msra.mxu0 %v3489
    %4649 = vmatpush.msra.mxu0 %v3481
    %4650 = vmatpush.msra.mxu0 %v3473
    %4651 = vmatpush.msra.mxu0 %v3465
    %4652 = vmatpush.msra.mxu0 %v3457
    %4653 = vmatpush.msra.mxu0 %v3449
    %4654 = vmatpush.msra.mxu0 %v3441
    %4655 = vmatpush.msra.mxu0 %v3433
    %4656 = vmatpush.msra.mxu0 %v3425
    %4657 = vmatpush.msra.mxu0 %v3417
    %4658 = vmatpush.msra.mxu0 %v3409
    %4659 = vmatpush.msra.mxu0 %v3401
    %4660 = vmatpush.msra.mxu0 %v3393
    %4661 = vmatpush.msra.mxu0 %v3385
    %4662 = vmatpush.msra.mxu0 %v3377
    %4663 = vmatpush.msra.mxu0 %v3369
    %4664 = vmatmul.f32.gmra.mxu0 %v2721
    %v4665 = vpop.f32.mrf.mxu0
    %v4666 = vadd.f32 %v4646, %v4665
    %4667 = vdwg.mxu0
    %4668 = vmatpush.msra.mxu0 %v3617
    %4669 = vmatpush.msra.mxu0 %v3609
    %4670 = vmatpush.msra.mxu0 %v3601
    %4671 = vmatpush.msra.mxu0 %v3593
    %4672 = vmatpush.msra.mxu0 %v3585
    %4673 = vmatpush.msra.mxu0 %v3577
    %4674 = vmatpush.msra.mxu0 %v3569
    %4675 = vmatpush.msra.mxu0 %v3561
    %4676 = vmatpush.msra.mxu0 %v3553
    %4677 = vmatpush.msra.mxu0 %v3545
    %4678 = vmatpush.msra.mxu0 %v3537
    %4679 = vmatpush.msra.mxu0 %v3529
    %4680 = vmatpush.msra.mxu0 %v3521
    %4681 = vmatpush.msra.mxu0 %v3513
    %4682 = vmatpush.msra.mxu0 %v3505
    %4683 = vmatpush.msra.mxu0 %v3497
    %4684 = vmatmul.f32.gmra.mxu0 %v2722
    %v4685 = vpop.f32.mrf.mxu0
    %v4686 = vadd.f32 %v4666, %v4685
    %4687 = vdwg.mxu0
    %4688 = vmatpush.msra.mxu0 %v3745
    %4689 = vmatpush.msra.mxu0 %v3737
    %4690 = vmatpush.msra.mxu0 %v3729
    %4691 = vmatpush.msra.mxu0 %v3721
    %4692 = vmatpush.msra.mxu0 %v3713
    %4693 = vmatpush.msra.mxu0 %v3705
    %4694 = vmatpush.msra.mxu0 %v3697
    %4695 = vmatpush.msra.mxu0 %v3689
    %4696 = vmatpush.msra.mxu0 %v3681
    %4697 = vmatpush.msra.mxu0 %v3673
    %4698 = vmatpush.msra.mxu0 %v3665
    %4699 = vmatpush.msra.mxu0 %v3657
    %4700 = vmatpush.msra.mxu0 %v3649
    %4701 = vmatpush.msra.mxu0 %v3641
    %4702 = vmatpush.msra.mxu0 %v3633
    %4703 = vmatpush.msra.mxu0 %v3625
    %4704 = vmatmul.f32.gmra.mxu0 %v2723
    %v4705 = vpop.f32.mrf.mxu0
    %v4706 = vadd.f32 %v4686, %v4705
    %4707 = vdwg.mxu0
    %4708 = vmatpush.msra.mxu0 %v2850
    %4709 = vmatpush.msra.mxu0 %v2842
    %4710 = vmatpush.msra.mxu0 %v2834
    %4711 = vmatpush.msra.mxu0 %v2826
    %4712 = vmatpush.msra.mxu0 %v2818
    %4713 = vmatpush.msra.mxu0 %v2810
    %4714 = vmatpush.msra.mxu0 %v2802
    %4715 = vmatpush.msra.mxu0 %v2794
    %4716 = vmatpush.msra.mxu0 %v2786
    %4717 = vmatpush.msra.mxu0 %v2778
    %4718 = vmatpush.msra.mxu0 %v2770
    %4719 = vmatpush.msra.mxu0 %v2762
    %4720 = vmatpush.msra.mxu0 %v2754
    %4721 = vmatpush.msra.mxu0 %v2746
    %4722 = vmatpush.msra.mxu0 %v2738
    %4723 = vmatpush.msra.mxu0 %v2730
    %4724 = vmatmul.f32.gmra.mxu0 %v2716
    %v4725 = vpop.f32.mrf.mxu0
    %v4726 = vadd.f32 0.0, %v4725
    %4727 = vdwg.mxu0
    %4728 = vmatpush.msra.mxu0 %v2978
    %4729 = vmatpush.msra.mxu0 %v2970
    %4730 = vmatpush.msra.mxu0 %v2962
    %4731 = vmatpush.msra.mxu0 %v2954
    %4732 = vmatpush.msra.mxu0 %v2946
    %4733 = vmatpush.msra.mxu0 %v2938
    %4734 = vmatpush.msra.mxu0 %v2930
    %4735 = vmatpush.msra.mxu0 %v2922
    %4736 = vmatpush.msra.mxu0 %v2914
    %4737 = vmatpush.msra.mxu0 %v2906
    %4738 = vmatpush.msra.mxu0 %v2898
    %4739 = vmatpush.msra.mxu0 %v2890
    %4740 = vmatpush.msra.mxu0 %v2882
    %4741 = vmatpush.msra.mxu0 %v2874
    %4742 = vmatpush.msra.mxu0 %v2866
    %4743 = vmatpush.msra.mxu0 %v2858
    %4744 = vmatmul.f32.gmra.mxu0 %v2717
    %v4745 = vpop.f32.mrf.mxu0
    %v4746 = vadd.f32 %v4726, %v4745
    %4747 = vdwg.mxu0
    %4748 = vmatpush.msra.mxu0 %v3106
    %4749 = vmatpush.msra.mxu0 %v3098
    %4750 = vmatpush.msra.mxu0 %v3090
    %4751 = vmatpush.msra.mxu0 %v3082
    %4752 = vmatpush.msra.mxu0 %v3074
    %4753 = vmatpush.msra.mxu0 %v3066
    %4754 = vmatpush.msra.mxu0 %v3058
    %4755 = vmatpush.msra.mxu0 %v3050
    %4756 = vmatpush.msra.mxu0 %v3042
    %4757 = vmatpush.msra.mxu0 %v3034
    %4758 = vmatpush.msra.mxu0 %v3026
    %4759 = vmatpush.msra.mxu0 %v3018
    %4760 = vmatpush.msra.mxu0 %v3010
    %4761 = vmatpush.msra.mxu0 %v3002
    %4762 = vmatpush.msra.mxu0 %v2994
    %4763 = vmatpush.msra.mxu0 %v2986
    %4764 = vmatmul.f32.gmra.mxu0 %v2718
    %v4765 = vpop.f32.mrf.mxu0
    %v4766 = vadd.f32 %v4746, %v4765
    %4767 = vdwg.mxu0
    %4768 = vmatpush.msra.mxu0 %v3234
    %4769 = vmatpush.msra.mxu0 %v3226
    %4770 = vmatpush.msra.mxu0 %v3218
    %4771 = vmatpush.msra.mxu0 %v3210
    %4772 = vmatpush.msra.mxu0 %v3202
    %4773 = vmatpush.msra.mxu0 %v3194
    %4774 = vmatpush.msra.mxu0 %v3186
    %4775 = vmatpush.msra.mxu0 %v3178
    %4776 = vmatpush.msra.mxu0 %v3170
    %4777 = vmatpush.msra.mxu0 %v3162
    %4778 = vmatpush.msra.mxu0 %v3154
    %4779 = vmatpush.msra.mxu0 %v3146
    %4780 = vmatpush.msra.mxu0 %v3138
    %4781 = vmatpush.msra.mxu0 %v3130
    %4782 = vmatpush.msra.mxu0 %v3122
    %4783 = vmatpush.msra.mxu0 %v3114
    %4784 = vmatmul.f32.gmra.mxu0 %v2719
    %v4785 = vpop.f32.mrf.mxu0
    %v4786 = vadd.f32 %v4766, %v4785
    %4787 = vdwg.mxu0
    %4788 = vmatpush.msra.mxu0 %v3362
    %4789 = vmatpush.msra.mxu0 %v3354
    %4790 = vmatpush.msra.mxu0 %v3346
    %4791 = vmatpush.msra.mxu0 %v3338
    %4792 = vmatpush.msra.mxu0 %v3330
    %4793 = vmatpush.msra.mxu0 %v3322
    %4794 = vmatpush.msra.mxu0 %v3314
    %4795 = vmatpush.msra.mxu0 %v3306
    %4796 = vmatpush.msra.mxu0 %v3298
    %4797 = vmatpush.msra.mxu0 %v3290
    %4798 = vmatpush.msra.mxu0 %v3282
    %4799 = vmatpush.msra.mxu0 %v3274
    %4800 = vmatpush.msra.mxu0 %v3266
    %4801 = vmatpush.msra.mxu0 %v3258
    %4802 = vmatpush.msra.mxu0 %v3250
    %4803 = vmatpush.msra.mxu0 %v3242
    %4804 = vmatmul.f32.gmra.mxu0 %v2720
    %v4805 = vpop.f32.mrf.mxu0
    %v4806 = vadd.f32 %v4786, %v4805
    %4807 = vdwg.mxu0
    %4808 = vmatpush.msra.mxu0 %v3490
    %4809 = vmatpush.msra.mxu0 %v3482
    %4810 = vmatpush.msra.mxu0 %v3474
    %4811 = vmatpush.msra.mxu0 %v3466
    %4812 = vmatpush.msra.mxu0 %v3458
    %4813 = vmatpush.msra.mxu0 %v3450
    %4814 = vmatpush.msra.mxu0 %v3442
    %4815 = vmatpush.msra.mxu0 %v3434
    %4816 = vmatpush.msra.mxu0 %v3426
    %4817 = vmatpush.msra.mxu0 %v3418
    %4818 = vmatpush.msra.mxu0 %v3410
    %4819 = vmatpush.msra.mxu0 %v3402
    %4820 = vmatpush.msra.mxu0 %v3394
    %4821 = vmatpush.msra.mxu0 %v3386
    %4822 = vmatpush.msra.mxu0 %v3378
    %4823 = vmatpush.msra.mxu0 %v3370
    %4824 = vmatmul.f32.gmra.mxu0 %v2721
    %v4825 = vpop.f32.mrf.mxu0
    %v4826 = vadd.f32 %v4806, %v4825
    %4827 = vdwg.mxu0
    %4828 = vmatpush.msra.mxu0 %v3618
    %4829 = vmatpush.msra.mxu0 %v3610
    %4830 = vmatpush.msra.mxu0 %v3602
    %4831 = vmatpush.msra.mxu0 %v3594
    %4832 = vmatpush.msra.mxu0 %v3586
    %4833 = vmatpush.msra.mxu0 %v3578
    %4834 = vmatpush.msra.mxu0 %v3570
    %4835 = vmatpush.msra.mxu0 %v3562
    %4836 = vmatpush.msra.mxu0 %v3554
    %4837 = vmatpush.msra.mxu0 %v3546
    %4838 = vmatpush.msra.mxu0 %v3538
    %4839 = vmatpush.msra.mxu0 %v3530
    %4840 = vmatpush.msra.mxu0 %v3522
    %4841 = vmatpush.msra.mxu0 %v3514
    %4842 = vmatpush.msra.mxu0 %v3506
    %4843 = vmatpush.msra.mxu0 %v3498
    %4844 = vmatmul.f32.gmra.mxu0 %v2722
    %v4845 = vpop.f32.mrf.mxu0
    %v4846 = vadd.f32 %v4826, %v4845
    %4847 = vdwg.mxu0
    %4848 = vmatpush.msra.mxu0 %v3746
    %4849 = vmatpush.msra.mxu0 %v3738
    %4850 = vmatpush.msra.mxu0 %v3730
    %4851 = vmatpush.msra.mxu0 %v3722
    %4852 = vmatpush.msra.mxu0 %v3714
    %4853 = vmatpush.msra.mxu0 %v3706
    %4854 = vmatpush.msra.mxu0 %v3698
    %4855 = vmatpush.msra.mxu0 %v3690
    %4856 = vmatpush.msra.mxu0 %v3682
    %4857 = vmatpush.msra.mxu0 %v3674
    %4858 = vmatpush.msra.mxu0 %v3666
    %4859 = vmatpush.msra.mxu0 %v3658
    %4860 = vmatpush.msra.mxu0 %v3650
    %4861 = vmatpush.msra.mxu0 %v3642
    %4862 = vmatpush.msra.mxu0 %v3634
    %4863 = vmatpush.msra.mxu0 %v3626
    %4864 = vmatmul.f32.gmra.mxu0 %v2723
    %v4865 = vpop.f32.mrf.mxu0
    %v4866 = vadd.f32 %v4846, %v4865
    %4867 = vdwg.mxu0
    %4868 = vmatpush.msra.mxu0 %v2851
    %4869 = vmatpush.msra.mxu0 %v2843
    %4870 = vmatpush.msra.mxu0 %v2835
    %4871 = vmatpush.msra.mxu0 %v2827
    %4872 = vmatpush.msra.mxu0 %v2819
    %4873 = vmatpush.msra.mxu0 %v2811
    %4874 = vmatpush.msra.mxu0 %v2803
    %4875 = vmatpush.msra.mxu0 %v2795
    %4876 = vmatpush.msra.mxu0 %v2787
    %4877 = vmatpush.msra.mxu0 %v2779
    %4878 = vmatpush.msra.mxu0 %v2771
    %4879 = vmatpush.msra.mxu0 %v2763
    %4880 = vmatpush.msra.mxu0 %v2755
    %4881 = vmatpush.msra.mxu0 %v2747
    %4882 = vmatpush.msra.mxu0 %v2739
    %4883 = vmatpush.msra.mxu0 %v2731
    %4884 = vmatmul.f32.gmra.mxu0 %v2716
    %v4885 = vpop.f32.mrf.mxu0
    %v4886 = vadd.f32 0.0, %v4885
    %4887 = vdwg.mxu0
    %4888 = vmatpush.msra.mxu0 %v2979
    %4889 = vmatpush.msra.mxu0 %v2971
    %4890 = vmatpush.msra.mxu0 %v2963
    %4891 = vmatpush.msra.mxu0 %v2955
    %4892 = vmatpush.msra.mxu0 %v2947
    %4893 = vmatpush.msra.mxu0 %v2939
    %4894 = vmatpush.msra.mxu0 %v2931
    %4895 = vmatpush.msra.mxu0 %v2923
    %4896 = vmatpush.msra.mxu0 %v2915
    %4897 = vmatpush.msra.mxu0 %v2907
    %4898 = vmatpush.msra.mxu0 %v2899
    %4899 = vmatpush.msra.mxu0 %v2891
    %4900 = vmatpush.msra.mxu0 %v2883
    %4901 = vmatpush.msra.mxu0 %v2875
    %4902 = vmatpush.msra.mxu0 %v2867
    %4903 = vmatpush.msra.mxu0 %v2859
    %4904 = vmatmul.f32.gmra.mxu0 %v2717
    %v4905 = vpop.f32.mrf.mxu0
    %v4906 = vadd.f32 %v4886, %v4905
    %4907 = vdwg.mxu0
    %4908 = vmatpush.msra.mxu0 %v3107
    %4909 = vmatpush.msra.mxu0 %v3099
    %4910 = vmatpush.msra.mxu0 %v3091
    %4911 = vmatpush.msra.mxu0 %v3083
    %4912 = vmatpush.msra.mxu0 %v3075
    %4913 = vmatpush.msra.mxu0 %v3067
    %4914 = vmatpush.msra.mxu0 %v3059
    %4915 = vmatpush.msra.mxu0 %v3051
    %4916 = vmatpush.msra.mxu0 %v3043
    %4917 = vmatpush.msra.mxu0 %v3035
    %4918 = vmatpush.msra.mxu0 %v3027
    %4919 = vmatpush.msra.mxu0 %v3019
    %4920 = vmatpush.msra.mxu0 %v3011
    %4921 = vmatpush.msra.mxu0 %v3003
    %4922 = vmatpush.msra.mxu0 %v2995
    %4923 = vmatpush.msra.mxu0 %v2987
    %4924 = vmatmul.f32.gmra.mxu0 %v2718
    %v4925 = vpop.f32.mrf.mxu0
    %v4926 = vadd.f32 %v4906, %v4925
    %4927 = vdwg.mxu0
    %4928 = vmatpush.msra.mxu0 %v3235
    %4929 = vmatpush.msra.mxu0 %v3227
    %4930 = vmatpush.msra.mxu0 %v3219
    %4931 = vmatpush.msra.mxu0 %v3211
    %4932 = vmatpush.msra.mxu0 %v3203
    %4933 = vmatpush.msra.mxu0 %v3195
    %4934 = vmatpush.msra.mxu0 %v3187
    %4935 = vmatpush.msra.mxu0 %v3179
    %4936 = vmatpush.msra.mxu0 %v3171
    %4937 = vmatpush.msra.mxu0 %v3163
    %4938 = vmatpush.msra.mxu0 %v3155
    %4939 = vmatpush.msra.mxu0 %v3147
    %4940 = vmatpush.msra.mxu0 %v3139
    %4941 = vmatpush.msra.mxu0 %v3131
    %4942 = vmatpush.msra.mxu0 %v3123
    %4943 = vmatpush.msra.mxu0 %v3115
    %4944 = vmatmul.f32.gmra.mxu0 %v2719
    %v4945 = vpop.f32.mrf.mxu0
    %v4946 = vadd.f32 %v4926, %v4945
    %4947 = vdwg.mxu0
    %4948 = vmatpush.msra.mxu0 %v3363
    %4949 = vmatpush.msra.mxu0 %v3355
    %4950 = vmatpush.msra.mxu0 %v3347
    %4951 = vmatpush.msra.mxu0 %v3339
    %4952 = vmatpush.msra.mxu0 %v3331
    %4953 = vmatpush.msra.mxu0 %v3323
    %4954 = vmatpush.msra.mxu0 %v3315
    %4955 = vmatpush.msra.mxu0 %v3307
    %4956 = vmatpush.msra.mxu0 %v3299
    %4957 = vmatpush.msra.mxu0 %v3291
    %4958 = vmatpush.msra.mxu0 %v3283
    %4959 = vmatpush.msra.mxu0 %v3275
    %4960 = vmatpush.msra.mxu0 %v3267
    %4961 = vmatpush.msra.mxu0 %v3259
    %4962 = vmatpush.msra.mxu0 %v3251
    %4963 = vmatpush.msra.mxu0 %v3243
    %4964 = vmatmul.f32.gmra.mxu0 %v2720
    %v4965 = vpop.f32.mrf.mxu0
    %v4966 = vadd.f32 %v4946, %v4965
    %4967 = vdwg.mxu0
    %4968 = vmatpush.msra.mxu0 %v3491
    %4969 = vmatpush.msra.mxu0 %v3483
    %4970 = vmatpush.msra.mxu0 %v3475
    %4971 = vmatpush.msra.mxu0 %v3467
    %4972 = vmatpush.msra.mxu0 %v3459
    %4973 = vmatpush.msra.mxu0 %v3451
    %4974 = vmatpush.msra.mxu0 %v3443
    %4975 = vmatpush.msra.mxu0 %v3435
    %4976 = vmatpush.msra.mxu0 %v3427
    %4977 = vmatpush.msra.mxu0 %v3419
    %4978 = vmatpush.msra.mxu0 %v3411
    %4979 = vmatpush.msra.mxu0 %v3403
    %4980 = vmatpush.msra.mxu0 %v3395
    %4981 = vmatpush.msra.mxu0 %v3387
    %4982 = vmatpush.msra.mxu0 %v3379
    %4983 = vmatpush.msra.mxu0 %v3371
    %4984 = vmatmul.f32.gmra.mxu0 %v2721
    %v4985 = vpop.f32.mrf.mxu0
    %v4986 = vadd.f32 %v4966, %v4985
    %4987 = vdwg.mxu0
    %4988 = vmatpush.msra.mxu0 %v3619
    %4989 = vmatpush.msra.mxu0 %v3611
    %4990 = vmatpush.msra.mxu0 %v3603
    %4991 = vmatpush.msra.mxu0 %v3595
    %4992 = vmatpush.msra.mxu0 %v3587
    %4993 = vmatpush.msra.mxu0 %v3579
    %4994 = vmatpush.msra.mxu0 %v3571
    %4995 = vmatpush.msra.mxu0 %v3563
    %4996 = vmatpush.msra.mxu0 %v3555
    %4997 = vmatpush.msra.mxu0 %v3547
    %4998 = vmatpush.msra.mxu0 %v3539
    %4999 = vmatpush.msra.mxu0 %v3531
    %5000 = vmatpush.msra.mxu0 %v3523
    %5001 = vmatpush.msra.mxu0 %v3515
    %5002 = vmatpush.msra.mxu0 %v3507
    %5003 = vmatpush.msra.mxu0 %v3499
    %5004 = vmatmul.f32.gmra.mxu0 %v2722
    %v5005 = vpop.f32.mrf.mxu0
    %v5006 = vadd.f32 %v4986, %v5005
    %5007 = vdwg.mxu0
    %5008 = vmatpush.msra.mxu0 %v3747
    %5009 = vmatpush.msra.mxu0 %v3739
    %5010 = vmatpush.msra.mxu0 %v3731
    %5011 = vmatpush.msra.mxu0 %v3723
    %5012 = vmatpush.msra.mxu0 %v3715
    %5013 = vmatpush.msra.mxu0 %v3707
    %5014 = vmatpush.msra.mxu0 %v3699
    %5015 = vmatpush.msra.mxu0 %v3691
    %5016 = vmatpush.msra.mxu0 %v3683
    %5017 = vmatpush.msra.mxu0 %v3675
    %5018 = vmatpush.msra.mxu0 %v3667
    %5019 = vmatpush.msra.mxu0 %v3659
    %5020 = vmatpush.msra.mxu0 %v3651
    %5021 = vmatpush.msra.mxu0 %v3643
    %5022 = vmatpush.msra.mxu0 %v3635
    %5023 = vmatpush.msra.mxu0 %v3627
    %5024 = vmatmul.f32.gmra.mxu0 %v2723
    %v5025 = vpop.f32.mrf.mxu0
    %v5026 = vadd.f32 %v5006, %v5025
    %5027 = vdwg.mxu0
    %5028 = vst [vmem:[#allocation8] sm:$0xff] %v3906
    %5029 = vst [vmem:[#allocation8 + $0x8] sm:$0xff] %v4066
    %5030 = vst [vmem:[#allocation8 + $0x10] sm:$0xff] %v4226
    %5031 = vst [vmem:[#allocation8 + $0x18] sm:$0xff] %v4386
    %5032 = vst [vmem:[#allocation8 + $0x20] sm:$0xff] %v4546
    %5033 = vst [vmem:[#allocation8 + $0x28] sm:$0xff] %v4706
    %5034 = vst [vmem:[#allocation8 + $0x30] sm:$0xff] %v4866
    %5035 = vst [vmem:[#allocation8 + $0x38] sm:$0xff] %v5026
    // Predicated region
    $region26: #{tpu_custom_call.1} parent=1 // pred_check
      _
    $region27: #{tpu_custom_call.1} parent=1 // pred_check_branch
      %5037 = sbr.rel (0) target = $region29
    $region28: #{tpu_custom_call.1} parent=1 // pred_region
      %5039 = vsyncadd [#allocation4], 0
      %s5041 = sshll.u32 [#allocation8], 4
      %s5042 = int_to_ptr.vmem [resolvable:$true] %s5041
      %s5043 = sshll.u32 %s3, 4
      %s5044 = int_to_ptr.hbm [resolvable:$true] %s5043
      %5046 = dma.vmem_to_hbm [thread:$0]  %s5042, 1024, %s5044, [#allocation4]
    $region29: #{tpu_custom_call.1} parent=1 // pred_fallthru
      _
    // Predicated region
    $region30: #{tpu_custom_call.1} parent=1 // pred_check
      _
    $region31: #{tpu_custom_call.1} parent=1 // pred_check_branch
      %5048 = sbr.rel (0) target = $region33
    $region32: #{tpu_custom_call.1} parent=1 // pred_region
      %5050 = dma.done [#allocation4], 1024
    $region33: #{tpu_custom_call.1} parent=1 // pred_fallthru
      _
    %5051 = vsyncpa [#allocation3], 1
    %5052 = vsyncpa [#allocation6], 1
    %5053 = vsyncpa [#allocation4], 1

</llo_original>
